<compile_context>
chip_gen: v5e
topology: v5e:2x2
jax: 0.10.0
libtpu: 0.0.40
codegen_flags: <defaults>
</compile_context>

<pallas_src>
import functools
import math

import jax
import jax.numpy as jnp
from jax import lax
from jax.experimental import pallas as pl
from jax.experimental.pallas import tpu as pltpu


def _layernorm(x, gamma, beta, eps=1e-5):
    # fp32 LayerNorm (matches the torch LayerNorm wrapper which casts to fp32).
    xf = x.astype(jnp.float32)
    mu = jnp.mean(xf, axis=-1, keepdims=True)
    var = jnp.mean((xf - mu) ** 2, axis=-1, keepdims=True)
    y = (xf - mu) * lax.rsqrt(var + eps)
    return y * gamma + beta


def _gelu_exact(x):
    # nn.GELU() default = exact erf-based GELU (kept in f32).
    return 0.5 * x * (1.0 + lax.erf(x * (1.0 / math.sqrt(2.0))))


def residual_block_kernel(
    x_ref,
    ln1_g_ref, ln1_b_ref,
    wqkv_ref, bqkv_ref,
    wap_ref, bap_ref,
    ln2_g_ref, ln2_b_ref,
    wfc_ref, bfc_ref, wcp_ref, bcp_ref,
    o_ref,
    ctx_scr, h2_scr,
    *, n_heads,
):
    c = pl.program_id(1)

    # ---- attention branch + accumulator init: once per batch row (c == 0) ----
    @pl.when(c == 0)
    def _attention_and_init():
        x = x_ref[0]                                    # (T, W) f32
        T, W = x.shape
        ch = W // n_heads

        h1 = _layernorm(x, ln1_g_ref[0], ln1_b_ref[0]).astype(jnp.bfloat16)
        # One fused K=W projection producing head-grouped [Q | K | V] columns
        # (bf16 in, f32 accumulate).  The attention scale is already folded
        # into the Q/K columns and biases on the host.
        qkv = (jnp.dot(h1, wqkv_ref[...], preferred_element_type=jnp.float32)
               + bqkv_ref[0]).astype(jnp.bfloat16)      # (T, 3W)

        # Per-head softmax(q k^T) v.  Head-grouped columns are contiguous and
        # each head's output is stored straight into a bf16 VMEM scratch (no
        # concatenate, no long-lived per-head temporaries).
        for h in range(n_heads):
            qh = qkv[:, h * ch:(h + 1) * ch]
            kh = qkv[:, W + h * ch:W + (h + 1) * ch]
            vh = qkv[:, 2 * W + h * ch:2 * W + (h + 1) * ch]
            s = lax.dot_general(                         # (T, T), contract ch
                qh, kh, (((1,), (1,)), ((), ())),
                preferred_element_type=jnp.float32)
            m = jnp.max(s, axis=-1, keepdims=True)       # f32 softmax stats
            e = jnp.exp(s - m)
            p = e * pl.reciprocal(jnp.sum(e, axis=-1, keepdims=True),
                                  approx=True)
            ctx_scr[:, h * ch:(h + 1) * ch] = jnp.dot(
                p.astype(jnp.bfloat16), vh,
                preferred_element_type=jnp.float32).astype(jnp.bfloat16)

        # Single big K=W output projection over all heads.
        attn = jnp.dot(ctx_scr[...], wap_ref[...],
                       preferred_element_type=jnp.float32) + bap_ref[0]
        x1 = x + attn                                    # f32 residual

        # Stash LN2(x1) for the MLP chunks, and seed the resident output
        # accumulator with the residual + c_proj bias (bias added exactly once).
        h2_scr[...] = _layernorm(x1, ln2_g_ref[0], ln2_b_ref[0]).astype(jnp.bfloat16)
        o_ref[0] = x1 + bcp_ref[0]

    # ---- MLP: one 4W-hidden chunk per grid step, accumulate into o_ref -------
    a = jnp.dot(h2_scr[...], wfc_ref[...],
                preferred_element_type=jnp.float32) + bfc_ref[0]
    a = _gelu_exact(a).astype(jnp.bfloat16)
    o_ref[0] += jnp.dot(a, wcp_ref[...], preferred_element_type=jnp.float32)


def _mlp_tile(width):
    """Largest 128-multiple chunk of the 4*W hidden dim that (a) divides it
    evenly and (b) keeps the double-buffered streamed c_fc/c_proj slices
    under ~16 MiB of VMEM."""
    hidden = 4 * width
    budget = (16 * 1024 * 1024) // (8 * width)   # 2 slices * 2 buffers * 2 B
    for f in (4096, 2048, 1024, 512, 256, 128):
        if f <= budget and hidden % f == 0:
            return f
    return hidden


def _vmem_limit_bytes():
    # Derive the scoped-VMEM budget from the actual chip (v7x has only 64 MiB
    # physical); fall back to the compiler default if the query is unavailable.
    try:
        cap = pltpu.get_tpu_info().vmem_capacity_bytes
        return int(min(cap * 3 // 4, 96 * 1024 * 1024))
    except Exception:
        return None


def _prepare_block(p, n_heads):
    """Host-side weight prep: de-interleave qkv per head into head-grouped
    [all Q | all K | all V] columns, fold the attention scale into Q/K, cast
    matmul weights to bf16, keep biases / LayerNorm params in f32 (1, N) rows."""
    width = p["w_qkv"].shape[0]
    ch = width // n_heads
    scale = 1.0 / math.sqrt(math.sqrt(ch))

    # torch layout: qkv output features = per-head [q | k | v] blocks of 3*ch.
    w_qkv = p["w_qkv"].reshape(width, n_heads, 3, ch)
    b_qkv = p["b_qkv"].reshape(n_heads, 3, ch)

    w_g = jnp.concatenate(
        [(w_qkv[:, :, i, :] * s).reshape(width, width)
         for i, s in enumerate((scale, scale, 1.0))],
        axis=1).astype(jnp.bfloat16)                    # (W, 3W)
    b_g = jnp.concatenate(
        [(b_qkv[:, i, :] * s).reshape(width)
         for i, s in enumerate((scale, scale, 1.0))],
        axis=0).reshape(1, 3 * width).astype(jnp.float32)

    def vec(a):
        return a.reshape(1, -1).astype(jnp.float32)

    return (
        vec(p["ln1_g"]), vec(p["ln1_b"]),
        w_g, b_g,
        p["w_ap"].astype(jnp.bfloat16), vec(p["b_ap"]),
        vec(p["ln2_g"]), vec(p["ln2_b"]),
        p["w_fc"].astype(jnp.bfloat16), vec(p["b_fc"]),
        p["w_cp"].astype(jnp.bfloat16), vec(p["b_cp"]),
    )


def residual_block(x, p, n_heads):
    B, T, W = x.shape
    args = _prepare_block(p, n_heads)
    hidden = 4 * W
    f_tile = _mlp_tile(W)
    n_chunks = hidden // f_tile

    def rep(shape):  # parameter block, resident (same index) every grid step
        zeros = (0,) * len(shape)
        return pl.BlockSpec(shape, lambda b, c, _z=zeros: _z)

    in_specs = [
        pl.BlockSpec((1, T, W), lambda b, c: (b, 0, 0)),   # x
        rep((1, W)), rep((1, W)),                          # ln1 gamma/beta
        rep((W, 3 * W)), rep((1, 3 * W)),                  # fused W_qkv, b (scaled)
        rep((W, W)), rep((1, W)),                          # W_attn_proj, b
        rep((1, W)), rep((1, W)),                          # ln2 gamma/beta
        pl.BlockSpec((W, f_tile), lambda b, c: (0, c)),    # c_fc chunk
        pl.BlockSpec((1, f_tile), lambda b, c: (0, c)),    # b_fc chunk
        pl.BlockSpec((f_tile, W), lambda b, c: (c, 0)),    # c_proj chunk
        rep((1, W)),                                       # b_cproj
    ]

    flops = B * (24 * T * W * W + 4 * T * T * W)
    transcendentals = B * T * (n_heads * T + 4 * W)
    bytes_accessed = 2 * B * T * W * 4 + 12 * W * W * 2 + 14 * W * 4

    cparams = dict(dimension_semantics=("parallel", "arbitrary"))
    vlim = _vmem_limit_bytes()
    if vlim is not None:
        cparams["vmem_limit_bytes"] = vlim

    kernel = functools.partial(residual_block_kernel, n_heads=n_heads)
    return pl.pallas_call(
        kernel,
        out_shape=jax.ShapeDtypeStruct((B, T, W), jnp.float32),
        grid=(B, n_chunks),
        in_specs=in_specs,
        out_specs=pl.BlockSpec((1, T, W), lambda b, c: (b, 0, 0)),
        scratch_shapes=[
            pltpu.VMEM((T, W), jnp.bfloat16),   # per-head attention outputs
            pltpu.VMEM((T, W), jnp.bfloat16),   # LN2(x + attn) for MLP chunks
        ],
        compiler_params=pltpu.CompilerParams(**cparams),
        cost_estimate=pl.CostEstimate(
            flops=flops, transcendentals=transcendentals,
            bytes_accessed=bytes_accessed),
    )(x, *args)


def transformer_forward(x, params, n_heads):
    for p in params:
        x = residual_block(x, p, n_heads)
    return x


def transformer_reference(x, params, n_heads):
    """Pure-JAX f32 reference matching the PyTorch module exactly."""
    def ln(v, g, b, eps=1e-5):
        mu = jnp.mean(v, axis=-1, keepdims=True)
        var = jnp.mean((v - mu) ** 2, axis=-1, keepdims=True)
        return (v - mu) / jnp.sqrt(var + eps) * g + b

    for p in params:
        B, T, W = x.shape
        ch = W // n_heads
        scale = 1.0 / math.sqrt(math.sqrt(ch))
        h = ln(x, p["ln1_g"], p["ln1_b"])
        qkv = (h @ p["w_qkv"] + p["b_qkv"]).reshape(B, T, n_heads, 3 * ch)
        q, k, v = qkv[..., :ch], qkv[..., ch:2 * ch], qkv[..., 2 * ch:]
        w = jnp.einsum("bthc,bshc->bhts", q * scale, k * scale)
        w = jax.nn.softmax(w, axis=-1)
        a = jnp.einsum("bhts,bshc->bthc", w, v).reshape(B, T, W)
        x = x + a @ p["w_ap"] + p["b_ap"]
        h2 = ln(x, p["ln2_g"], p["ln2_b"])
        m = h2 @ p["w_fc"] + p["b_fc"]
        m = 0.5 * m * (1.0 + lax.erf(m / math.sqrt(2.0)))
        x = x + m @ p["w_cp"] + p["b_cp"]
    return x


def init_params(key, n_layers, width):
    """Canonical (torch-equivalent) params: Linear weights stored transposed
    as (in_features, out_features) == torch_weight.T; biases 1-D; all f32."""
    def linear(k, fin, fout):
        kw, kb = jax.random.split(k)
        bound = 1.0 / math.sqrt(fin)
        w = jax.random.uniform(kw, (fin, fout), jnp.float32, -bound, bound)
        b = jax.random.uniform(kb, (fout,), jnp.float32, -bound, bound)
        return w, b

    params = []
    for layer in range(n_layers):
        k = jax.random.fold_in(key, layer)
        k_qkv, k_ap, k_fc, k_cp = jax.random.split(k, 4)
        w_qkv, b_qkv = linear(k_qkv, width, 3 * width)
        w_ap, b_ap = linear(k_ap, width, width)
        w_fc, b_fc = linear(k_fc, width, 4 * width)
        w_cp, b_cp = linear(k_cp, 4 * width, width)
        params.append(dict(
            ln1_g=jnp.ones((width,), jnp.float32),
            ln1_b=jnp.zeros((width,), jnp.float32),
            w_qkv=w_qkv, b_qkv=b_qkv,
            w_ap=w_ap, b_ap=b_ap,
            ln2_g=jnp.ones((width,), jnp.float32),
            ln2_b=jnp.zeros((width,), jnp.float32),
            w_fc=w_fc, b_fc=b_fc,
            w_cp=w_cp, b_cp=b_cp,
        ))
    return params


if __name__ == "__main__":
    # Small config: batch=2, n_ctx=8, width=32, heads=4, layers=2
    B, T, W, H, L = 2, 8, 32, 4, 2
    key = jax.random.PRNGKey(0)
    k_x, k_p = jax.random.split(key)
    x = jax.random.normal(k_x, (B, T, W), jnp.float32)
    params = init_params(k_p, L, W)

    fwd = jax.jit(functools.partial(transformer_forward, n_heads=H))
    out = jax.block_until_ready(fwd(x, params))
    assert out.shape == (B, T, W)
    assert jnp.all(jnp.isfinite(out))

    ref = transformer_reference(x, params, H)
    assert jnp.allclose(out, ref, rtol=1e-1, atol=1e-1), (
        float(jnp.max(jnp.abs(out - ref))))
    print("KERNEL_OK")
</pallas_src>

<mosaic_0001>
module attributes {stable_mosaic.version = 11 : i64} {
  func.func @residual_block_kernel(%arg0: i32, %arg1: i32, %arg2: memref<1x8x32xf32, #tpu.memory_space<vmem>>, %arg3: memref<1x32xf32, #tpu.memory_space<vmem>>, %arg4: memref<1x32xf32, #tpu.memory_space<vmem>>, %arg5: memref<32x96xbf16, #tpu.memory_space<vmem>>, %arg6: memref<1x96xf32, #tpu.memory_space<vmem>>, %arg7: memref<32x32xbf16, #tpu.memory_space<vmem>>, %arg8: memref<1x32xf32, #tpu.memory_space<vmem>>, %arg9: memref<1x32xf32, #tpu.memory_space<vmem>>, %arg10: memref<1x32xf32, #tpu.memory_space<vmem>>, %arg11: memref<32x128xbf16, #tpu.memory_space<vmem>>, %arg12: memref<1x128xf32, #tpu.memory_space<vmem>>, %arg13: memref<128x32xbf16, #tpu.memory_space<vmem>>, %arg14: memref<1x32xf32, #tpu.memory_space<vmem>>, %arg15: memref<1x8x32xf32, #tpu.memory_space<vmem>>, %arg16: memref<8x32xbf16, #tpu.memory_space<vmem>>, %arg17: memref<8x32xbf16, #tpu.memory_space<vmem>>) attributes {dimension_semantics = [#tpu.dimension_semantics<parallel>, #tpu.dimension_semantics<arbitrary>], iteration_bounds = array<i64: 2, 1>, scalar_prefetch = 0 : i64, scratch_operands = 2 : i64, tpu.core_type = #tpu.core_type<tc>, window_params = [{transform_indices = @transform_0, window_bounds = array<i64: 1, 8, 32>}, {pipeline_mode = #tpu.pipeline_mode<synchronous>, transform_indices = @transform_1, window_bounds = array<i64: 1, 32>}, {pipeline_mode = #tpu.pipeline_mode<synchronous>, transform_indices = @transform_2, window_bounds = array<i64: 1, 32>}, {pipeline_mode = #tpu.pipeline_mode<synchronous>, transform_indices = @transform_3, window_bounds = array<i64: 32, 96>}, {pipeline_mode = #tpu.pipeline_mode<synchronous>, transform_indices = @transform_4, window_bounds = array<i64: 1, 96>}, {pipeline_mode = #tpu.pipeline_mode<synchronous>, transform_indices = @transform_5, window_bounds = array<i64: 32, 32>}, {pipeline_mode = #tpu.pipeline_mode<synchronous>, transform_indices = @transform_6, window_bounds = array<i64: 1, 32>}, {pipeline_mode = #tpu.pipeline_mode<synchronous>, transform_indices = @transform_7, window_bounds = array<i64: 1, 32>}, {pipeline_mode = #tpu.pipeline_mode<synchronous>, transform_indices = @transform_8, window_bounds = array<i64: 1, 32>}, {transform_indices = @transform_9, window_bounds = array<i64: 32, 128>}, {transform_indices = @transform_10, window_bounds = array<i64: 1, 128>}, {transform_indices = @transform_11, window_bounds = array<i64: 128, 32>}, {pipeline_mode = #tpu.pipeline_mode<synchronous>, transform_indices = @transform_12, window_bounds = array<i64: 1, 32>}, {transform_indices = @transform_13, window_bounds = array<i64: 1, 8, 32>}]} {
    %c0_i32 = arith.constant 0 : i32
    %0 = arith.cmpi eq, %arg1, %c0_i32 : i32
    %1 = arith.extui %0 : i1 to i32
    %c0_i32_0 = arith.constant 0 : i32
    %2 = arith.cmpi ne, %1, %c0_i32_0 : i32
    scf.if %2 {
      %c0_18 = arith.constant 0 : index
      %c0_19 = arith.constant 0 : index
      %c0_20 = arith.constant 0 : index
      %28 = vector.load %arg2[%c0_18, %c0_19, %c0_20] : memref<1x8x32xf32, #tpu.memory_space<vmem>>, vector<1x8x32xf32>
      %29 = vector.shape_cast %28 : vector<1x8x32xf32> to vector<8x32xf32>
      %c0_21 = arith.constant 0 : index
      %c0_22 = arith.constant 0 : index
      %30 = vector.load %arg3[%c0_21, %c0_22] : memref<1x32xf32, #tpu.memory_space<vmem>>, vector<1x32xf32>
      %31 = vector.shape_cast %30 : vector<1x32xf32> to vector<32xf32>
      %c0_23 = arith.constant 0 : index
      %c0_24 = arith.constant 0 : index
      %32 = vector.load %arg4[%c0_23, %c0_24] : memref<1x32xf32, #tpu.memory_space<vmem>>, vector<1x32xf32>
      %33 = vector.shape_cast %32 : vector<1x32xf32> to vector<32xf32>
      %cst_25 = arith.constant dense<0.000000e+00> : vector<8xf32>
      %34 = vector.multi_reduction <add>, %29, %cst_25 [1] : vector<8x32xf32> to vector<8xf32>
      %35 = vector.shape_cast %34 : vector<8xf32> to vector<8x1xf32>
      %cst_26 = arith.constant 3.200000e+01 : f32
      %36 = vector.broadcast %cst_26 : f32 to vector<8x1xf32>
      %37 = arith.divf %35, %36 : vector<8x1xf32>
      %38 = vector.broadcast %37 : vector<8x1xf32> to vector<8x32xf32>
      %39 = arith.subf %29, %38 : vector<8x32xf32>
      %40 = arith.mulf %39, %39 : vector<8x32xf32>
      %cst_27 = arith.constant dense<0.000000e+00> : vector<8xf32>
      %41 = vector.multi_reduction <add>, %40, %cst_27 [1] : vector<8x32xf32> to vector<8xf32>
      %42 = vector.shape_cast %41 : vector<8xf32> to vector<8x1xf32>
      %cst_28 = arith.constant 3.200000e+01 : f32
      %43 = vector.broadcast %cst_28 : f32 to vector<8x1xf32>
      %44 = arith.divf %42, %43 : vector<8x1xf32>
      %45 = vector.broadcast %37 : vector<8x1xf32> to vector<8x32xf32>
      %46 = arith.subf %29, %45 : vector<8x32xf32>
      %cst_29 = arith.constant 9.99999974E-6 : f32
      %47 = vector.broadcast %cst_29 : f32 to vector<8x1xf32>
      %48 = arith.addf %44, %47 : vector<8x1xf32>
      %49 = math.rsqrt %48 : vector<8x1xf32>
      %50 = vector.broadcast %49 : vector<8x1xf32> to vector<8x32xf32>
      %51 = arith.mulf %46, %50 : vector<8x32xf32>
      %52 = vector.shape_cast %31 : vector<32xf32> to vector<1x32xf32>
      %53 = vector.broadcast %52 : vector<1x32xf32> to vector<8x32xf32>
      %54 = arith.mulf %51, %53 : vector<8x32xf32>
      %55 = vector.shape_cast %33 : vector<32xf32> to vector<1x32xf32>
      %56 = vector.broadcast %55 : vector<1x32xf32> to vector<8x32xf32>
      %57 = arith.addf %54, %56 : vector<8x32xf32>
      %58 = arith.truncf %57 : vector<8x32xf32> to vector<8x32xbf16>
      %c0_30 = arith.constant 0 : index
      %c0_31 = arith.constant 0 : index
      %59 = vector.load %arg5[%c0_30, %c0_31] : memref<32x96xbf16, #tpu.memory_space<vmem>>, vector<32x96xbf16>
      %cst_32 = arith.constant dense<0.000000e+00> : vector<8x96xf32>
      %60 = tpu.matmul %58, %59, %cst_32 {dimension_numbers = #tpu.dot_dimension_numbers<[1], [0], [0], [1], [0, 0, 1, 1], [], []>} : vector<8x32xbf16>, vector<32x96xbf16>, vector<8x96xf32> -> vector<8x96xf32>
      %c0_33 = arith.constant 0 : index
      %c0_34 = arith.constant 0 : index
      %61 = vector.load %arg6[%c0_33, %c0_34] : memref<1x96xf32, #tpu.memory_space<vmem>>, vector<1x96xf32>
      %62 = vector.shape_cast %61 : vector<1x96xf32> to vector<96xf32>
      %63 = vector.shape_cast %62 : vector<96xf32> to vector<1x96xf32>
      %64 = vector.broadcast %63 : vector<1x96xf32> to vector<8x96xf32>
      %65 = arith.addf %60, %64 : vector<8x96xf32>
      %66 = arith.truncf %65 : vector<8x96xf32> to vector<8x96xbf16>
      %67 = vector.extract_strided_slice %66 {offsets = [0, 0], sizes = [8, 8], strides = [1, 1]} : vector<8x96xbf16> to vector<8x8xbf16>
      %68 = vector.extract_strided_slice %66 {offsets = [0, 32], sizes = [8, 8], strides = [1, 1]} : vector<8x96xbf16> to vector<8x8xbf16>
      %69 = vector.extract_strided_slice %66 {offsets = [0, 64], sizes = [8, 8], strides = [1, 1]} : vector<8x96xbf16> to vector<8x8xbf16>
      %cst_35 = arith.constant dense<0.000000e+00> : vector<8x8xf32>
      %70 = tpu.matmul %67, %68, %cst_35 {dimension_numbers = #tpu.dot_dimension_numbers<[1], [1], [0], [0], [0, 0, 1, 0], [], []>} : vector<8x8xbf16>, vector<8x8xbf16>, vector<8x8xf32> -> vector<8x8xf32>
      %cst_36 = arith.constant dense<0xFF800000> : vector<8xf32>
      %71 = vector.multi_reduction <maximumf>, %70, %cst_36 [1] : vector<8x8xf32> to vector<8xf32>
      %72 = vector.shape_cast %71 : vector<8xf32> to vector<8x1xf32>
      %73 = vector.broadcast %72 : vector<8x1xf32> to vector<8x8xf32>
      %74 = arith.subf %70, %73 : vector<8x8xf32>
      %75 = math.exp %74 : vector<8x8xf32>
      %cst_37 = arith.constant dense<0.000000e+00> : vector<8xf32>
      %76 = vector.multi_reduction <add>, %75, %cst_37 [1] : vector<8x8xf32> to vector<8xf32>
      %77 = vector.shape_cast %76 : vector<8xf32> to vector<8x1xf32>
      %78 = tpu.reciprocal %77 {approx = true} : vector<8x1xf32> -> vector<8x1xf32>
      %79 = vector.broadcast %78 : vector<8x1xf32> to vector<8x8xf32>
      %80 = arith.mulf %75, %79 : vector<8x8xf32>
      %81 = arith.truncf %80 : vector<8x8xf32> to vector<8x8xbf16>
      %cst_38 = arith.constant dense<0.000000e+00> : vector<8x8xf32>
      %82 = tpu.matmul %81, %69, %cst_38 {dimension_numbers = #tpu.dot_dimension_numbers<[1], [0], [0], [1], [0, 0, 1, 1], [], []>} : vector<8x8xbf16>, vector<8x8xbf16>, vector<8x8xf32> -> vector<8x8xf32>
      %83 = arith.truncf %82 : vector<8x8xf32> to vector<8x8xbf16>
      %c0_39 = arith.constant 0 : index
      %c0_40 = arith.constant 0 : index
      %84 = vector.load %arg16[%c0_39, %c0_40] : memref<8x32xbf16, #tpu.memory_space<vmem>>, vector<8x8xbf16>
      tpu.vector_store %arg16[%c0_39, %c0_40], %83 {strides = array<i32>} : memref<8x32xbf16, #tpu.memory_space<vmem>>, vector<8x8xbf16>,
      %85 = vector.extract_strided_slice %66 {offsets = [0, 8], sizes = [8, 8], strides = [1, 1]} : vector<8x96xbf16> to vector<8x8xbf16>
      %86 = vector.extract_strided_slice %66 {offsets = [0, 40], sizes = [8, 8], strides = [1, 1]} : vector<8x96xbf16> to vector<8x8xbf16>
      %87 = vector.extract_strided_slice %66 {offsets = [0, 72], sizes = [8, 8], strides = [1, 1]} : vector<8x96xbf16> to vector<8x8xbf16>
      %cst_41 = arith.constant dense<0.000000e+00> : vector<8x8xf32>
      %88 = tpu.matmul %85, %86, %cst_41 {dimension_numbers = #tpu.dot_dimension_numbers<[1], [1], [0], [0], [0, 0, 1, 0], [], []>} : vector<8x8xbf16>, vector<8x8xbf16>, vector<8x8xf32> -> vector<8x8xf32>
      %cst_42 = arith.constant dense<0xFF800000> : vector<8xf32>
      %89 = vector.multi_reduction <maximumf>, %88, %cst_42 [1] : vector<8x8xf32> to vector<8xf32>
      %90 = vector.shape_cast %89 : vector<8xf32> to vector<8x1xf32>
      %91 = vector.broadcast %90 : vector<8x1xf32> to vector<8x8xf32>
      %92 = arith.subf %88, %91 : vector<8x8xf32>
      %93 = math.exp %92 : vector<8x8xf32>
      %cst_43 = arith.constant dense<0.000000e+00> : vector<8xf32>
      %94 = vector.multi_reduction <add>, %93, %cst_43 [1] : vector<8x8xf32> to vector<8xf32>
      %95 = vector.shape_cast %94 : vector<8xf32> to vector<8x1xf32>
      %96 = tpu.reciprocal %95 {approx = true} : vector<8x1xf32> -> vector<8x1xf32>
      %97 = vector.broadcast %96 : vector<8x1xf32> to vector<8x8xf32>
      %98 = arith.mulf %93, %97 : vector<8x8xf32>
      %99 = arith.truncf %98 : vector<8x8xf32> to vector<8x8xbf16>
      %cst_44 = arith.constant dense<0.000000e+00> : vector<8x8xf32>
      %100 = tpu.matmul %99, %87, %cst_44 {dimension_numbers = #tpu.dot_dimension_numbers<[1], [0], [0], [1], [0, 0, 1, 1], [], []>} : vector<8x8xbf16>, vector<8x8xbf16>, vector<8x8xf32> -> vector<8x8xf32>
      %101 = arith.truncf %100 : vector<8x8xf32> to vector<8x8xbf16>
      %c0_45 = arith.constant 0 : index
      %c8 = arith.constant 8 : index
      %102 = vector.load %arg16[%c0_45, %c8] : memref<8x32xbf16, #tpu.memory_space<vmem>>, vector<8x8xbf16>
      tpu.vector_store %arg16[%c0_45, %c8], %101 {strides = array<i32>} : memref<8x32xbf16, #tpu.memory_space<vmem>>, vector<8x8xbf16>,
      %103 = vector.extract_strided_slice %66 {offsets = [0, 16], sizes = [8, 8], strides = [1, 1]} : vector<8x96xbf16> to vector<8x8xbf16>
      %104 = vector.extract_strided_slice %66 {offsets = [0, 48], sizes = [8, 8], strides = [1, 1]} : vector<8x96xbf16> to vector<8x8xbf16>
      %105 = vector.extract_strided_slice %66 {offsets = [0, 80], sizes = [8, 8], strides = [1, 1]} : vector<8x96xbf16> to vector<8x8xbf16>
      %cst_46 = arith.constant dense<0.000000e+00> : vector<8x8xf32>
      %106 = tpu.matmul %103, %104, %cst_46 {dimension_numbers = #tpu.dot_dimension_numbers<[1], [1], [0], [0], [0, 0, 1, 0], [], []>} : vector<8x8xbf16>, vector<8x8xbf16>, vector<8x8xf32> -> vector<8x8xf32>
      %cst_47 = arith.constant dense<0xFF800000> : vector<8xf32>
      %107 = vector.multi_reduction <maximumf>, %106, %cst_47 [1] : vector<8x8xf32> to vector<8xf32>
      %108 = vector.shape_cast %107 : vector<8xf32> to vector<8x1xf32>
      %109 = vector.broadcast %108 : vector<8x1xf32> to vector<8x8xf32>
      %110 = arith.subf %106, %109 : vector<8x8xf32>
      %111 = math.exp %110 : vector<8x8xf32>
      %cst_48 = arith.constant dense<0.000000e+00> : vector<8xf32>
      %112 = vector.multi_reduction <add>, %111, %cst_48 [1] : vector<8x8xf32> to vector<8xf32>
      %113 = vector.shape_cast %112 : vector<8xf32> to vector<8x1xf32>
      %114 = tpu.reciprocal %113 {approx = true} : vector<8x1xf32> -> vector<8x1xf32>
      %115 = vector.broadcast %114 : vector<8x1xf32> to vector<8x8xf32>
      %116 = arith.mulf %111, %115 : vector<8x8xf32>
      %117 = arith.truncf %116 : vector<8x8xf32> to vector<8x8xbf16>
      %cst_49 = arith.constant dense<0.000000e+00> : vector<8x8xf32>
      %118 = tpu.matmul %117, %105, %cst_49 {dimension_numbers = #tpu.dot_dimension_numbers<[1], [0], [0], [1], [0, 0, 1, 1], [], []>} : vector<8x8xbf16>, vector<8x8xbf16>, vector<8x8xf32> -> vector<8x8xf32>
      %119 = arith.truncf %118 : vector<8x8xf32> to vector<8x8xbf16>
      %c0_50 = arith.constant 0 : index
      %c16 = arith.constant 16 : index
      %120 = vector.load %arg16[%c0_50, %c16] : memref<8x32xbf16, #tpu.memory_space<vmem>>, vector<8x8xbf16>
      tpu.vector_store %arg16[%c0_50, %c16], %119 {strides = array<i32>} : memref<8x32xbf16, #tpu.memory_space<vmem>>, vector<8x8xbf16>,
      %121 = vector.extract_strided_slice %66 {offsets = [0, 24], sizes = [8, 8], strides = [1, 1]} : vector<8x96xbf16> to vector<8x8xbf16>
      %122 = vector.extract_strided_slice %66 {offsets = [0, 56], sizes = [8, 8], strides = [1, 1]} : vector<8x96xbf16> to vector<8x8xbf16>
      %123 = vector.extract_strided_slice %66 {offsets = [0, 88], sizes = [8, 8], strides = [1, 1]} : vector<8x96xbf16> to vector<8x8xbf16>
      %cst_51 = arith.constant dense<0.000000e+00> : vector<8x8xf32>
      %124 = tpu.matmul %121, %122, %cst_51 {dimension_numbers = #tpu.dot_dimension_numbers<[1], [1], [0], [0], [0, 0, 1, 0], [], []>} : vector<8x8xbf16>, vector<8x8xbf16>, vector<8x8xf32> -> vector<8x8xf32>
      %cst_52 = arith.constant dense<0xFF800000> : vector<8xf32>
      %125 = vector.multi_reduction <maximumf>, %124, %cst_52 [1] : vector<8x8xf32> to vector<8xf32>
      %126 = vector.shape_cast %125 : vector<8xf32> to vector<8x1xf32>
      %127 = vector.broadcast %126 : vector<8x1xf32> to vector<8x8xf32>
      %128 = arith.subf %124, %127 : vector<8x8xf32>
      %129 = math.exp %128 : vector<8x8xf32>
      %cst_53 = arith.constant dense<0.000000e+00> : vector<8xf32>
      %130 = vector.multi_reduction <add>, %129, %cst_53 [1] : vector<8x8xf32> to vector<8xf32>
      %131 = vector.shape_cast %130 : vector<8xf32> to vector<8x1xf32>
      %132 = tpu.reciprocal %131 {approx = true} : vector<8x1xf32> -> vector<8x1xf32>
      %133 = vector.broadcast %132 : vector<8x1xf32> to vector<8x8xf32>
      %134 = arith.mulf %129, %133 : vector<8x8xf32>
      %135 = arith.truncf %134 : vector<8x8xf32> to vector<8x8xbf16>
      %cst_54 = arith.constant dense<0.000000e+00> : vector<8x8xf32>
      %136 = tpu.matmul %135, %123, %cst_54 {dimension_numbers = #tpu.dot_dimension_numbers<[1], [0], [0], [1], [0, 0, 1, 1], [], []>} : vector<8x8xbf16>, vector<8x8xbf16>, vector<8x8xf32> -> vector<8x8xf32>
      %137 = arith.truncf %136 : vector<8x8xf32> to vector<8x8xbf16>
      %c0_55 = arith.constant 0 : index
      %c24 = arith.constant 24 : index
      %138 = vector.load %arg16[%c0_55, %c24] : memref<8x32xbf16, #tpu.memory_space<vmem>>, vector<8x8xbf16>
      tpu.vector_store %arg16[%c0_55, %c24], %137 {strides = array<i32>} : memref<8x32xbf16, #tpu.memory_space<vmem>>, vector<8x8xbf16>,
      %c0_56 = arith.constant 0 : index
      %c0_57 = arith.constant 0 : index
      %139 = vector.load %arg16[%c0_56, %c0_57] : memref<8x32xbf16, #tpu.memory_space<vmem>>, vector<8x32xbf16>
      %c0_58 = arith.constant 0 : index
      %c0_59 = arith.constant 0 : index
      %140 = vector.load %arg7[%c0_58, %c0_59] : memref<32x32xbf16, #tpu.memory_space<vmem>>, vector<32x32xbf16>
      %cst_60 = arith.constant dense<0.000000e+00> : vector<8x32xf32>
      %141 = tpu.matmul %139, %140, %cst_60 {dimension_numbers = #tpu.dot_dimension_numbers<[1], [0], [0], [1], [0, 0, 1, 1], [], []>} : vector<8x32xbf16>, vector<32x32xbf16>, vector<8x32xf32> -> vector<8x32xf32>
      %c0_61 = arith.constant 0 : index
      %c0_62 = arith.constant 0 : index
      %142 = vector.load %arg8[%c0_61, %c0_62] : memref<1x32xf32, #tpu.memory_space<vmem>>, vector<1x32xf32>
      %143 = vector.shape_cast %142 : vector<1x32xf32> to vector<32xf32>
      %144 = vector.shape_cast %143 : vector<32xf32> to vector<1x32xf32>
      %145 = vector.broadcast %144 : vector<1x32xf32> to vector<8x32xf32>
      %146 = arith.addf %141, %145 : vector<8x32xf32>
      %147 = arith.addf %29, %146 : vector<8x32xf32>
      %c0_63 = arith.constant 0 : index
      %c0_64 = arith.constant 0 : index
      %148 = vector.load %arg9[%c0_63, %c0_64] : memref<1x32xf32, #tpu.memory_space<vmem>>, vector<1x32xf32>
      %149 = vector.shape_cast %148 : vector<1x32xf32> to vector<32xf32>
      %c0_65 = arith.constant 0 : index
      %c0_66 = arith.constant 0 : index
      %150 = vector.load %arg10[%c0_65, %c0_66] : memref<1x32xf32, #tpu.memory_space<vmem>>, vector<1x32xf32>
      %151 = vector.shape_cast %150 : vector<1x32xf32> to vector<32xf32>
      %cst_67 = arith.constant dense<0.000000e+00> : vector<8xf32>
      %152 = vector.multi_reduction <add>, %147, %cst_67 [1] : vector<8x32xf32> to vector<8xf32>
      %153 = vector.shape_cast %152 : vector<8xf32> to vector<8x1xf32>
      %cst_68 = arith.constant 3.200000e+01 : f32
      %154 = vector.broadcast %cst_68 : f32 to vector<8x1xf32>
      %155 = arith.divf %153, %154 : vector<8x1xf32>
      %156 = vector.broadcast %155 : vector<8x1xf32> to vector<8x32xf32>
      %157 = arith.subf %147, %156 : vector<8x32xf32>
      %158 = arith.mulf %157, %157 : vector<8x32xf32>
      %cst_69 = arith.constant dense<0.000000e+00> : vector<8xf32>
      %159 = vector.multi_reduction <add>, %158, %cst_69 [1] : vector<8x32xf32> to vector<8xf32>
      %160 = vector.shape_cast %159 : vector<8xf32> to vector<8x1xf32>
      %cst_70 = arith.constant 3.200000e+01 : f32
      %161 = vector.broadcast %cst_70 : f32 to vector<8x1xf32>
      %162 = arith.divf %160, %161 : vector<8x1xf32>
      %163 = vector.broadcast %155 : vector<8x1xf32> to vector<8x32xf32>
      %164 = arith.subf %147, %163 : vector<8x32xf32>
      %cst_71 = arith.constant 9.99999974E-6 : f32
      %165 = vector.broadcast %cst_71 : f32 to vector<8x1xf32>
      %166 = arith.addf %162, %165 : vector<8x1xf32>
      %167 = math.rsqrt %166 : vector<8x1xf32>
      %168 = vector.broadcast %167 : vector<8x1xf32> to vector<8x32xf32>
      %169 = arith.mulf %164, %168 : vector<8x32xf32>
      %170 = vector.shape_cast %149 : vector<32xf32> to vector<1x32xf32>
      %171 = vector.broadcast %170 : vector<1x32xf32> to vector<8x32xf32>
      %172 = arith.mulf %169, %171 : vector<8x32xf32>
      %173 = vector.shape_cast %151 : vector<32xf32> to vector<1x32xf32>
      %174 = vector.broadcast %173 : vector<1x32xf32> to vector<8x32xf32>
      %175 = arith.addf %172, %174 : vector<8x32xf32>
      %176 = arith.truncf %175 : vector<8x32xf32> to vector<8x32xbf16>
      %c0_72 = arith.constant 0 : index
      %c0_73 = arith.constant 0 : index
      %177 = vector.load %arg17[%c0_72, %c0_73] : memref<8x32xbf16, #tpu.memory_space<vmem>>, vector<8x32xbf16>
      tpu.vector_store %arg17[%c0_72, %c0_73], %176 {strides = array<i32>} : memref<8x32xbf16, #tpu.memory_space<vmem>>, vector<8x32xbf16>,
      %c0_74 = arith.constant 0 : index
      %c0_75 = arith.constant 0 : index
      %178 = vector.load %arg14[%c0_74, %c0_75] : memref<1x32xf32, #tpu.memory_space<vmem>>, vector<1x32xf32>
      %179 = vector.shape_cast %178 : vector<1x32xf32> to vector<32xf32>
      %180 = vector.shape_cast %179 : vector<32xf32> to vector<1x32xf32>
      %181 = vector.broadcast %180 : vector<1x32xf32> to vector<8x32xf32>
      %182 = arith.addf %147, %181 : vector<8x32xf32>
      %c0_76 = arith.constant 0 : index
      %c0_77 = arith.constant 0 : index
      %c0_78 = arith.constant 0 : index
      %183 = vector.load %arg15[%c0_76, %c0_77, %c0_78] : memref<1x8x32xf32, #tpu.memory_space<vmem>>, vector<1x8x32xf32>
      %184 = vector.shape_cast %183 : vector<1x8x32xf32> to vector<8x32xf32>
      %185 = vector.shape_cast %182 : vector<8x32xf32> to vector<1x8x32xf32>
      tpu.vector_store %arg15[%c0_76, %c0_77, %c0_78], %185 {strides = array<i32>} : memref<1x8x32xf32, #tpu.memory_space<vmem>>, vector<1x8x32xf32>,
    } else {
    }
    %c0 = arith.constant 0 : index
    %c0_1 = arith.constant 0 : index
    %3 = vector.load %arg17[%c0, %c0_1] : memref<8x32xbf16, #tpu.memory_space<vmem>>, vector<8x32xbf16>
    %c0_2 = arith.constant 0 : index
    %c0_3 = arith.constant 0 : index
    %4 = vector.load %arg11[%c0_2, %c0_3] : memref<32x128xbf16, #tpu.memory_space<vmem>>, vector<32x128xbf16>
    %cst = arith.constant dense<0.000000e+00> : vector<8x128xf32>
    %5 = tpu.matmul %3, %4, %cst {dimension_numbers = #tpu.dot_dimension_numbers<[1], [0], [0], [1], [0, 0, 1, 1], [], []>} : vector<8x32xbf16>, vector<32x128xbf16>, vector<8x128xf32> -> vector<8x128xf32>
    %c0_4 = arith.constant 0 : index
    %c0_5 = arith.constant 0 : index
    %6 = vector.load %arg12[%c0_4, %c0_5] : memref<1x128xf32, #tpu.memory_space<vmem>>, vector<1x128xf32>
    %7 = vector.shape_cast %6 : vector<1x128xf32> to vector<128xf32>
    %8 = vector.shape_cast %7 : vector<128xf32> to vector<1x128xf32>
    %9 = vector.broadcast %8 : vector<1x128xf32> to vector<8x128xf32>
    %10 = arith.addf %5, %9 : vector<8x128xf32>
    %cst_6 = arith.constant 5.000000e-01 : f32
    %11 = vector.broadcast %cst_6 : f32 to vector<8x128xf32>
    %12 = arith.mulf %11, %10 : vector<8x128xf32>
    %cst_7 = arith.constant 0.707106769 : f32
    %13 = vector.broadcast %cst_7 : f32 to vector<8x128xf32>
    %14 = arith.mulf %10, %13 : vector<8x128xf32>
    %15 = math.erf %14 : vector<8x128xf32>
    %cst_8 = arith.constant 1.000000e+00 : f32
    %16 = vector.broadcast %cst_8 : f32 to vector<8x128xf32>
    %17 = arith.addf %16, %15 : vector<8x128xf32>
    %18 = arith.mulf %12, %17 : vector<8x128xf32>
    %19 = arith.truncf %18 : vector<8x128xf32> to vector<8x128xbf16>
    %c0_9 = arith.constant 0 : index
    %c0_10 = arith.constant 0 : index
    %c0_11 = arith.constant 0 : index
    %20 = vector.load %arg15[%c0_9, %c0_10, %c0_11] : memref<1x8x32xf32, #tpu.memory_space<vmem>>, vector<1x8x32xf32>
    %21 = vector.shape_cast %20 : vector<1x8x32xf32> to vector<8x32xf32>
    %c0_12 = arith.constant 0 : index
    %c0_13 = arith.constant 0 : index
    %22 = vector.load %arg13[%c0_12, %c0_13] : memref<128x32xbf16, #tpu.memory_space<vmem>>, vector<128x32xbf16>
    %cst_14 = arith.constant dense<0.000000e+00> : vector<8x32xf32>
    %23 = tpu.matmul %19, %22, %cst_14 {dimension_numbers = #tpu.dot_dimension_numbers<[1], [0], [0], [1], [0, 0, 1, 1], [], []>} : vector<8x128xbf16>, vector<128x32xbf16>, vector<8x32xf32> -> vector<8x32xf32>
    %24 = arith.addf %21, %23 : vector<8x32xf32>
    %c0_15 = arith.constant 0 : index
    %c0_16 = arith.constant 0 : index
    %c0_17 = arith.constant 0 : index
    %25 = vector.load %arg15[%c0_15, %c0_16, %c0_17] : memref<1x8x32xf32, #tpu.memory_space<vmem>>, vector<1x8x32xf32>
    %26 = vector.shape_cast %25 : vector<1x8x32xf32> to vector<8x32xf32>
    %27 = vector.shape_cast %24 : vector<8x32xf32> to vector<1x8x32xf32>
    tpu.vector_store %arg15[%c0_15, %c0_16, %c0_17], %27 {strides = array<i32>} : memref<1x8x32xf32, #tpu.memory_space<vmem>>, vector<1x8x32xf32>,
    return
  }
  func.func @transform_0(%arg0: i32, %arg1: i32) -> (i32, i32, i32) {
    %c0_i32 = arith.constant 0 : i32
    %c0_i32_0 = arith.constant 0 : i32
    %c0_i32_1 = arith.constant 0 : i32
    return %arg0, %c0_i32, %c0_i32_0 : i32, i32, i32
  }
  func.func @transform_1(%arg0: i32, %arg1: i32) -> (i32, i32) {
    %c0_i32 = arith.constant 0 : i32
    %c0_i32_0 = arith.constant 0 : i32
    %c0_i32_1 = arith.constant 0 : i32
    return %c0_i32, %c0_i32_0 : i32, i32
  }
  func.func @transform_2(%arg0: i32, %arg1: i32) -> (i32, i32) {
    %c0_i32 = arith.constant 0 : i32
    %c0_i32_0 = arith.constant 0 : i32
    %c0_i32_1 = arith.constant 0 : i32
    return %c0_i32, %c0_i32_0 : i32, i32
  }
  func.func @transform_3(%arg0: i32, %arg1: i32) -> (i32, i32) {
    %c0_i32 = arith.constant 0 : i32
    %c0_i32_0 = arith.constant 0 : i32
    %c0_i32_1 = arith.constant 0 : i32
    return %c0_i32, %c0_i32_0 : i32, i32
  }
  func.func @transform_4(%arg0: i32, %arg1: i32) -> (i32, i32) {
    %c0_i32 = arith.constant 0 : i32
    %c0_i32_0 = arith.constant 0 : i32
    %c0_i32_1 = arith.constant 0 : i32
    return %c0_i32, %c0_i32_0 : i32, i32
  }
  func.func @transform_5(%arg0: i32, %arg1: i32) -> (i32, i32) {
    %c0_i32 = arith.constant 0 : i32
    %c0_i32_0 = arith.constant 0 : i32
    %c0_i32_1 = arith.constant 0 : i32
    return %c0_i32, %c0_i32_0 : i32, i32
  }
  func.func @transform_6(%arg0: i32, %arg1: i32) -> (i32, i32) {
    %c0_i32 = arith.constant 0 : i32
    %c0_i32_0 = arith.constant 0 : i32
    %c0_i32_1 = arith.constant 0 : i32
    return %c0_i32, %c0_i32_0 : i32, i32
  }
  func.func @transform_7(%arg0: i32, %arg1: i32) -> (i32, i32) {
    %c0_i32 = arith.constant 0 : i32
    %c0_i32_0 = arith.constant 0 : i32
    %c0_i32_1 = arith.constant 0 : i32
    return %c0_i32, %c0_i32_0 : i32, i32
  }
  func.func @transform_8(%arg0: i32, %arg1: i32) -> (i32, i32) {
    %c0_i32 = arith.constant 0 : i32
    %c0_i32_0 = arith.constant 0 : i32
    %c0_i32_1 = arith.constant 0 : i32
    return %c0_i32, %c0_i32_0 : i32, i32
  }
  func.func @transform_9(%arg0: i32, %arg1: i32) -> (i32, i32) {
    %c0_i32 = arith.constant 0 : i32
    %c0_i32_0 = arith.constant 0 : i32
    return %c0_i32, %arg1 : i32, i32
  }
  func.func @transform_10(%arg0: i32, %arg1: i32) -> (i32, i32) {
    %c0_i32 = arith.constant 0 : i32
    %c0_i32_0 = arith.constant 0 : i32
    return %c0_i32, %arg1 : i32, i32
  }
  func.func @transform_11(%arg0: i32, %arg1: i32) -> (i32, i32) {
    %c0_i32 = arith.constant 0 : i32
    %c0_i32_0 = arith.constant 0 : i32
    return %arg1, %c0_i32 : i32, i32
  }
  func.func @transform_12(%arg0: i32, %arg1: i32) -> (i32, i32) {
    %c0_i32 = arith.constant 0 : i32
    %c0_i32_0 = arith.constant 0 : i32
    %c0_i32_1 = arith.constant 0 : i32
    return %c0_i32, %c0_i32_0 : i32, i32
  }
  func.func @transform_13(%arg0: i32, %arg1: i32) -> (i32, i32, i32) {
    %c0_i32 = arith.constant 0 : i32
    %c0_i32_0 = arith.constant 0 : i32
    %c0_i32_1 = arith.constant 0 : i32
    return %arg0, %c0_i32, %c0_i32_0 : i32, i32, i32
  }
}

module attributes {stable_mosaic.version = 11 : i64} {
  func.func @residual_block_kernel(%arg0: i32, %arg1: i32, %arg2: memref<1x8x32xf32, #tpu.memory_space<vmem>>, %arg3: memref<1x32xf32, #tpu.memory_space<vmem>>, %arg4: memref<1x32xf32, #tpu.memory_space<vmem>>, %arg5: memref<32x96xbf16, #tpu.memory_space<vmem>>, %arg6: memref<1x96xf32, #tpu.memory_space<vmem>>, %arg7: memref<32x32xbf16, #tpu.memory_space<vmem>>, %arg8: memref<1x32xf32, #tpu.memory_space<vmem>>, %arg9: memref<1x32xf32, #tpu.memory_space<vmem>>, %arg10: memref<1x32xf32, #tpu.memory_space<vmem>>, %arg11: memref<32x128xbf16, #tpu.memory_space<vmem>>, %arg12: memref<1x128xf32, #tpu.memory_space<vmem>>, %arg13: memref<128x32xbf16, #tpu.memory_space<vmem>>, %arg14: memref<1x32xf32, #tpu.memory_space<vmem>>, %arg15: memref<1x8x32xf32, #tpu.memory_space<vmem>>, %arg16: memref<8x32xbf16, #tpu.memory_space<vmem>>, %arg17: memref<8x32xbf16, #tpu.memory_space<vmem>>) attributes {dimension_semantics = [#tpu.dimension_semantics<parallel>, #tpu.dimension_semantics<arbitrary>], iteration_bounds = array<i64: 2, 1>, scalar_prefetch = 0 : i64, scratch_operands = 2 : i64, tpu.core_type = #tpu.core_type<tc>, window_params = [{transform_indices = @transform_0, window_bounds = array<i64: 1, 8, 32>}, {pipeline_mode = #tpu.pipeline_mode<synchronous>, transform_indices = @transform_1, window_bounds = array<i64: 1, 32>}, {pipeline_mode = #tpu.pipeline_mode<synchronous>, transform_indices = @transform_2, window_bounds = array<i64: 1, 32>}, {pipeline_mode = #tpu.pipeline_mode<synchronous>, transform_indices = @transform_3, window_bounds = array<i64: 32, 96>}, {pipeline_mode = #tpu.pipeline_mode<synchronous>, transform_indices = @transform_4, window_bounds = array<i64: 1, 96>}, {pipeline_mode = #tpu.pipeline_mode<synchronous>, transform_indices = @transform_5, window_bounds = array<i64: 32, 32>}, {pipeline_mode = #tpu.pipeline_mode<synchronous>, transform_indices = @transform_6, window_bounds = array<i64: 1, 32>}, {pipeline_mode = #tpu.pipeline_mode<synchronous>, transform_indices = @transform_7, window_bounds = array<i64: 1, 32>}, {pipeline_mode = #tpu.pipeline_mode<synchronous>, transform_indices = @transform_8, window_bounds = array<i64: 1, 32>}, {transform_indices = @transform_9, window_bounds = array<i64: 32, 128>}, {transform_indices = @transform_10, window_bounds = array<i64: 1, 128>}, {transform_indices = @transform_11, window_bounds = array<i64: 128, 32>}, {pipeline_mode = #tpu.pipeline_mode<synchronous>, transform_indices = @transform_12, window_bounds = array<i64: 1, 32>}, {transform_indices = @transform_13, window_bounds = array<i64: 1, 8, 32>}]} {
    %c0_i32 = arith.constant 0 : i32
    %0 = arith.cmpi eq, %arg1, %c0_i32 : i32
    %1 = arith.extui %0 : i1 to i32
    %c0_i32_0 = arith.constant 0 : i32
    %2 = arith.cmpi ne, %1, %c0_i32_0 : i32
    scf.if %2 {
      %c0_18 = arith.constant 0 : index
      %c0_19 = arith.constant 0 : index
      %c0_20 = arith.constant 0 : index
      %28 = vector.load %arg2[%c0_18, %c0_19, %c0_20] : memref<1x8x32xf32, #tpu.memory_space<vmem>>, vector<1x8x32xf32>
      %29 = vector.shape_cast %28 : vector<1x8x32xf32> to vector<8x32xf32>
      %c0_21 = arith.constant 0 : index
      %c0_22 = arith.constant 0 : index
      %30 = vector.load %arg3[%c0_21, %c0_22] : memref<1x32xf32, #tpu.memory_space<vmem>>, vector<1x32xf32>
      %31 = vector.shape_cast %30 : vector<1x32xf32> to vector<32xf32>
      %c0_23 = arith.constant 0 : index
      %c0_24 = arith.constant 0 : index
      %32 = vector.load %arg4[%c0_23, %c0_24] : memref<1x32xf32, #tpu.memory_space<vmem>>, vector<1x32xf32>
      %33 = vector.shape_cast %32 : vector<1x32xf32> to vector<32xf32>
      %cst_25 = arith.constant dense<0.000000e+00> : vector<8xf32>
      %34 = vector.multi_reduction <add>, %29, %cst_25 [1] : vector<8x32xf32> to vector<8xf32>
      %35 = vector.shape_cast %34 : vector<8xf32> to vector<8x1xf32>
      %cst_26 = arith.constant 3.200000e+01 : f32
      %36 = vector.broadcast %cst_26 : f32 to vector<8x1xf32>
      %37 = arith.divf %35, %36 : vector<8x1xf32>
      %38 = vector.broadcast %37 : vector<8x1xf32> to vector<8x32xf32>
      %39 = arith.subf %29, %38 : vector<8x32xf32>
      %40 = arith.mulf %39, %39 : vector<8x32xf32>
      %cst_27 = arith.constant dense<0.000000e+00> : vector<8xf32>
      %41 = vector.multi_reduction <add>, %40, %cst_27 [1] : vector<8x32xf32> to vector<8xf32>
      %42 = vector.shape_cast %41 : vector<8xf32> to vector<8x1xf32>
      %cst_28 = arith.constant 3.200000e+01 : f32
      %43 = vector.broadcast %cst_28 : f32 to vector<8x1xf32>
      %44 = arith.divf %42, %43 : vector<8x1xf32>
      %45 = vector.broadcast %37 : vector<8x1xf32> to vector<8x32xf32>
      %46 = arith.subf %29, %45 : vector<8x32xf32>
      %cst_29 = arith.constant 9.99999974E-6 : f32
      %47 = vector.broadcast %cst_29 : f32 to vector<8x1xf32>
      %48 = arith.addf %44, %47 : vector<8x1xf32>
      %49 = math.rsqrt %48 : vector<8x1xf32>
      %50 = vector.broadcast %49 : vector<8x1xf32> to vector<8x32xf32>
      %51 = arith.mulf %46, %50 : vector<8x32xf32>
      %52 = vector.shape_cast %31 : vector<32xf32> to vector<1x32xf32>
      %53 = vector.broadcast %52 : vector<1x32xf32> to vector<8x32xf32>
      %54 = arith.mulf %51, %53 : vector<8x32xf32>
      %55 = vector.shape_cast %33 : vector<32xf32> to vector<1x32xf32>
      %56 = vector.broadcast %55 : vector<1x32xf32> to vector<8x32xf32>
      %57 = arith.addf %54, %56 : vector<8x32xf32>
      %58 = arith.truncf %57 : vector<8x32xf32> to vector<8x32xbf16>
      %c0_30 = arith.constant 0 : index
      %c0_31 = arith.constant 0 : index
      %59 = vector.load %arg5[%c0_30, %c0_31] : memref<32x96xbf16, #tpu.memory_space<vmem>>, vector<32x96xbf16>
      %cst_32 = arith.constant dense<0.000000e+00> : vector<8x96xf32>
      %60 = tpu.matmul %58, %59, %cst_32 {dimension_numbers = #tpu.dot_dimension_numbers<[1], [0], [0], [1], [0, 0, 1, 1], [], []>} : vector<8x32xbf16>, vector<32x96xbf16>, vector<8x96xf32> -> vector<8x96xf32>
      %c0_33 = arith.constant 0 : index
      %c0_34 = arith.constant 0 : index
      %61 = vector.load %arg6[%c0_33, %c0_34] : memref<1x96xf32, #tpu.memory_space<vmem>>, vector<1x96xf32>
      %62 = vector.shape_cast %61 : vector<1x96xf32> to vector<96xf32>
      %63 = vector.shape_cast %62 : vector<96xf32> to vector<1x96xf32>
      %64 = vector.broadcast %63 : vector<1x96xf32> to vector<8x96xf32>
      %65 = arith.addf %60, %64 : vector<8x96xf32>
      %66 = arith.truncf %65 : vector<8x96xf32> to vector<8x96xbf16>
      %67 = vector.extract_strided_slice %66 {offsets = [0, 0], sizes = [8, 8], strides = [1, 1]} : vector<8x96xbf16> to vector<8x8xbf16>
      %68 = vector.extract_strided_slice %66 {offsets = [0, 32], sizes = [8, 8], strides = [1, 1]} : vector<8x96xbf16> to vector<8x8xbf16>
      %69 = vector.extract_strided_slice %66 {offsets = [0, 64], sizes = [8, 8], strides = [1, 1]} : vector<8x96xbf16> to vector<8x8xbf16>
      %cst_35 = arith.constant dense<0.000000e+00> : vector<8x8xf32>
      %70 = tpu.matmul %67, %68, %cst_35 {dimension_numbers = #tpu.dot_dimension_numbers<[1], [1], [0], [0], [0, 0, 1, 0], [], []>} : vector<8x8xbf16>, vector<8x8xbf16>, vector<8x8xf32> -> vector<8x8xf32>
      %cst_36 = arith.constant dense<0xFF800000> : vector<8xf32>
      %71 = vector.multi_reduction <maximumf>, %70, %cst_36 [1] : vector<8x8xf32> to vector<8xf32>
      %72 = vector.shape_cast %71 : vector<8xf32> to vector<8x1xf32>
      %73 = vector.broadcast %72 : vector<8x1xf32> to vector<8x8xf32>
      %74 = arith.subf %70, %73 : vector<8x8xf32>
      %75 = math.exp %74 : vector<8x8xf32>
      %cst_37 = arith.constant dense<0.000000e+00> : vector<8xf32>
      %76 = vector.multi_reduction <add>, %75, %cst_37 [1] : vector<8x8xf32> to vector<8xf32>
      %77 = vector.shape_cast %76 : vector<8xf32> to vector<8x1xf32>
      %78 = tpu.reciprocal %77 {approx = true} : vector<8x1xf32> -> vector<8x1xf32>
      %79 = vector.broadcast %78 : vector<8x1xf32> to vector<8x8xf32>
      %80 = arith.mulf %75, %79 : vector<8x8xf32>
      %81 = arith.truncf %80 : vector<8x8xf32> to vector<8x8xbf16>
      %cst_38 = arith.constant dense<0.000000e+00> : vector<8x8xf32>
      %82 = tpu.matmul %81, %69, %cst_38 {dimension_numbers = #tpu.dot_dimension_numbers<[1], [0], [0], [1], [0, 0, 1, 1], [], []>} : vector<8x8xbf16>, vector<8x8xbf16>, vector<8x8xf32> -> vector<8x8xf32>
      %83 = arith.truncf %82 : vector<8x8xf32> to vector<8x8xbf16>
      %c0_39 = arith.constant 0 : index
      %c0_40 = arith.constant 0 : index
      %84 = vector.load %arg16[%c0_39, %c0_40] : memref<8x32xbf16, #tpu.memory_space<vmem>>, vector<8x8xbf16>
      tpu.vector_store %arg16[%c0_39, %c0_40], %83 {strides = array<i32>} : memref<8x32xbf16, #tpu.memory_space<vmem>>, vector<8x8xbf16>,
      %85 = vector.extract_strided_slice %66 {offsets = [0, 8], sizes = [8, 8], strides = [1, 1]} : vector<8x96xbf16> to vector<8x8xbf16>
      %86 = vector.extract_strided_slice %66 {offsets = [0, 40], sizes = [8, 8], strides = [1, 1]} : vector<8x96xbf16> to vector<8x8xbf16>
      %87 = vector.extract_strided_slice %66 {offsets = [0, 72], sizes = [8, 8], strides = [1, 1]} : vector<8x96xbf16> to vector<8x8xbf16>
      %cst_41 = arith.constant dense<0.000000e+00> : vector<8x8xf32>
      %88 = tpu.matmul %85, %86, %cst_41 {dimension_numbers = #tpu.dot_dimension_numbers<[1], [1], [0], [0], [0, 0, 1, 0], [], []>} : vector<8x8xbf16>, vector<8x8xbf16>, vector<8x8xf32> -> vector<8x8xf32>
      %cst_42 = arith.constant dense<0xFF800000> : vector<8xf32>
      %89 = vector.multi_reduction <maximumf>, %88, %cst_42 [1] : vector<8x8xf32> to vector<8xf32>
      %90 = vector.shape_cast %89 : vector<8xf32> to vector<8x1xf32>
      %91 = vector.broadcast %90 : vector<8x1xf32> to vector<8x8xf32>
      %92 = arith.subf %88, %91 : vector<8x8xf32>
      %93 = math.exp %92 : vector<8x8xf32>
      %cst_43 = arith.constant dense<0.000000e+00> : vector<8xf32>
      %94 = vector.multi_reduction <add>, %93, %cst_43 [1] : vector<8x8xf32> to vector<8xf32>
      %95 = vector.shape_cast %94 : vector<8xf32> to vector<8x1xf32>
      %96 = tpu.reciprocal %95 {approx = true} : vector<8x1xf32> -> vector<8x1xf32>
      %97 = vector.broadcast %96 : vector<8x1xf32> to vector<8x8xf32>
      %98 = arith.mulf %93, %97 : vector<8x8xf32>
      %99 = arith.truncf %98 : vector<8x8xf32> to vector<8x8xbf16>
      %cst_44 = arith.constant dense<0.000000e+00> : vector<8x8xf32>
      %100 = tpu.matmul %99, %87, %cst_44 {dimension_numbers = #tpu.dot_dimension_numbers<[1], [0], [0], [1], [0, 0, 1, 1], [], []>} : vector<8x8xbf16>, vector<8x8xbf16>, vector<8x8xf32> -> vector<8x8xf32>
      %101 = arith.truncf %100 : vector<8x8xf32> to vector<8x8xbf16>
      %c0_45 = arith.constant 0 : index
      %c8 = arith.constant 8 : index
      %102 = vector.load %arg16[%c0_45, %c8] : memref<8x32xbf16, #tpu.memory_space<vmem>>, vector<8x8xbf16>
      tpu.vector_store %arg16[%c0_45, %c8], %101 {strides = array<i32>} : memref<8x32xbf16, #tpu.memory_space<vmem>>, vector<8x8xbf16>,
      %103 = vector.extract_strided_slice %66 {offsets = [0, 16], sizes = [8, 8], strides = [1, 1]} : vector<8x96xbf16> to vector<8x8xbf16>
      %104 = vector.extract_strided_slice %66 {offsets = [0, 48], sizes = [8, 8], strides = [1, 1]} : vector<8x96xbf16> to vector<8x8xbf16>
      %105 = vector.extract_strided_slice %66 {offsets = [0, 80], sizes = [8, 8], strides = [1, 1]} : vector<8x96xbf16> to vector<8x8xbf16>
      %cst_46 = arith.constant dense<0.000000e+00> : vector<8x8xf32>
      %106 = tpu.matmul %103, %104, %cst_46 {dimension_numbers = #tpu.dot_dimension_numbers<[1], [1], [0], [0], [0, 0, 1, 0], [], []>} : vector<8x8xbf16>, vector<8x8xbf16>, vector<8x8xf32> -> vector<8x8xf32>
      %cst_47 = arith.constant dense<0xFF800000> : vector<8xf32>
      %107 = vector.multi_reduction <maximumf>, %106, %cst_47 [1] : vector<8x8xf32> to vector<8xf32>
      %108 = vector.shape_cast %107 : vector<8xf32> to vector<8x1xf32>
      %109 = vector.broadcast %108 : vector<8x1xf32> to vector<8x8xf32>
      %110 = arith.subf %106, %109 : vector<8x8xf32>
      %111 = math.exp %110 : vector<8x8xf32>
      %cst_48 = arith.constant dense<0.000000e+00> : vector<8xf32>
      %112 = vector.multi_reduction <add>, %111, %cst_48 [1] : vector<8x8xf32> to vector<8xf32>
      %113 = vector.shape_cast %112 : vector<8xf32> to vector<8x1xf32>
      %114 = tpu.reciprocal %113 {approx = true} : vector<8x1xf32> -> vector<8x1xf32>
      %115 = vector.broadcast %114 : vector<8x1xf32> to vector<8x8xf32>
      %116 = arith.mulf %111, %115 : vector<8x8xf32>
      %117 = arith.truncf %116 : vector<8x8xf32> to vector<8x8xbf16>
      %cst_49 = arith.constant dense<0.000000e+00> : vector<8x8xf32>
      %118 = tpu.matmul %117, %105, %cst_49 {dimension_numbers = #tpu.dot_dimension_numbers<[1], [0], [0], [1], [0, 0, 1, 1], [], []>} : vector<8x8xbf16>, vector<8x8xbf16>, vector<8x8xf32> -> vector<8x8xf32>
      %119 = arith.truncf %118 : vector<8x8xf32> to vector<8x8xbf16>
      %c0_50 = arith.constant 0 : index
      %c16 = arith.constant 16 : index
      %120 = vector.load %arg16[%c0_50, %c16] : memref<8x32xbf16, #tpu.memory_space<vmem>>, vector<8x8xbf16>
      tpu.vector_store %arg16[%c0_50, %c16], %119 {strides = array<i32>} : memref<8x32xbf16, #tpu.memory_space<vmem>>, vector<8x8xbf16>,
      %121 = vector.extract_strided_slice %66 {offsets = [0, 24], sizes = [8, 8], strides = [1, 1]} : vector<8x96xbf16> to vector<8x8xbf16>
      %122 = vector.extract_strided_slice %66 {offsets = [0, 56], sizes = [8, 8], strides = [1, 1]} : vector<8x96xbf16> to vector<8x8xbf16>
      %123 = vector.extract_strided_slice %66 {offsets = [0, 88], sizes = [8, 8], strides = [1, 1]} : vector<8x96xbf16> to vector<8x8xbf16>
      %cst_51 = arith.constant dense<0.000000e+00> : vector<8x8xf32>
      %124 = tpu.matmul %121, %122, %cst_51 {dimension_numbers = #tpu.dot_dimension_numbers<[1], [1], [0], [0], [0, 0, 1, 0], [], []>} : vector<8x8xbf16>, vector<8x8xbf16>, vector<8x8xf32> -> vector<8x8xf32>
      %cst_52 = arith.constant dense<0xFF800000> : vector<8xf32>
      %125 = vector.multi_reduction <maximumf>, %124, %cst_52 [1] : vector<8x8xf32> to vector<8xf32>
      %126 = vector.shape_cast %125 : vector<8xf32> to vector<8x1xf32>
      %127 = vector.broadcast %126 : vector<8x1xf32> to vector<8x8xf32>
      %128 = arith.subf %124, %127 : vector<8x8xf32>
      %129 = math.exp %128 : vector<8x8xf32>
      %cst_53 = arith.constant dense<0.000000e+00> : vector<8xf32>
      %130 = vector.multi_reduction <add>, %129, %cst_53 [1] : vector<8x8xf32> to vector<8xf32>
      %131 = vector.shape_cast %130 : vector<8xf32> to vector<8x1xf32>
      %132 = tpu.reciprocal %131 {approx = true} : vector<8x1xf32> -> vector<8x1xf32>
      %133 = vector.broadcast %132 : vector<8x1xf32> to vector<8x8xf32>
      %134 = arith.mulf %129, %133 : vector<8x8xf32>
      %135 = arith.truncf %134 : vector<8x8xf32> to vector<8x8xbf16>
      %cst_54 = arith.constant dense<0.000000e+00> : vector<8x8xf32>
      %136 = tpu.matmul %135, %123, %cst_54 {dimension_numbers = #tpu.dot_dimension_numbers<[1], [0], [0], [1], [0, 0, 1, 1], [], []>} : vector<8x8xbf16>, vector<8x8xbf16>, vector<8x8xf32> -> vector<8x8xf32>
      %137 = arith.truncf %136 : vector<8x8xf32> to vector<8x8xbf16>
      %c0_55 = arith.constant 0 : index
      %c24 = arith.constant 24 : index
      %138 = vector.load %arg16[%c0_55, %c24] : memref<8x32xbf16, #tpu.memory_space<vmem>>, vector<8x8xbf16>
      tpu.vector_store %arg16[%c0_55, %c24], %137 {strides = array<i32>} : memref<8x32xbf16, #tpu.memory_space<vmem>>, vector<8x8xbf16>,
      %c0_56 = arith.constant 0 : index
      %c0_57 = arith.constant 0 : index
      %139 = vector.load %arg16[%c0_56, %c0_57] : memref<8x32xbf16, #tpu.memory_space<vmem>>, vector<8x32xbf16>
      %c0_58 = arith.constant 0 : index
      %c0_59 = arith.constant 0 : index
      %140 = vector.load %arg7[%c0_58, %c0_59] : memref<32x32xbf16, #tpu.memory_space<vmem>>, vector<32x32xbf16>
      %cst_60 = arith.constant dense<0.000000e+00> : vector<8x32xf32>
      %141 = tpu.matmul %139, %140, %cst_60 {dimension_numbers = #tpu.dot_dimension_numbers<[1], [0], [0], [1], [0, 0, 1, 1], [], []>} : vector<8x32xbf16>, vector<32x32xbf16>, vector<8x32xf32> -> vector<8x32xf32>
      %c0_61 = arith.constant 0 : index
      %c0_62 = arith.constant 0 : index
      %142 = vector.load %arg8[%c0_61, %c0_62] : memref<1x32xf32, #tpu.memory_space<vmem>>, vector<1x32xf32>
      %143 = vector.shape_cast %142 : vector<1x32xf32> to vector<32xf32>
      %144 = vector.shape_cast %143 : vector<32xf32> to vector<1x32xf32>
      %145 = vector.broadcast %144 : vector<1x32xf32> to vector<8x32xf32>
      %146 = arith.addf %141, %145 : vector<8x32xf32>
      %147 = arith.addf %29, %146 : vector<8x32xf32>
      %c0_63 = arith.constant 0 : index
      %c0_64 = arith.constant 0 : index
      %148 = vector.load %arg9[%c0_63, %c0_64] : memref<1x32xf32, #tpu.memory_space<vmem>>, vector<1x32xf32>
      %149 = vector.shape_cast %148 : vector<1x32xf32> to vector<32xf32>
      %c0_65 = arith.constant 0 : index
      %c0_66 = arith.constant 0 : index
      %150 = vector.load %arg10[%c0_65, %c0_66] : memref<1x32xf32, #tpu.memory_space<vmem>>, vector<1x32xf32>
      %151 = vector.shape_cast %150 : vector<1x32xf32> to vector<32xf32>
      %cst_67 = arith.constant dense<0.000000e+00> : vector<8xf32>
      %152 = vector.multi_reduction <add>, %147, %cst_67 [1] : vector<8x32xf32> to vector<8xf32>
      %153 = vector.shape_cast %152 : vector<8xf32> to vector<8x1xf32>
      %cst_68 = arith.constant 3.200000e+01 : f32
      %154 = vector.broadcast %cst_68 : f32 to vector<8x1xf32>
      %155 = arith.divf %153, %154 : vector<8x1xf32>
      %156 = vector.broadcast %155 : vector<8x1xf32> to vector<8x32xf32>
      %157 = arith.subf %147, %156 : vector<8x32xf32>
      %158 = arith.mulf %157, %157 : vector<8x32xf32>
      %cst_69 = arith.constant dense<0.000000e+00> : vector<8xf32>
      %159 = vector.multi_reduction <add>, %158, %cst_69 [1] : vector<8x32xf32> to vector<8xf32>
      %160 = vector.shape_cast %159 : vector<8xf32> to vector<8x1xf32>
      %cst_70 = arith.constant 3.200000e+01 : f32
      %161 = vector.broadcast %cst_70 : f32 to vector<8x1xf32>
      %162 = arith.divf %160, %161 : vector<8x1xf32>
      %163 = vector.broadcast %155 : vector<8x1xf32> to vector<8x32xf32>
      %164 = arith.subf %147, %163 : vector<8x32xf32>
      %cst_71 = arith.constant 9.99999974E-6 : f32
      %165 = vector.broadcast %cst_71 : f32 to vector<8x1xf32>
      %166 = arith.addf %162, %165 : vector<8x1xf32>
      %167 = math.rsqrt %166 : vector<8x1xf32>
      %168 = vector.broadcast %167 : vector<8x1xf32> to vector<8x32xf32>
      %169 = arith.mulf %164, %168 : vector<8x32xf32>
      %170 = vector.shape_cast %149 : vector<32xf32> to vector<1x32xf32>
      %171 = vector.broadcast %170 : vector<1x32xf32> to vector<8x32xf32>
      %172 = arith.mulf %169, %171 : vector<8x32xf32>
      %173 = vector.shape_cast %151 : vector<32xf32> to vector<1x32xf32>
      %174 = vector.broadcast %173 : vector<1x32xf32> to vector<8x32xf32>
      %175 = arith.addf %172, %174 : vector<8x32xf32>
      %176 = arith.truncf %175 : vector<8x32xf32> to vector<8x32xbf16>
      %c0_72 = arith.constant 0 : index
      %c0_73 = arith.constant 0 : index
      %177 = vector.load %arg17[%c0_72, %c0_73] : memref<8x32xbf16, #tpu.memory_space<vmem>>, vector<8x32xbf16>
      tpu.vector_store %arg17[%c0_72, %c0_73], %176 {strides = array<i32>} : memref<8x32xbf16, #tpu.memory_space<vmem>>, vector<8x32xbf16>,
      %c0_74 = arith.constant 0 : index
      %c0_75 = arith.constant 0 : index
      %178 = vector.load %arg14[%c0_74, %c0_75] : memref<1x32xf32, #tpu.memory_space<vmem>>, vector<1x32xf32>
      %179 = vector.shape_cast %178 : vector<1x32xf32> to vector<32xf32>
      %180 = vector.shape_cast %179 : vector<32xf32> to vector<1x32xf32>
      %181 = vector.broadcast %180 : vector<1x32xf32> to vector<8x32xf32>
      %182 = arith.addf %147, %181 : vector<8x32xf32>
      %c0_76 = arith.constant 0 : index
      %c0_77 = arith.constant 0 : index
      %c0_78 = arith.constant 0 : index
      %183 = vector.load %arg15[%c0_76, %c0_77, %c0_78] : memref<1x8x32xf32, #tpu.memory_space<vmem>>, vector<1x8x32xf32>
      %184 = vector.shape_cast %183 : vector<1x8x32xf32> to vector<8x32xf32>
      %185 = vector.shape_cast %182 : vector<8x32xf32> to vector<1x8x32xf32>
      tpu.vector_store %arg15[%c0_76, %c0_77, %c0_78], %185 {strides = array<i32>} : memref<1x8x32xf32, #tpu.memory_space<vmem>>, vector<1x8x32xf32>,
    } else {
    }
    %c0 = arith.constant 0 : index
    %c0_1 = arith.constant 0 : index
    %3 = vector.load %arg17[%c0, %c0_1] : memref<8x32xbf16, #tpu.memory_space<vmem>>, vector<8x32xbf16>
    %c0_2 = arith.constant 0 : index
    %c0_3 = arith.constant 0 : index
    %4 = vector.load %arg11[%c0_2, %c0_3] : memref<32x128xbf16, #tpu.memory_space<vmem>>, vector<32x128xbf16>
    %cst = arith.constant dense<0.000000e+00> : vector<8x128xf32>
    %5 = tpu.matmul %3, %4, %cst {dimension_numbers = #tpu.dot_dimension_numbers<[1], [0], [0], [1], [0, 0, 1, 1], [], []>} : vector<8x32xbf16>, vector<32x128xbf16>, vector<8x128xf32> -> vector<8x128xf32>
    %c0_4 = arith.constant 0 : index
    %c0_5 = arith.constant 0 : index
    %6 = vector.load %arg12[%c0_4, %c0_5] : memref<1x128xf32, #tpu.memory_space<vmem>>, vector<1x128xf32>
    %7 = vector.shape_cast %6 : vector<1x128xf32> to vector<128xf32>
    %8 = vector.shape_cast %7 : vector<128xf32> to vector<1x128xf32>
    %9 = vector.broadcast %8 : vector<1x128xf32> to vector<8x128xf32>
    %10 = arith.addf %5, %9 : vector<8x128xf32>
    %cst_6 = arith.constant 5.000000e-01 : f32
    %11 = vector.broadcast %cst_6 : f32 to vector<8x128xf32>
    %12 = arith.mulf %11, %10 : vector<8x128xf32>
    %cst_7 = arith.constant 0.707106769 : f32
    %13 = vector.broadcast %cst_7 : f32 to vector<8x128xf32>
    %14 = arith.mulf %10, %13 : vector<8x128xf32>
    %15 = math.erf %14 : vector<8x128xf32>
    %cst_8 = arith.constant 1.000000e+00 : f32
    %16 = vector.broadcast %cst_8 : f32 to vector<8x128xf32>
    %17 = arith.addf %16, %15 : vector<8x128xf32>
    %18 = arith.mulf %12, %17 : vector<8x128xf32>
    %19 = arith.truncf %18 : vector<8x128xf32> to vector<8x128xbf16>
    %c0_9 = arith.constant 0 : index
    %c0_10 = arith.constant 0 : index
    %c0_11 = arith.constant 0 : index
    %20 = vector.load %arg15[%c0_9, %c0_10, %c0_11] : memref<1x8x32xf32, #tpu.memory_space<vmem>>, vector<1x8x32xf32>
    %21 = vector.shape_cast %20 : vector<1x8x32xf32> to vector<8x32xf32>
    %c0_12 = arith.constant 0 : index
    %c0_13 = arith.constant 0 : index
    %22 = vector.load %arg13[%c0_12, %c0_13] : memref<128x32xbf16, #tpu.memory_space<vmem>>, vector<128x32xbf16>
    %cst_14 = arith.constant dense<0.000000e+00> : vector<8x32xf32>
    %23 = tpu.matmul %19, %22, %cst_14 {dimension_numbers = #tpu.dot_dimension_numbers<[1], [0], [0], [1], [0, 0, 1, 1], [], []>} : vector<8x128xbf16>, vector<128x32xbf16>, vector<8x32xf32> -> vector<8x32xf32>
    %24 = arith.addf %21, %23 : vector<8x32xf32>
    %c0_15 = arith.constant 0 : index
    %c0_16 = arith.constant 0 : index
    %c0_17 = arith.constant 0 : index
    %25 = vector.load %arg15[%c0_15, %c0_16, %c0_17] : memref<1x8x32xf32, #tpu.memory_space<vmem>>, vector<1x8x32xf32>
    %26 = vector.shape_cast %25 : vector<1x8x32xf32> to vector<8x32xf32>
    %27 = vector.shape_cast %24 : vector<8x32xf32> to vector<1x8x32xf32>
    tpu.vector_store %arg15[%c0_15, %c0_16, %c0_17], %27 {strides = array<i32>} : memref<1x8x32xf32, #tpu.memory_space<vmem>>, vector<1x8x32xf32>,
    return
  }
  func.func @transform_0(%arg0: i32, %arg1: i32) -> (i32, i32, i32) {
    %c0_i32 = arith.constant 0 : i32
    %c0_i32_0 = arith.constant 0 : i32
    %c0_i32_1 = arith.constant 0 : i32
    return %arg0, %c0_i32, %c0_i32_0 : i32, i32, i32
  }
  func.func @transform_1(%arg0: i32, %arg1: i32) -> (i32, i32) {
    %c0_i32 = arith.constant 0 : i32
    %c0_i32_0 = arith.constant 0 : i32
    %c0_i32_1 = arith.constant 0 : i32
    return %c0_i32, %c0_i32_0 : i32, i32
  }
  func.func @transform_2(%arg0: i32, %arg1: i32) -> (i32, i32) {
    %c0_i32 = arith.constant 0 : i32
    %c0_i32_0 = arith.constant 0 : i32
    %c0_i32_1 = arith.constant 0 : i32
    return %c0_i32, %c0_i32_0 : i32, i32
  }
  func.func @transform_3(%arg0: i32, %arg1: i32) -> (i32, i32) {
    %c0_i32 = arith.constant 0 : i32
    %c0_i32_0 = arith.constant 0 : i32
    %c0_i32_1 = arith.constant 0 : i32
    return %c0_i32, %c0_i32_0 : i32, i32
  }
  func.func @transform_4(%arg0: i32, %arg1: i32) -> (i32, i32) {
    %c0_i32 = arith.constant 0 : i32
    %c0_i32_0 = arith.constant 0 : i32
    %c0_i32_1 = arith.constant 0 : i32
    return %c0_i32, %c0_i32_0 : i32, i32
  }
  func.func @transform_5(%arg0: i32, %arg1: i32) -> (i32, i32) {
    %c0_i32 = arith.constant 0 : i32
    %c0_i32_0 = arith.constant 0 : i32
    %c0_i32_1 = arith.constant 0 : i32
    return %c0_i32, %c0_i32_0 : i32, i32
  }
  func.func @transform_6(%arg0: i32, %arg1: i32) -> (i32, i32) {
    %c0_i32 = arith.constant 0 : i32
    %c0_i32_0 = arith.constant 0 : i32
    %c0_i32_1 = arith.constant 0 : i32
    return %c0_i32, %c0_i32_0 : i32, i32
  }
  func.func @transform_7(%arg0: i32, %arg1: i32) -> (i32, i32) {
    %c0_i32 = arith.constant 0 : i32
    %c0_i32_0 = arith.constant 0 : i32
    %c0_i32_1 = arith.constant 0 : i32
    return %c0_i32, %c0_i32_0 : i32, i32
  }
  func.func @transform_8(%arg0: i32, %arg1: i32) -> (i32, i32) {
    %c0_i32 = arith.constant 0 : i32
    %c0_i32_0 = arith.constant 0 : i32
    %c0_i32_1 = arith.constant 0 : i32
    return %c0_i32, %c0_i32_0 : i32, i32
  }
  func.func @transform_9(%arg0: i32, %arg1: i32) -> (i32, i32) {
    %c0_i32 = arith.constant 0 : i32
    %c0_i32_0 = arith.constant 0 : i32
    return %c0_i32, %arg1 : i32, i32
  }
  func.func @transform_10(%arg0: i32, %arg1: i32) -> (i32, i32) {
    %c0_i32 = arith.constant 0 : i32
    %c0_i32_0 = arith.constant 0 : i32
    return %c0_i32, %arg1 : i32, i32
  }
  func.func @transform_11(%arg0: i32, %arg1: i32) -> (i32, i32) {
    %c0_i32 = arith.constant 0 : i32
    %c0_i32_0 = arith.constant 0 : i32
    return %arg1, %c0_i32 : i32, i32
  }
  func.func @transform_12(%arg0: i32, %arg1: i32) -> (i32, i32) {
    %c0_i32 = arith.constant 0 : i32
    %c0_i32_0 = arith.constant 0 : i32
    %c0_i32_1 = arith.constant 0 : i32
    return %c0_i32, %c0_i32_0 : i32, i32
  }
  func.func @transform_13(%arg0: i32, %arg1: i32) -> (i32, i32, i32) {
    %c0_i32 = arith.constant 0 : i32
    %c0_i32_0 = arith.constant 0 : i32
    %c0_i32_1 = arith.constant 0 : i32
    return %arg0, %c0_i32, %c0_i32_0 : i32, i32, i32
  }
}

</mosaic_0001>

<llo_original>
// kernel: squeeze.17
$region0: #{squeeze.17}
  %s0 = inlined_call_operand.vmem [shape: f32[4,8], index: 0, kind: input, shape index: {}]
  %s1 = inlined_call_operand.vmem [shape: f32[32], index: 1, kind: output, shape index: {}]
  $region1: #{squeeze.17} parent=0
    #allocation0 [shape = 'u8[4096]{0}', space=vmem, size = 0x1000, scoped, tag = 'scoped mem for output reshape']
    #allocation1 [shape = 'u8[4096]{0}', space=vmem, size = 0x1000, scoped, tag = 'scoped mem for input reshape']
    %s3 = ssub.s32 16, 1
    %v4 = vld [vmem:[%s0] sm:%s3]
    %5 = vst [vmem:[#allocation1] sm:%s3] %v4
    %v6 = vld [vmem:[#allocation1] sm:$0x1]
    %vm7 = vcmask 64512
    %8 = vst.msk [vmem:[#allocation0] sm:$0x1] %vm7, %v6
    %s9 = scalar_lea.vmem [#allocation1], 3
    %v10 = vld [vmem:[%s9] sm:$0x1]
    %11 = vrot.lane.b32.xlu0 %v10, 24
    %v12 = vpop.permute.xlu0 %11
    %vm13 = vcmask 261312
    %14 = vst.msk [vmem:[#allocation0] sm:$0x1] %vm13, %v12
    %s15 = scalar_lea.vmem [#allocation1], 2
    %v16 = vld [vmem:[%s15] sm:$0x1]
    %17 = vrot.lane.b32.xlu0 %v16, 16
    %v18 = vpop.permute.xlu0 %17
    %vm19 = vcmask 195712
    %20 = vst.msk [vmem:[#allocation0] sm:$0x1] %vm19, %v18
    %s21 = scalar_lea.vmem [#allocation1], 1
    %v22 = vld [vmem:[%s21] sm:$0x1]
    %23 = vrot.lane.b32.xlu0 %v22, 8
    %v24 = vpop.permute.xlu0 %23
    %vm25 = vcmask 130112
    %26 = vst.msk [vmem:[#allocation0] sm:$0x1] %vm25, %v24
    %s28 = ssub.s32 2, 1
    %v29 = vld [vmem:[#allocation0] sm:%s28]
    %s31 = ssub.s32 2, 1
    %32 = vst [vmem:[%s1] sm:%s31] %v29

// kernel: transformer_forward.2
$region0: #{transformer_forward.2}
  #allocation0 [shape = 'u32[]', space=smem, size = 0x4, offset = 0x4, fixed_abs, tag = 'smem constant byte address 0x4 - core index']
  #allocation1 [shape = 'u32[72,128]{1,0:T(1,128)}', space=vmem, size = 0x9000, scoped, tag = 'internal scratch']
  #allocation2 [shape = 'bf16[8,32]{1,0:T(8,128)(2,1)}', space=vmem, size = 0x800, scoped, tag = 'scratch operand']
  #allocation3 [shape = 'bf16[8,32]{1,0:T(8,128)(2,1)}', space=vmem, size = 0x800, scoped, tag = 'scratch operand']
  %s0 = inlined_call_operand.vmem [shape: f32[2,8,32], index: 0, kind: input, shape index: {}]
  %s1 = inlined_call_operand.vmem [shape: f32[1,32], index: 1, kind: input, shape index: {}]
  %s2 = inlined_call_operand.vmem [shape: f32[1,32], index: 2, kind: input, shape index: {}]
  %s3 = inlined_call_operand.vmem [shape: bf16[32,96], index: 3, kind: input, shape index: {}]
  %s4 = inlined_call_operand.vmem [shape: f32[1,96], index: 4, kind: input, shape index: {}]
  %s5 = inlined_call_operand.vmem [shape: bf16[32,32], index: 5, kind: input, shape index: {}]
  %s6 = inlined_call_operand.vmem [shape: f32[1,32], index: 6, kind: input, shape index: {}]
  %s7 = inlined_call_operand.vmem [shape: f32[1,32], index: 7, kind: input, shape index: {}]
  %s8 = inlined_call_operand.vmem [shape: f32[1,32], index: 8, kind: input, shape index: {}]
  %s9 = inlined_call_operand.vmem [shape: bf16[32,128], index: 9, kind: input, shape index: {}]
  %s10 = inlined_call_operand.vmem [shape: f32[1,128], index: 10, kind: input, shape index: {}]
  %s11 = inlined_call_operand.vmem [shape: bf16[128,32], index: 11, kind: input, shape index: {}]
  %s12 = inlined_call_operand.vmem [shape: f32[1,32], index: 12, kind: input, shape index: {}]
  %s13 = inlined_call_operand.vmem [shape: f32[2,8,32], index: 13, kind: output, shape index: {}]
  %s14 = sld [smem:[#allocation0]]
  $region89: #{transformer_forward.2} parent=0
    _
  %s16 = ssub.s32 1, %s14
  %s17 = scalar_select 0, %s16, %s14
  loop: start=0, step=1, limit=4
  $region2: #{transformer_forward.2} parent=0 // loop_pre_header
    _
  $region3: #{transformer_forward.2} parent=0 // loop_header
    %s19 = sphi 0, %s23
    %p20 = scmp.ge.s32.totalorder %s19, 4
    %s26 = sphi 0, %s38
    %s27 = sphi 0, %s34
    %s28 = sphi 0, %s26
    %s29 = sphi 0, %s27
    %s30 = sphi 0, %s28
    %s31 = sphi 0, %s29
    %s41 = sphi 0, %s43
    %s44 = sphi 0, %s41
    %s45 = sphi 0, %s44
    %s61 = sphi 0, %s45
    %s65 = sphi 0, %s65
    %s67 = sphi 0, %s65
    %s68 = sphi 0, %s67
    %s82 = sphi 0, %s68
    %s86 = sphi 0, %s86
    %s88 = sphi 0, %s86
    %s89 = sphi 0, %s88
    %s103 = sphi 0, %s89
    %s107 = sphi 0, %s107
    %s109 = sphi 0, %s107
    %s110 = sphi 0, %s109
    %s124 = sphi 0, %s110
    %s128 = sphi 0, %s128
    %s130 = sphi 0, %s128
    %s131 = sphi 0, %s130
    %s145 = sphi 0, %s131
    %s149 = sphi 0, %s149
    %s151 = sphi 0, %s149
    %s152 = sphi 0, %s151
    %s166 = sphi 0, %s152
    %s170 = sphi 0, %s170
    %s172 = sphi 0, %s170
    %s173 = sphi 0, %s172
    %s187 = sphi 0, %s173
    %s191 = sphi 0, %s191
    %s193 = sphi 0, %s191
    %s194 = sphi 0, %s193
    %s208 = sphi 0, %s194
    %s212 = sphi 0, %s212
    %s214 = sphi 0, %s212
    %s215 = sphi 0, %s214
    %s229 = sphi 0, %s215
    %s235 = sphi 0, %s237
    %s238 = sphi 0, %s235
    %s239 = sphi 0, %s238
    %s255 = sphi 0, %s239
    %s261 = sphi 0, %s263
    %s264 = sphi 0, %s261
    %s265 = sphi 0, %s264
    %s281 = sphi 0, %s265
    %s287 = sphi 0, %s289
    %s290 = sphi 0, %s287
    %s291 = sphi 0, %s290
    %s307 = sphi 0, %s291
    %s311 = sphi 0, %s311
    %s313 = sphi 0, %s311
    %s314 = sphi 0, %s313
    %s328 = sphi 0, %s314
    %s334 = sphi 0, %s336
    %s337 = sphi 0, %s334
    %s338 = sphi 0, %s337
    %s354 = sphi 0, %s338
  $region4: #{transformer_forward.2} parent=0 // loop_header_branch
    %22 = sbr.rel (%p20) target = $region8
  $region5: #{transformer_forward.2} parent=0 // loop_body
    %s24 = ssub.s32 %s19, 1
    %s25 = ssub.s32 %s19, 2
    %s32 = sadd.s32 1, %s27
    %p33 = scmp.ge.s32.totalorder %s32, 1
    %s34 = scalar_select %p33, 0, %s32
    %s35 = sadd.s32 1, %s26
    %s36 = scalar_select %p33, %s35, %s26
    %p37 = scmp.ge.s32.totalorder %s36, 2
    %s38 = scalar_select %p37, 0, %s36
    %s39 = ssub.s32 %s26, %s38
    %p40 = scmp.eq.s32.totalorder %s39, 0
    %s42 = sadd.s32 %s41, 1
    %s43 = scalar_select %p40, %s41, %s42
    %p46 = pneg %p40
    %p47 = scmp.eq.s32.totalorder %s19, 1
    %p48 = por %p46, %p47
    %p49 = scmp.ne.s32.totalorder %s41, %s44
    %p50 = scmp.eq.s32.totalorder %s19, 0
    %p51 = por %p49, %p50
    %p52 = scmp.ne.s32.totalorder %s41, %s44
    %p53 = scmp.eq.s32.totalorder %s24, 1
    %p54 = por %p52, %p53
    %p55 = scmp.ne.s32.totalorder %s44, %s45
    %p56 = scmp.eq.s32.totalorder %s24, 0
    %p57 = por %p55, %p56
    %p58 = scmp.ne.s32.totalorder %s44, %s45
    %p59 = scmp.eq.s32.totalorder %s25, 1
    %p60 = por %p58, %p59
    %p62 = scmp.ne.s32.totalorder %s45, %s61
    %p63 = scmp.eq.s32.totalorder %s25, 0
    %p64 = por %p62, %p63
    %s66 = sadd.s32 %s65, 1
    %p69 = scmp.eq.s32.totalorder %s19, 1
    %p70 = scmp.ne.s32.totalorder %s65, %s67
    %p71 = scmp.eq.s32.totalorder %s19, 0
    %p72 = por %p70, %p71
    %p73 = scmp.ne.s32.totalorder %s65, %s67
    %p74 = scmp.eq.s32.totalorder %s24, 1
    %p75 = por %p73, %p74
    %p76 = scmp.ne.s32.totalorder %s67, %s68
    %p77 = scmp.eq.s32.totalorder %s24, 0
    %p78 = por %p76, %p77
    %p79 = scmp.ne.s32.totalorder %s67, %s68
    %p80 = scmp.eq.s32.totalorder %s25, 1
    %p81 = por %p79, %p80
    %p83 = scmp.ne.s32.totalorder %s68, %s82
    %p84 = scmp.eq.s32.totalorder %s25, 0
    %p85 = por %p83, %p84
    %s87 = sadd.s32 %s86, 1
    %p90 = scmp.eq.s32.totalorder %s19, 1
    %p91 = scmp.ne.s32.totalorder %s86, %s88
    %p92 = scmp.eq.s32.totalorder %s19, 0
    %p93 = por %p91, %p92
    %p94 = scmp.ne.s32.totalorder %s86, %s88
    %p95 = scmp.eq.s32.totalorder %s24, 1
    %p96 = por %p94, %p95
    %p97 = scmp.ne.s32.totalorder %s88, %s89
    %p98 = scmp.eq.s32.totalorder %s24, 0
    %p99 = por %p97, %p98
    %p100 = scmp.ne.s32.totalorder %s88, %s89
    %p101 = scmp.eq.s32.totalorder %s25, 1
    %p102 = por %p100, %p101
    %p104 = scmp.ne.s32.totalorder %s89, %s103
    %p105 = scmp.eq.s32.totalorder %s25, 0
    %p106 = por %p104, %p105
    %s108 = sadd.s32 %s107, 1
    %p111 = scmp.eq.s32.totalorder %s19, 1
    %p112 = scmp.ne.s32.totalorder %s107, %s109
    %p113 = scmp.eq.s32.totalorder %s19, 0
    %p114 = por %p112, %p113
    %p115 = scmp.ne.s32.totalorder %s107, %s109
    %p116 = scmp.eq.s32.totalorder %s24, 1
    %p117 = por %p115, %p116
    %p118 = scmp.ne.s32.totalorder %s109, %s110
    %p119 = scmp.eq.s32.totalorder %s24, 0
    %p120 = por %p118, %p119
    %p121 = scmp.ne.s32.totalorder %s109, %s110
    %p122 = scmp.eq.s32.totalorder %s25, 1
    %p123 = por %p121, %p122
    %p125 = scmp.ne.s32.totalorder %s110, %s124
    %p126 = scmp.eq.s32.totalorder %s25, 0
    %p127 = por %p125, %p126
    %s129 = sadd.s32 %s128, 1
    %p132 = scmp.eq.s32.totalorder %s19, 1
    %p133 = scmp.ne.s32.totalorder %s128, %s130
    %p134 = scmp.eq.s32.totalorder %s19, 0
    %p135 = por %p133, %p134
    %p136 = scmp.ne.s32.totalorder %s128, %s130
    %p137 = scmp.eq.s32.totalorder %s24, 1
    %p138 = por %p136, %p137
    %p139 = scmp.ne.s32.totalorder %s130, %s131
    %p140 = scmp.eq.s32.totalorder %s24, 0
    %p141 = por %p139, %p140
    %p142 = scmp.ne.s32.totalorder %s130, %s131
    %p143 = scmp.eq.s32.totalorder %s25, 1
    %p144 = por %p142, %p143
    %p146 = scmp.ne.s32.totalorder %s131, %s145
    %p147 = scmp.eq.s32.totalorder %s25, 0
    %p148 = por %p146, %p147
    %s150 = sadd.s32 %s149, 1
    %p153 = scmp.eq.s32.totalorder %s19, 1
    %p154 = scmp.ne.s32.totalorder %s149, %s151
    %p155 = scmp.eq.s32.totalorder %s19, 0
    %p156 = por %p154, %p155
    %p157 = scmp.ne.s32.totalorder %s149, %s151
    %p158 = scmp.eq.s32.totalorder %s24, 1
    %p159 = por %p157, %p158
    %p160 = scmp.ne.s32.totalorder %s151, %s152
    %p161 = scmp.eq.s32.totalorder %s24, 0
    %p162 = por %p160, %p161
    %p163 = scmp.ne.s32.totalorder %s151, %s152
    %p164 = scmp.eq.s32.totalorder %s25, 1
    %p165 = por %p163, %p164
    %p167 = scmp.ne.s32.totalorder %s152, %s166
    %p168 = scmp.eq.s32.totalorder %s25, 0
    %p169 = por %p167, %p168
    %s171 = sadd.s32 %s170, 1
    %p174 = scmp.eq.s32.totalorder %s19, 1
    %p175 = scmp.ne.s32.totalorder %s170, %s172
    %p176 = scmp.eq.s32.totalorder %s19, 0
    %p177 = por %p175, %p176
    %p178 = scmp.ne.s32.totalorder %s170, %s172
    %p179 = scmp.eq.s32.totalorder %s24, 1
    %p180 = por %p178, %p179
    %p181 = scmp.ne.s32.totalorder %s172, %s173
    %p182 = scmp.eq.s32.totalorder %s24, 0
    %p183 = por %p181, %p182
    %p184 = scmp.ne.s32.totalorder %s172, %s173
    %p185 = scmp.eq.s32.totalorder %s25, 1
    %p186 = por %p184, %p185
    %p188 = scmp.ne.s32.totalorder %s173, %s187
    %p189 = scmp.eq.s32.totalorder %s25, 0
    %p190 = por %p188, %p189
    %s192 = sadd.s32 %s191, 1
    %p195 = scmp.eq.s32.totalorder %s19, 1
    %p196 = scmp.ne.s32.totalorder %s191, %s193
    %p197 = scmp.eq.s32.totalorder %s19, 0
    %p198 = por %p196, %p197
    %p199 = scmp.ne.s32.totalorder %s191, %s193
    %p200 = scmp.eq.s32.totalorder %s24, 1
    %p201 = por %p199, %p200
    %p202 = scmp.ne.s32.totalorder %s193, %s194
    %p203 = scmp.eq.s32.totalorder %s24, 0
    %p204 = por %p202, %p203
    %p205 = scmp.ne.s32.totalorder %s193, %s194
    %p206 = scmp.eq.s32.totalorder %s25, 1
    %p207 = por %p205, %p206
    %p209 = scmp.ne.s32.totalorder %s194, %s208
    %p210 = scmp.eq.s32.totalorder %s25, 0
    %p211 = por %p209, %p210
    %s213 = sadd.s32 %s212, 1
    %p216 = scmp.eq.s32.totalorder %s19, 1
    %p217 = scmp.ne.s32.totalorder %s212, %s214
    %p218 = scmp.eq.s32.totalorder %s19, 0
    %p219 = por %p217, %p218
    %p220 = scmp.ne.s32.totalorder %s212, %s214
    %p221 = scmp.eq.s32.totalorder %s24, 1
    %p222 = por %p220, %p221
    %p223 = scmp.ne.s32.totalorder %s214, %s215
    %p224 = scmp.eq.s32.totalorder %s24, 0
    %p225 = por %p223, %p224
    %p226 = scmp.ne.s32.totalorder %s214, %s215
    %p227 = scmp.eq.s32.totalorder %s25, 1
    %p228 = por %p226, %p227
    %p230 = scmp.ne.s32.totalorder %s215, %s229
    %p231 = scmp.eq.s32.totalorder %s25, 0
    %p232 = por %p230, %p231
    %s233 = ssub.s32 %s27, %s34
    %p234 = scmp.eq.s32.totalorder %s233, 0
    %s236 = sadd.s32 %s235, 1
    %s237 = scalar_select %p234, %s235, %s236
    %p240 = pneg %p234
    %p241 = scmp.eq.s32.totalorder %s19, 1
    %p242 = por %p240, %p241
    %p243 = scmp.ne.s32.totalorder %s235, %s238
    %p244 = scmp.eq.s32.totalorder %s19, 0
    %p245 = por %p243, %p244
    %p246 = scmp.ne.s32.totalorder %s235, %s238
    %p247 = scmp.eq.s32.totalorder %s24, 1
    %p248 = por %p246, %p247
    %p249 = scmp.ne.s32.totalorder %s238, %s239
    %p250 = scmp.eq.s32.totalorder %s24, 0
    %p251 = por %p249, %p250
    %p252 = scmp.ne.s32.totalorder %s238, %s239
    %p253 = scmp.eq.s32.totalorder %s25, 1
    %p254 = por %p252, %p253
    %p256 = scmp.ne.s32.totalorder %s239, %s255
    %p257 = scmp.eq.s32.totalorder %s25, 0
    %p258 = por %p256, %p257
    %s259 = ssub.s32 %s27, %s34
    %p260 = scmp.eq.s32.totalorder %s259, 0
    %s262 = sadd.s32 %s261, 1
    %s263 = scalar_select %p260, %s261, %s262
    %p266 = pneg %p260
    %p267 = scmp.eq.s32.totalorder %s19, 1
    %p268 = por %p266, %p267
    %p269 = scmp.ne.s32.totalorder %s261, %s264
    %p270 = scmp.eq.s32.totalorder %s19, 0
    %p271 = por %p269, %p270
    %p272 = scmp.ne.s32.totalorder %s261, %s264
    %p273 = scmp.eq.s32.totalorder %s24, 1
    %p274 = por %p272, %p273
    %p275 = scmp.ne.s32.totalorder %s264, %s265
    %p276 = scmp.eq.s32.totalorder %s24, 0
    %p277 = por %p275, %p276
    %p278 = scmp.ne.s32.totalorder %s264, %s265
    %p279 = scmp.eq.s32.totalorder %s25, 1
    %p280 = por %p278, %p279
    %p282 = scmp.ne.s32.totalorder %s265, %s281
    %p283 = scmp.eq.s32.totalorder %s25, 0
    %p284 = por %p282, %p283
    %s285 = ssub.s32 %s27, %s34
    %p286 = scmp.eq.s32.totalorder %s285, 0
    %s288 = sadd.s32 %s287, 1
    %s289 = scalar_select %p286, %s287, %s288
    %p292 = pneg %p286
    %p293 = scmp.eq.s32.totalorder %s19, 1
    %p294 = por %p292, %p293
    %p295 = scmp.ne.s32.totalorder %s287, %s290
    %p296 = scmp.eq.s32.totalorder %s19, 0
    %p297 = por %p295, %p296
    %p298 = scmp.ne.s32.totalorder %s287, %s290
    %p299 = scmp.eq.s32.totalorder %s24, 1
    %p300 = por %p298, %p299
    %p301 = scmp.ne.s32.totalorder %s290, %s291
    %p302 = scmp.eq.s32.totalorder %s24, 0
    %p303 = por %p301, %p302
    %p304 = scmp.ne.s32.totalorder %s290, %s291
    %p305 = scmp.eq.s32.totalorder %s25, 1
    %p306 = por %p304, %p305
    %p308 = scmp.ne.s32.totalorder %s291, %s307
    %p309 = scmp.eq.s32.totalorder %s25, 0
    %p310 = por %p308, %p309
    %s312 = sadd.s32 %s311, 1
    %p315 = scmp.eq.s32.totalorder %s19, 1
    %p316 = scmp.ne.s32.totalorder %s311, %s313
    %p317 = scmp.eq.s32.totalorder %s19, 0
    %p318 = por %p316, %p317
    %p319 = scmp.ne.s32.totalorder %s311, %s313
    %p320 = scmp.eq.s32.totalorder %s24, 1
    %p321 = por %p319, %p320
    %p322 = scmp.ne.s32.totalorder %s313, %s314
    %p323 = scmp.eq.s32.totalorder %s24, 0
    %p324 = por %p322, %p323
    %p325 = scmp.ne.s32.totalorder %s313, %s314
    %p326 = scmp.eq.s32.totalorder %s25, 1
    %p327 = por %p325, %p326
    %p329 = scmp.ne.s32.totalorder %s314, %s328
    %p330 = scmp.eq.s32.totalorder %s25, 0
    %p331 = por %p329, %p330
    %s332 = ssub.s32 %s26, %s38
    %p333 = scmp.eq.s32.totalorder %s332, 0
    %s335 = sadd.s32 %s334, 1
    %s336 = scalar_select %p333, %s334, %s335
    %p339 = pneg %p333
    %p340 = scmp.eq.s32.totalorder %s19, 1
    %p341 = por %p339, %p340
    %p342 = scmp.ne.s32.totalorder %s334, %s337
    %p343 = scmp.eq.s32.totalorder %s19, 0
    %p344 = por %p342, %p343
    %p345 = scmp.ne.s32.totalorder %s334, %s337
    %p346 = scmp.eq.s32.totalorder %s24, 1
    %p347 = por %p345, %p346
    %p348 = scmp.ne.s32.totalorder %s337, %s338
    %p349 = scmp.eq.s32.totalorder %s24, 0
    %p350 = por %p348, %p349
    %p351 = scmp.ne.s32.totalorder %s337, %s338
    %p352 = scmp.eq.s32.totalorder %s25, 1
    %p353 = por %p351, %p352
    %p355 = scmp.ne.s32.totalorder %s338, %s354
    %p356 = scmp.eq.s32.totalorder %s25, 0
    %p357 = por %p355, %p356
    %p358 = scmp.le.s32.totalorder 1, %s19
    %p359 = scmp.lt.s32.totalorder %s19, 3
    %p360 = pnand %p358, %p359
    %p361 = pneg %p360
    // Predicated region
    $region9: #{transformer_forward.2} parent=5 // pred_check
      _
    $region10: #{transformer_forward.2} parent=5 // pred_check_branch
      %363 = sbr.rel (%p360) target = $region12
    $region11: #{transformer_forward.2} parent=5 // pred_region
      %s364 = ssub.s32 %s19, 1
      // Predicated region
      $region13: #{transformer_forward.2} parent=11 // pred_check
        %p365 = pneg %p78
      $region14: #{transformer_forward.2} parent=11 // pred_check_branch
        %367 = sbr.rel (%p365) target = $region16
      $region15: #{transformer_forward.2} parent=11 // pred_region
        _
      $region16: #{transformer_forward.2} parent=11 // pred_fallthru
        _
      // Predicated region
      $region17: #{transformer_forward.2} parent=11 // pred_check
        %p368 = pneg %p99
      $region18: #{transformer_forward.2} parent=11 // pred_check_branch
        %370 = sbr.rel (%p368) target = $region20
      $region19: #{transformer_forward.2} parent=11 // pred_region
        _
      $region20: #{transformer_forward.2} parent=11 // pred_fallthru
        _
      // Predicated region
      $region21: #{transformer_forward.2} parent=11 // pred_check
        %p371 = pneg %p120
      $region22: #{transformer_forward.2} parent=11 // pred_check_branch
        %373 = sbr.rel (%p371) target = $region24
      $region23: #{transformer_forward.2} parent=11 // pred_region
        _
      $region24: #{transformer_forward.2} parent=11 // pred_fallthru
        _
      // Predicated region
      $region25: #{transformer_forward.2} parent=11 // pred_check
        %p374 = pneg %p141
      $region26: #{transformer_forward.2} parent=11 // pred_check_branch
        %376 = sbr.rel (%p374) target = $region28
      $region27: #{transformer_forward.2} parent=11 // pred_region
        _
      $region28: #{transformer_forward.2} parent=11 // pred_fallthru
        _
      // Predicated region
      $region29: #{transformer_forward.2} parent=11 // pred_check
        %p377 = pneg %p162
      $region30: #{transformer_forward.2} parent=11 // pred_check_branch
        %379 = sbr.rel (%p377) target = $region32
      $region31: #{transformer_forward.2} parent=11 // pred_region
        _
      $region32: #{transformer_forward.2} parent=11 // pred_fallthru
        _
      // Predicated region
      $region33: #{transformer_forward.2} parent=11 // pred_check
        %p380 = pneg %p183
      $region34: #{transformer_forward.2} parent=11 // pred_check_branch
        %382 = sbr.rel (%p380) target = $region36
      $region35: #{transformer_forward.2} parent=11 // pred_region
        _
      $region36: #{transformer_forward.2} parent=11 // pred_fallthru
        _
      // Predicated region
      $region37: #{transformer_forward.2} parent=11 // pred_check
        %p383 = pneg %p204
      $region38: #{transformer_forward.2} parent=11 // pred_check_branch
        %385 = sbr.rel (%p383) target = $region40
      $region39: #{transformer_forward.2} parent=11 // pred_region
        _
      $region40: #{transformer_forward.2} parent=11 // pred_fallthru
        _
      // Predicated region
      $region41: #{transformer_forward.2} parent=11 // pred_check
        %p386 = pneg %p225
      $region42: #{transformer_forward.2} parent=11 // pred_check_branch
        %388 = sbr.rel (%p386) target = $region44
      $region43: #{transformer_forward.2} parent=11 // pred_region
        _
      $region44: #{transformer_forward.2} parent=11 // pred_fallthru
        _
      // Predicated region
      $region45: #{transformer_forward.2} parent=11 // pred_check
        %p389 = pneg %p251
      $region46: #{transformer_forward.2} parent=11 // pred_check_branch
        %391 = sbr.rel (%p389) target = $region48
      $region47: #{transformer_forward.2} parent=11 // pred_region
        %p392 = scmp.lt.s32.totalorder %s29, 0
        %s393 = scalar_select %p392, %s29, 0
        %s394 = smul.addr %s393, 4
        %s395 = scalar_lea.vmem %s9, %s394
      $region48: #{transformer_forward.2} parent=11 // pred_fallthru
        _
      // Predicated region
      $region49: #{transformer_forward.2} parent=11 // pred_check
        %p396 = pneg %p277
      $region50: #{transformer_forward.2} parent=11 // pred_check_branch
        %398 = sbr.rel (%p396) target = $region52
      $region51: #{transformer_forward.2} parent=11 // pred_region
        %p399 = scmp.lt.s32.totalorder %s29, 0
        %s400 = scalar_select %p399, %s29, 0
        %s401 = scalar_lea.vmem %s10, %s400
      $region52: #{transformer_forward.2} parent=11 // pred_fallthru
        _
      // Predicated region
      $region53: #{transformer_forward.2} parent=11 // pred_check
        %p402 = pneg %p303
      $region54: #{transformer_forward.2} parent=11 // pred_check_branch
        %404 = sbr.rel (%p402) target = $region56
      $region55: #{transformer_forward.2} parent=11 // pred_region
        %s405 = smul.u32 16, %s29
        %p406 = scmp.lt.s32.totalorder %s405, 15
        %s407 = scalar_select %p406, %s405, 15
        %s408 = smul.addr %s407, 4
        %s409 = scalar_lea.vmem %s11, %s408
        %s410 = smul.u32 16, %s29
      $region56: #{transformer_forward.2} parent=11 // pred_fallthru
        _
      // Predicated region
      $region57: #{transformer_forward.2} parent=11 // pred_check
        %p411 = pneg %p324
      $region58: #{transformer_forward.2} parent=11 // pred_check_branch
        %413 = sbr.rel (%p411) target = $region60
      $region59: #{transformer_forward.2} parent=11 // pred_region
        _
      $region60: #{transformer_forward.2} parent=11 // pred_fallthru
        _
    $region12: #{transformer_forward.2} parent=5 // pred_fallthru
      _
    %p414 = scmp.lt.s32.totalorder %s19, 2
    // Predicated region
    $region61: #{transformer_forward.2} parent=5 // pred_check
      %p415 = pneg %p414
    $region62: #{transformer_forward.2} parent=5 // pred_check_branch
      %417 = sbr.rel (%p415) target = $region64
    $region63: #{transformer_forward.2} parent=5 // pred_region
      // Predicated region
      $region65: #{transformer_forward.2} parent=63 // pred_check
        %p418 = pneg %p51
      $region66: #{transformer_forward.2} parent=63 // pred_check_branch
        %420 = sbr.rel (%p418) target = $region68
      $region67: #{transformer_forward.2} parent=63 // pred_region
        %p421 = scmp.lt.s32.totalorder %s26, 1
        %s422 = scalar_select %p421, %s26, 1
        %s423 = smul.addr %s422, 8
        %s424 = scalar_lea.vmem %s0, %s423
      $region68: #{transformer_forward.2} parent=63 // pred_fallthru
        _
    $region64: #{transformer_forward.2} parent=5 // pred_fallthru
      _
    %p425 = scmp.le.s32.totalorder 1, %s19
    %p426 = scmp.lt.s32.totalorder %s19, 3
    %p427 = pnand %p425, %p426
    %p428 = pneg %p427
    // Predicated region
    $region69: #{transformer_forward.2} parent=5 // pred_check
      _
    $region70: #{transformer_forward.2} parent=5 // pred_check_branch
      %430 = sbr.rel (%p427) target = $region72
    $region71: #{transformer_forward.2} parent=5 // pred_region
      %s431 = ssub.s32 %s19, 1
      %p432 = scmp.lt.s32.totalorder %s28, 1
      %s433 = scalar_select %p432, %s28, 1
      %s434 = smul.addr %s433, 8
      %s435 = scalar_lea.vmem %s0, %s434
      %p436 = pneg %p57
      %p437 = pneg %p54
      %p438 = pneg %p78
      %p439 = pneg %p75
      %p440 = pneg %p99
      %p441 = pneg %p96
      %p442 = pneg %p120
      %p443 = pneg %p117
      %p444 = pneg %p141
      %p445 = pneg %p138
      %p446 = pneg %p162
      %p447 = pneg %p159
      %p448 = pneg %p183
      %p449 = pneg %p180
      %p450 = pneg %p204
      %p451 = pneg %p201
      %p452 = pneg %p225
      %p453 = pneg %p222
      %p454 = scmp.lt.s32.totalorder %s29, 0
      %s455 = scalar_select %p454, %s29, 0
      %s456 = smul.addr %s455, 4
      %s457 = scalar_lea.vmem %s9, %s456
      %p458 = pneg %p251
      %p459 = pneg %p248
      %p460 = scmp.lt.s32.totalorder %s29, 0
      %s461 = scalar_select %p460, %s29, 0
      %s462 = scalar_lea.vmem %s10, %s461
      %p463 = pneg %p277
      %p464 = pneg %p274
      %s465 = smul.u32 16, %s29
      %p466 = scmp.lt.s32.totalorder %s465, 15
      %s467 = scalar_select %p466, %s465, 15
      %s468 = smul.addr %s467, 4
      %s469 = scalar_lea.vmem %s11, %s468
      %p470 = pneg %p303
      %p471 = pneg %p300
      %p472 = pneg %p324
      %p473 = pneg %p321
      %p474 = pneg %p350
      %p475 = pneg %p347
      %p476 = scmp.lt.s32.totalorder %s28, 1
      %s477 = scalar_select %p476, %s28, 1
      %s478 = smul.addr %s477, 8
      %s479 = scalar_lea.vmem %s13, %s478
      %p480 = scmp.lt.s32.totalorder %s28, 1
      %s481 = scalar_select %p480, %s28, 1
      %s482 = smul.addr %s481, 8
      %s483 = scalar_lea.vmem %s0, %s482
      %p484 = scmp.lt.s32.totalorder %s29, 0
      %s485 = scalar_select %p484, %s29, 0
      %s486 = smul.addr %s485, 4
      %s487 = scalar_lea.vmem %s9, %s486
      %p488 = scmp.lt.s32.totalorder %s29, 0
      %s489 = scalar_select %p488, %s29, 0
      %s490 = scalar_lea.vmem %s10, %s489
      %s491 = smul.u32 16, %s29
      %p492 = scmp.lt.s32.totalorder %s491, 15
      %s493 = scalar_select %p492, %s491, 15
      %s494 = smul.addr %s493, 4
      %s495 = scalar_lea.vmem %s11, %s494
      %s496 = smul.u32 16, %s29
      %p497 = scmp.lt.s32.totalorder %s28, 1
      %s498 = scalar_select %p497, %s28, 1
      %s499 = smul.addr %s498, 8
      %s500 = scalar_lea.vmem %s13, %s499
      %p502 = scmp.eq.s32.totalorder %s29, 0
      // Predicated region
      $region73: #{transformer_forward.2} parent=71 // pred_check
        %p503 = pneg %p502
      $region74: #{transformer_forward.2} parent=71 // pred_check_branch
        %505 = sbr.rel (%p503) target = $region76
      $region75: #{transformer_forward.2} parent=71 // pred_region
        %v506 = vld [vmem:[%s483] sm:$0xff]
        %v507 = vld [vmem:[%s1] sm:$0x1]
        %v508 = vld [vmem:[%s2] sm:$0x1]
        %vm509 = vcmask 261120
        %v510 = vsel %vm509, %v506, 0.0
        %511 = vadd.xlane.f32.xlu0 %v510
        %v512 = vpop.xlane.xlu0 %511
        %v513 = vrcp.pop 32.0
        %v514 = vmul.f32 32.0, %v513
        %v515 = vsub.f32 1.0, %v514
        %v516 = vmul.f32 %v513, %v515
        %v517 = vadd.f32 %v513, %v516
        %vm518 = vweird.f32 %v513
        %v519 = vsel %vm518, %v513, %v517
        %v520 = vmul.f32 %v512, %v519
        %v521 = vsub.f32 %v506, %v520
        %v522 = vmul.f32 %v521, %v521
        %v523 = vsel %vm509, %v522, 0.0
        %524 = vadd.xlane.f32.xlu0 %v523
        %v525 = vpop.xlane.xlu0 %524
        %v526 = vmul.f32 %v525, %v519
        %v527 = vadd.f32 %v526, 1e-05
        %v528 = vrsqrt.pop %v527
        %v529 = vmul.f32 %v528, %v527
        %v530 = vmul.f32 %v529, %v528
        %v531 = vmul.f32 0.5, %v530
        %v532 = vsub.f32 1.5, %v531
        %v533 = vmul.f32 %v528, %v532
        %vm534 = vweird.f32 %v527
        %vm535 = vweird.f32 %v528
        %vm536 = vmor %vm534, %vm535
        %v537 = vsel %vm536, %v528, %v533
        %v538 = vmul.f32 %v521, %v537
        %v540 = vperm.slane %v507, 0
        %v542 = vmul.f32 %v538, %v540
        %v544 = vperm.slane %v508, 0
        %v546 = vadd.f32 %v542, %v544
        %v547 = vpack.c.bf16 %v546, %v546
        %v548 = vld [vmem:[%s3] sm:$0xf]
        %v549 = vld [vmem:[%s3 + $0x4] sm:$0xf]
        %v550 = vld [vmem:[%s3 + $0x8] sm:$0xf]
        %v551 = vld [vmem:[%s3 + $0xc] sm:$0xf]
        %v552 = vld [vmem:[%s4] sm:$0x1]
        %v554 = vperm.slane %v552, 0
        %v560 = vunpack.c.l.b16 %v548
        %v561 = vunpack.c.l.b16 %v549
        %v562 = vunpack.c.l.b16 %v550
        %v563 = vunpack.c.l.b16 %v551
        %v564 = vpack.c.b16 %v561, %v560
        %v565 = vpack.c.b16 %v563, %v562
        %v569 = vsel %vm509, %v547, 0
        %571 = vmatpush.bf16.msra.mxu0 0
        %572 = vmatpush.bf16.msra.mxu0 0
        %573 = vmatpush.bf16.msra.mxu0 0
        %574 = vmatpush.bf16.msra.mxu0 0
        %575 = vmatpush.bf16.msra.mxu0 0
        %576 = vmatpush.bf16.msra.mxu0 0
        %577 = vmatpush.bf16.msra.mxu0 %v565
        %578 = vmatpush.bf16.msra.mxu0 %v564
        %579 = vmatmul.bf16.gmra.mxu0 %v569
        %v580 = vpop.f32.mrf.mxu0
        %v581 = vadd.f32 %v554, %v580
        %v582 = vpop.f32.mrf.mxu0
        %583 = vdwg.mxu0
        %v584 = vpack.c.bf16 %v581, %v581
        %v586 = vunpack.c.l.b16 %v584
        %v587 = vpack.c.b16 %v586, %v586
        %588 = vrot.lane.b32.xlu0 %v587, 96
        %v589 = vpop.permute.xlu0 %588
        %vm590 = vcmask 64512
        %v592 = vsel %vm590, %v584, 0
        %v595 = vsel %vm590, %v589, 0
        %597 = vmatpush.bf16.xpose.msra.mxu0 0
        %598 = vmatpush.bf16.xpose.msra.mxu0 0
        %599 = vmatpush.bf16.xpose.msra.mxu0 0
        %600 = vmatpush.bf16.xpose.msra.mxu0 0
        %601 = vmatpush.bf16.xpose.msra.mxu0 0
        %602 = vmatpush.bf16.xpose.msra.mxu0 0
        %603 = vmatpush.bf16.xpose.msra.mxu0 0
        %604 = vmatpush.bf16.xpose.msra.mxu0 %v595
        %605 = vmatmul.bf16.gmra.mxu0 %v592
        %v606 = vpop.f32.mrf.mxu0
        %v607 = vadd.f32 0.0, %v606
        %v608 = vpop.f32.mrf.mxu0
        %609 = vdwg.mxu0
        %v610 = vsel %vm590, %v607, -inf
        %611 = vmax.xlane.f32.xlu0 %v610
        %v612 = vpop.xlane.xlu0 %611
        %v613 = vsub.f32 %v607, %v612
        %v614 = vmul.f32 %v613, 1.442695
        %v615 = vpow.pop %v614
        %v616 = vsel %vm590, %v615, 0.0
        %617 = vadd.xlane.f32.xlu0 %v616
        %v618 = vpop.xlane.xlu0 %617
        %v619 = vrcp.pop %v618
        %v620 = vmul.f32 %v615, %v619
        %v621 = vpack.c.bf16 %v620, %v620
        %622 = vrot.lane.b32.xlu0 %v587, 64
        %v623 = vpop.permute.xlu0 %622
        %v625 = vsel %vm590, %v621, 0
        %vm627 = vcmask 1043456
        %v629 = vsel %vm627, %v623, 0
        %631 = vmatpush.bf16.msra.mxu0 0
        %632 = vmatpush.bf16.msra.mxu0 0
        %633 = vmatpush.bf16.msra.mxu0 0
        %634 = vmatpush.bf16.msra.mxu0 0
        %635 = vmatpush.bf16.msra.mxu0 0
        %636 = vmatpush.bf16.msra.mxu0 0
        %637 = vmatpush.bf16.msra.mxu0 0
        %638 = vmatpush.bf16.msra.mxu0 %v629
        %639 = vmatmul.bf16.gmra.mxu0 %v625
        %v640 = vpop.f32.mrf.mxu0
        %v641 = vadd.f32 0.0, %v640
        %v642 = vpop.f32.mrf.mxu0
        %643 = vdwg.mxu0
        %v644 = vpack.c.bf16 %v641, %v641
        %vm645 = vcmask 60416
        %646 = vst.msk [vmem:[#allocation2] sm:$0xf] %vm645, %v644
        %647 = vrot.lane.b32.xlu0 %v587, 120
        %v648 = vpop.permute.xlu0 %647
        %649 = vrot.lane.b32.xlu0 %v587, 88
        %v650 = vpop.permute.xlu0 %649
        %v652 = vsel %vm590, %v648, 0
        %v655 = vsel %vm590, %v650, 0
        %657 = vmatpush.bf16.xpose.msra.mxu0 0
        %658 = vmatpush.bf16.xpose.msra.mxu0 0
        %659 = vmatpush.bf16.xpose.msra.mxu0 0
        %660 = vmatpush.bf16.xpose.msra.mxu0 0
        %661 = vmatpush.bf16.xpose.msra.mxu0 0
        %662 = vmatpush.bf16.xpose.msra.mxu0 0
        %663 = vmatpush.bf16.xpose.msra.mxu0 0
        %664 = vmatpush.bf16.xpose.msra.mxu0 %v655
        %665 = vmatmul.bf16.gmra.mxu0 %v652
        %v666 = vpop.f32.mrf.mxu0
        %v667 = vadd.f32 0.0, %v666
        %v668 = vpop.f32.mrf.mxu0
        %669 = vdwg.mxu0
        %v670 = vsel %vm590, %v667, -inf
        %671 = vmax.xlane.f32.xlu0 %v670
        %v672 = vpop.xlane.xlu0 %671
        %v673 = vsub.f32 %v667, %v672
        %v674 = vmul.f32 %v673, 1.442695
        %v675 = vpow.pop %v674
        %v676 = vsel %vm590, %v675, 0.0
        %677 = vadd.xlane.f32.xlu0 %v676
        %v678 = vpop.xlane.xlu0 %677
        %v679 = vrcp.pop %v678
        %v680 = vmul.f32 %v675, %v679
        %v681 = vpack.c.bf16 %v680, %v680
        %682 = vrot.lane.b32.xlu0 %v587, 56
        %v683 = vpop.permute.xlu0 %682
        %v685 = vsel %vm590, %v681, 0
        %v688 = vsel %vm627, %v683, 0
        %690 = vmatpush.bf16.msra.mxu0 0
        %691 = vmatpush.bf16.msra.mxu0 0
        %692 = vmatpush.bf16.msra.mxu0 0
        %693 = vmatpush.bf16.msra.mxu0 0
        %694 = vmatpush.bf16.msra.mxu0 0
        %695 = vmatpush.bf16.msra.mxu0 0
        %696 = vmatpush.bf16.msra.mxu0 0
        %697 = vmatpush.bf16.msra.mxu0 %v688
        %698 = vmatmul.bf16.gmra.mxu0 %v685
        %v699 = vpop.f32.mrf.mxu0
        %v700 = vadd.f32 0.0, %v699
        %v701 = vpop.f32.mrf.mxu0
        %702 = vdwg.mxu0
        %v703 = vpack.c.bf16 %v700, %v700
        %705 = vrot.lane.b32.xlu0 %v703, 8
        %v706 = vpop.permute.xlu0 %705
        %vm708 = vcmask 126016
        %709 = vst.msk [vmem:[#allocation2] sm:$0xf] %vm708, %v706
        %710 = vrot.lane.b32.xlu0 %v587, 112
        %v711 = vpop.permute.xlu0 %710
        %712 = vrot.lane.b32.xlu0 %v587, 80
        %v713 = vpop.permute.xlu0 %712
        %v715 = vsel %vm590, %v711, 0
        %v718 = vsel %vm590, %v713, 0
        %720 = vmatpush.bf16.xpose.msra.mxu0 0
        %721 = vmatpush.bf16.xpose.msra.mxu0 0
        %722 = vmatpush.bf16.xpose.msra.mxu0 0
        %723 = vmatpush.bf16.xpose.msra.mxu0 0
        %724 = vmatpush.bf16.xpose.msra.mxu0 0
        %725 = vmatpush.bf16.xpose.msra.mxu0 0
        %726 = vmatpush.bf16.xpose.msra.mxu0 0
        %727 = vmatpush.bf16.xpose.msra.mxu0 %v718
        %728 = vmatmul.bf16.gmra.mxu0 %v715
        %v729 = vpop.f32.mrf.mxu0
        %v730 = vadd.f32 0.0, %v729
        %v731 = vpop.f32.mrf.mxu0
        %732 = vdwg.mxu0
        %v733 = vsel %vm590, %v730, -inf
        %734 = vmax.xlane.f32.xlu0 %v733
        %v735 = vpop.xlane.xlu0 %734
        %v736 = vsub.f32 %v730, %v735
        %v737 = vmul.f32 %v736, 1.442695
        %v738 = vpow.pop %v737
        %v739 = vsel %vm590, %v738, 0.0
        %740 = vadd.xlane.f32.xlu0 %v739
        %v741 = vpop.xlane.xlu0 %740
        %v742 = vrcp.pop %v741
        %v743 = vmul.f32 %v738, %v742
        %v744 = vpack.c.bf16 %v743, %v743
        %745 = vrot.lane.b32.xlu0 %v587, 48
        %v746 = vpop.permute.xlu0 %745
        %v748 = vsel %vm590, %v744, 0
        %v751 = vsel %vm627, %v746, 0
        %753 = vmatpush.bf16.msra.mxu0 0
        %754 = vmatpush.bf16.msra.mxu0 0
        %755 = vmatpush.bf16.msra.mxu0 0
        %756 = vmatpush.bf16.msra.mxu0 0
        %757 = vmatpush.bf16.msra.mxu0 0
        %758 = vmatpush.bf16.msra.mxu0 0
        %759 = vmatpush.bf16.msra.mxu0 0
        %760 = vmatpush.bf16.msra.mxu0 %v751
        %761 = vmatmul.bf16.gmra.mxu0 %v748
        %v762 = vpop.f32.mrf.mxu0
        %v763 = vadd.f32 0.0, %v762
        %v764 = vpop.f32.mrf.mxu0
        %765 = vdwg.mxu0
        %v766 = vpack.c.bf16 %v763, %v763
        %768 = vrot.lane.b32.xlu0 %v766, 16
        %v769 = vpop.permute.xlu0 %768
        %vm771 = vcmask 191616
        %772 = vst.msk [vmem:[#allocation2] sm:$0xf] %vm771, %v769
        %773 = vrot.lane.b32.xlu0 %v587, 104
        %v774 = vpop.permute.xlu0 %773
        %775 = vrot.lane.b32.xlu0 %v587, 72
        %v776 = vpop.permute.xlu0 %775
        %v778 = vsel %vm590, %v774, 0
        %v781 = vsel %vm590, %v776, 0
        %783 = vmatpush.bf16.xpose.msra.mxu0 0
        %784 = vmatpush.bf16.xpose.msra.mxu0 0
        %785 = vmatpush.bf16.xpose.msra.mxu0 0
        %786 = vmatpush.bf16.xpose.msra.mxu0 0
        %787 = vmatpush.bf16.xpose.msra.mxu0 0
        %788 = vmatpush.bf16.xpose.msra.mxu0 0
        %789 = vmatpush.bf16.xpose.msra.mxu0 0
        %790 = vmatpush.bf16.xpose.msra.mxu0 %v781
        %791 = vmatmul.bf16.gmra.mxu0 %v778
        %v792 = vpop.f32.mrf.mxu0
        %v793 = vadd.f32 0.0, %v792
        %v794 = vpop.f32.mrf.mxu0
        %795 = vdwg.mxu0
        %v796 = vsel %vm590, %v793, -inf
        %797 = vmax.xlane.f32.xlu0 %v796
        %v798 = vpop.xlane.xlu0 %797
        %v799 = vsub.f32 %v793, %v798
        %v800 = vmul.f32 %v799, 1.442695
        %v801 = vpow.pop %v800
        %v802 = vsel %vm590, %v801, 0.0
        %803 = vadd.xlane.f32.xlu0 %v802
        %v804 = vpop.xlane.xlu0 %803
        %v805 = vrcp.pop %v804
        %v806 = vmul.f32 %v801, %v805
        %v807 = vpack.c.bf16 %v806, %v806
        %808 = vrot.lane.b32.xlu0 %v587, 40
        %v809 = vpop.permute.xlu0 %808
        %v811 = vsel %vm590, %v807, 0
        %v814 = vsel %vm627, %v809, 0
        %816 = vmatpush.bf16.msra.mxu0 0
        %817 = vmatpush.bf16.msra.mxu0 0
        %818 = vmatpush.bf16.msra.mxu0 0
        %819 = vmatpush.bf16.msra.mxu0 0
        %820 = vmatpush.bf16.msra.mxu0 0
        %821 = vmatpush.bf16.msra.mxu0 0
        %822 = vmatpush.bf16.msra.mxu0 0
        %823 = vmatpush.bf16.msra.mxu0 %v814
        %824 = vmatmul.bf16.gmra.mxu0 %v811
        %v825 = vpop.f32.mrf.mxu0
        %v826 = vadd.f32 0.0, %v825
        %v827 = vpop.f32.mrf.mxu0
        %828 = vdwg.mxu0
        %v829 = vpack.c.bf16 %v826, %v826
        %831 = vrot.lane.b32.xlu0 %v829, 24
        %v832 = vpop.permute.xlu0 %831
        %vm834 = vcmask 257216
        %835 = vst.msk [vmem:[#allocation2] sm:$0xf] %vm834, %v832
        %v836 = vld [vmem:[#allocation2] sm:$0xf]
        %v837 = vld [vmem:[%s5] sm:$0xf]
        %v838 = vld [vmem:[%s5 + $0x4] sm:$0xf]
        %v839 = vld [vmem:[%s5 + $0x8] sm:$0xf]
        %v840 = vld [vmem:[%s5 + $0xc] sm:$0xf]
        %v841 = vld [vmem:[%s6] sm:$0x1]
        %v843 = vperm.slane %v841, 0
        %v849 = vunpack.c.l.b16 %v837
        %v850 = vunpack.c.l.b16 %v838
        %v851 = vunpack.c.l.b16 %v839
        %v852 = vunpack.c.l.b16 %v840
        %v853 = vpack.c.b16 %v850, %v849
        %v854 = vpack.c.b16 %v852, %v851
        %v858 = vsel %vm509, %v836, 0
        %860 = vmatpush.bf16.msra.mxu0 0
        %861 = vmatpush.bf16.msra.mxu0 0
        %862 = vmatpush.bf16.msra.mxu0 0
        %863 = vmatpush.bf16.msra.mxu0 0
        %864 = vmatpush.bf16.msra.mxu0 0
        %865 = vmatpush.bf16.msra.mxu0 0
        %866 = vmatpush.bf16.msra.mxu0 %v854
        %867 = vmatpush.bf16.msra.mxu0 %v853
        %868 = vmatmul.bf16.gmra.mxu0 %v858
        %v869 = vpop.f32.mrf.mxu0
        %v870 = vadd.f32 %v843, %v869
        %v871 = vpop.f32.mrf.mxu0
        %872 = vdwg.mxu0
        %v873 = vadd.f32 %v506, %v870
        %v874 = vld [vmem:[%s7] sm:$0x1]
        %v875 = vld [vmem:[%s8] sm:$0x1]
        %v876 = vsel %vm509, %v873, 0.0
        %877 = vadd.xlane.f32.xlu0 %v876
        %v878 = vpop.xlane.xlu0 %877
        %v879 = vmul.f32 %v878, %v519
        %v880 = vsub.f32 %v873, %v879
        %v881 = vmul.f32 %v880, %v880
        %v882 = vsel %vm509, %v881, 0.0
        %883 = vadd.xlane.f32.xlu0 %v882
        %v884 = vpop.xlane.xlu0 %883
        %v885 = vmul.f32 %v884, %v519
        %v886 = vadd.f32 %v885, 1e-05
        %v887 = vrsqrt.pop %v886
        %v888 = vmul.f32 %v887, %v886
        %v889 = vmul.f32 %v888, %v887
        %v890 = vmul.f32 0.5, %v889
        %v891 = vsub.f32 1.5, %v890
        %v892 = vmul.f32 %v887, %v891
        %vm893 = vweird.f32 %v886
        %vm894 = vweird.f32 %v887
        %vm895 = vmor %vm893, %vm894
        %v896 = vsel %vm895, %v887, %v892
        %v897 = vmul.f32 %v880, %v896
        %v899 = vperm.slane %v874, 0
        %v901 = vmul.f32 %v897, %v899
        %v903 = vperm.slane %v875, 0
        %v905 = vadd.f32 %v901, %v903
        %v906 = vpack.c.bf16 %v905, %v905
        %vm907 = vcmask 257024
        %908 = vst.msk [vmem:[#allocation3] sm:$0xf] %vm907, %v906
        %v909 = vld [vmem:[%s12] sm:$0x1]
        %v911 = vperm.slane %v909, 0
        %v913 = vadd.f32 %v873, %v911
        %914 = vst.msk [vmem:[%s500] sm:$0xff] %vm509, %v913
      $region76: #{transformer_forward.2} parent=71 // pred_fallthru
        _
      %v915 = vld [vmem:[#allocation3] sm:$0xf]
      %v916 = vld [vmem:[%s487] sm:$0xf]
      %v917 = vld [vmem:[%s487 + $0x4] sm:$0xf]
      %v918 = vld [vmem:[%s487 + $0x8] sm:$0xf]
      %v919 = vld [vmem:[%s487 + $0xc] sm:$0xf]
      %v920 = vld [vmem:[%s490] sm:$0x1]
      %v922 = vperm.slane %v920, 0
      %v928 = vunpack.c.l.b16 %v916
      %v929 = vunpack.c.l.b16 %v917
      %v930 = vunpack.c.l.b16 %v918
      %v931 = vunpack.c.l.b16 %v919
      %v932 = vpack.c.b16 %v929, %v928
      %v933 = vpack.c.b16 %v931, %v930
      %vm936 = vcmask 261120
      %v938 = vsel %vm936, %v915, 0
      %940 = vmatpush.bf16.msra.mxu0 0
      %941 = vmatpush.bf16.msra.mxu0 0
      %942 = vmatpush.bf16.msra.mxu0 0
      %943 = vmatpush.bf16.msra.mxu0 0
      %944 = vmatpush.bf16.msra.mxu0 0
      %945 = vmatpush.bf16.msra.mxu0 0
      %946 = vmatpush.bf16.msra.mxu0 %v933
      %947 = vmatpush.bf16.msra.mxu0 %v932
      %948 = vmatmul.bf16.gmra.mxu0 %v938
      %v949 = vpop.f32.mrf.mxu0
      %v950 = vadd.f32 %v922, %v949
      %v951 = vpop.f32.mrf.mxu0
      %952 = vdwg.mxu0
      %v953 = vmul.f32 %v950, 0.5
      %v954 = vmul.f32 %v950, 0.70710677
      %v955 = vmul.f32 %v954, %v954
      %v956 = vmin.f32 16.0, %v955
      %v957 = vmul.f32 %v956, 2.1237322e-06
      %v958 = vadd.f32 %v957, 0.00028619796
      %v959 = vmul.f32 %v956, %v958
      %v960 = vadd.f32 %v959, 0.0036580483
      %v961 = vmul.f32 %v956, %v960
      %v962 = vadd.f32 %v961, 0.05243302
      %v963 = vmul.f32 %v956, %v962
      %v964 = vadd.f32 %v963, 0.18741608
      %v965 = vmul.f32 %v956, %v964
      %v966 = vadd.f32 %v965, 1.1283791
      %v967 = vmul.f32 %v954, %v966
      %v968 = vmul.f32 %v956, 3.8918573e-05
      %v969 = vadd.f32 %v968, 0.001143296
      %v970 = vmul.f32 %v956, %v969
      %v971 = vadd.f32 %v970, 0.014752088
      %v972 = vmul.f32 %v956, %v971
      %v973 = vadd.f32 %v972, 0.112945676
      %v974 = vmul.f32 %v956, %v973
      %v975 = vadd.f32 %v974, 0.4994258
      %v976 = vmul.f32 %v956, %v975
      %v977 = vadd.f32 %v976, 1.0
      %v978 = vrcp.pop %v977
      %v979 = vmul.f32 %v977, %v978
      %v980 = vsub.f32 1.0, %v979
      %v981 = vmul.f32 %v978, %v980
      %v982 = vadd.f32 %v978, %v981
      %vm983 = vweird.f32 %v977
      %vm984 = vweird.f32 %v978
      %vm985 = vmor %vm983, %vm984
      %v986 = vsel %vm985, %v978, %v982
      %v987 = vand.u32 2147483647, %v977
      %vm988 = vcmp.eq.f32.partialorder %v987, 8.507059e+37
      %v989 = vand.u32 %v977, 2147483648
      %v990 = vor.u32 1.1754944e-38, %v989
      %v991 = vsel %vm988, %v990, %v986
      %v992 = vmul.f32 %v967, %v991
      %v993 = vmin.f32 %v992, 1.0
      %v994 = vmax.f32 %v993, -1.0
      %v995 = vadd.f32 %v994, 1.0
      %v996 = vmul.f32 %v953, %v995
      %v997 = vpack.c.bf16 %v996, %v996
      %v998 = vld [vmem:[%s500] sm:$0xff]
      %v999 = vld [vmem:[%s495] sm:$0xf]
      %v1000 = vld [vmem:[%s495 + $0x4] sm:$0xf]
      %v1001 = vld [vmem:[%s495 + $0x8] sm:$0xf]
      %v1002 = vld [vmem:[%s495 + $0xc] sm:$0xf]
      %v1003 = vld [vmem:[%s495 + $0x10] sm:$0xf]
      %v1004 = vld [vmem:[%s495 + $0x14] sm:$0xf]
      %v1005 = vld [vmem:[%s495 + $0x18] sm:$0xf]
      %v1006 = vld [vmem:[%s495 + $0x1c] sm:$0xf]
      %v1007 = vld [vmem:[%s495 + $0x20] sm:$0xf]
      %v1008 = vld [vmem:[%s495 + $0x24] sm:$0xf]
      %v1009 = vld [vmem:[%s495 + $0x28] sm:$0xf]
      %v1010 = vld [vmem:[%s495 + $0x2c] sm:$0xf]
      %v1011 = vld [vmem:[%s495 + $0x30] sm:$0xf]
      %v1012 = vld [vmem:[%s495 + $0x34] sm:$0xf]
      %v1013 = vld [vmem:[%s495 + $0x38] sm:$0xf]
      %v1014 = vld [vmem:[%s495 + $0x3c] sm:$0xf]
      %v1031 = vunpack.c.l.b16 %v999
      %v1032 = vunpack.c.l.b16 %v1000
      %v1033 = vunpack.c.l.b16 %v1001
      %v1034 = vunpack.c.l.b16 %v1002
      %v1035 = vunpack.c.l.b16 %v1003
      %v1036 = vunpack.c.l.b16 %v1004
      %v1037 = vunpack.c.l.b16 %v1005
      %v1038 = vunpack.c.l.b16 %v1006
      %v1039 = vunpack.c.l.b16 %v1007
      %v1040 = vunpack.c.l.b16 %v1008
      %v1041 = vunpack.c.l.b16 %v1009
      %v1042 = vunpack.c.l.b16 %v1010
      %v1043 = vunpack.c.l.b16 %v1011
      %v1044 = vunpack.c.l.b16 %v1012
      %v1045 = vunpack.c.l.b16 %v1013
      %v1046 = vunpack.c.l.b16 %v1014
      %v1047 = vpack.c.b16 %v1032, %v1031
      %v1048 = vpack.c.b16 %v1034, %v1033
      %v1049 = vpack.c.b16 %v1036, %v1035
      %v1050 = vpack.c.b16 %v1038, %v1037
      %v1051 = vpack.c.b16 %v1040, %v1039
      %v1052 = vpack.c.b16 %v1042, %v1041
      %v1053 = vpack.c.b16 %v1044, %v1043
      %v1054 = vpack.c.b16 %v1046, %v1045
      %1063 = vmatpush.bf16.msra.mxu0 %v1054
      %1064 = vmatpush.bf16.msra.mxu0 %v1053
      %1065 = vmatpush.bf16.msra.mxu0 %v1052
      %1066 = vmatpush.bf16.msra.mxu0 %v1051
      %1067 = vmatpush.bf16.msra.mxu0 %v1050
      %1068 = vmatpush.bf16.msra.mxu0 %v1049
      %1069 = vmatpush.bf16.msra.mxu0 %v1048
      %1070 = vmatpush.bf16.msra.mxu0 %v1047
      %1071 = vmatmul.bf16.gmra.mxu0 %v997
      %v1072 = vpop.f32.mrf.mxu0
      %v1073 = vadd.f32 0.0, %v1072
      %v1074 = vpop.f32.mrf.mxu0
      %1075 = vdwg.mxu0
      %v1076 = vadd.f32 %v998, %v1073
      %1077 = vst.msk [vmem:[%s500] sm:$0xff] %vm936, %v1076
      %p1078 = scmp.lt.s32.totalorder %s28, 1
      %s1079 = scalar_select %p1078, %s28, 1
      %s1080 = smul.addr %s1079, 8
      %s1081 = scalar_lea.vmem %s13, %s1080
      // Predicated region
      $region77: #{transformer_forward.2} parent=71 // pred_check
        %p1082 = pneg %p347
      $region78: #{transformer_forward.2} parent=71 // pred_check_branch
        %1084 = sbr.rel (%p1082) target = $region80
      $region79: #{transformer_forward.2} parent=71 // pred_region
        _
      $region80: #{transformer_forward.2} parent=71 // pred_fallthru
        _
    $region72: #{transformer_forward.2} parent=5 // pred_fallthru
      _
    %p1085 = scmp.le.s32.totalorder 2, %s19
    // Predicated region
    $region81: #{transformer_forward.2} parent=5 // pred_check
      %p1086 = pneg %p1085
    $region82: #{transformer_forward.2} parent=5 // pred_check_branch
      %1088 = sbr.rel (%p1086) target = $region84
    $region83: #{transformer_forward.2} parent=5 // pred_region
      %s1089 = ssub.s32 %s19, 2
      // Predicated region
      $region85: #{transformer_forward.2} parent=83 // pred_check
        %p1090 = pneg %p353
      $region86: #{transformer_forward.2} parent=83 // pred_check_branch
        %1092 = sbr.rel (%p1090) target = $region88
      $region87: #{transformer_forward.2} parent=83 // pred_region
        %p1093 = scmp.lt.s32.totalorder %s30, 1
        %s1094 = scalar_select %p1093, %s30, 1
        %s1095 = smul.addr %s1094, 8
        %s1096 = scalar_lea.vmem %s13, %s1095
      $region88: #{transformer_forward.2} parent=83 // pred_fallthru
        _
    $region84: #{transformer_forward.2} parent=5 // pred_fallthru
      _
  $region6: #{transformer_forward.2} parent=0 // loop_footer
    %s23 = sadd.s32 1, %s19
  $region7: #{transformer_forward.2} parent=0 // loop_footer_branch
    %18 = sbr.rel target = $region3
  $region8: #{transformer_forward.2} parent=0 // loop_exit
    _

// kernel: transformer_forward.3
$region0: #{transformer_forward.3}
  #allocation0 [shape = 'u32[]', space=smem, size = 0x4, offset = 0x4, fixed_abs, tag = 'smem constant byte address 0x4 - core index']
  #allocation1 [shape = 'u32[72,128]{1,0:T(1,128)}', space=vmem, size = 0x9000, scoped, tag = 'internal scratch']
  #allocation2 [shape = 'bf16[8,32]{1,0:T(8,128)(2,1)}', space=vmem, size = 0x800, scoped, tag = 'scratch operand']
  #allocation3 [shape = 'bf16[8,32]{1,0:T(8,128)(2,1)}', space=vmem, size = 0x800, scoped, tag = 'scratch operand']
  %s0 = inlined_call_operand.vmem [shape: f32[2,8,32], index: 0, kind: input, shape index: {}]
  %s1 = inlined_call_operand.vmem [shape: f32[1,32], index: 1, kind: input, shape index: {}]
  %s2 = inlined_call_operand.vmem [shape: f32[1,32], index: 2, kind: input, shape index: {}]
  %s3 = inlined_call_operand.vmem [shape: bf16[32,96], index: 3, kind: input, shape index: {}]
  %s4 = inlined_call_operand.vmem [shape: f32[1,96], index: 4, kind: input, shape index: {}]
  %s5 = inlined_call_operand.vmem [shape: bf16[32,32], index: 5, kind: input, shape index: {}]
  %s6 = inlined_call_operand.vmem [shape: f32[1,32], index: 6, kind: input, shape index: {}]
  %s7 = inlined_call_operand.vmem [shape: f32[1,32], index: 7, kind: input, shape index: {}]
  %s8 = inlined_call_operand.vmem [shape: f32[1,32], index: 8, kind: input, shape index: {}]
  %s9 = inlined_call_operand.vmem [shape: bf16[32,128], index: 9, kind: input, shape index: {}]
  %s10 = inlined_call_operand.vmem [shape: f32[1,128], index: 10, kind: input, shape index: {}]
  %s11 = inlined_call_operand.vmem [shape: bf16[128,32], index: 11, kind: input, shape index: {}]
  %s12 = inlined_call_operand.vmem [shape: f32[1,32], index: 12, kind: input, shape index: {}]
  %s13 = inlined_call_operand.hbm [shape: f32[2,8,32], index: 13, kind: output, shape index: {}]
  %s14 = sld [smem:[#allocation0]]
  $region89: #{transformer_forward.3} parent=0
    _
  %s16 = ssub.s32 1, %s14
  %s17 = scalar_select 0, %s16, %s14
  $region1: #{transformer_forward.3} parent=0
    #allocation4 [shape = 'u8[8192]{0}', space=vmem, size = 0x2000, scoped, tag = 'output window, operand 0']
    #allocation5 [shape = 's32[2]{0}', space=sflag, size = 0x8, scoped, tag = 'scoped memory for transformer_forward.3']
    %18 = vsyncpa [#allocation5], 0
    %s19 = scalar_lea.sflag [#allocation5], 1
    %20 = vsyncpa %s19, 0
    loop: start=0, step=1, limit=4
    $region2: #{transformer_forward.3} parent=1 // loop_pre_header
      _
    $region3: #{transformer_forward.3} parent=1 // loop_header
      %s22 = sphi 0, %s26
      %p23 = scmp.ge.s32.totalorder %s22, 4
      %s29 = sphi 0, %s41
      %s30 = sphi 0, %s37
      %s31 = sphi 0, %s29
      %s32 = sphi 0, %s30
      %s33 = sphi 0, %s31
      %s34 = sphi 0, %s32
      %s44 = sphi 0, %s46
      %s47 = sphi 0, %s44
      %s48 = sphi 0, %s47
      %s64 = sphi 0, %s48
      %s68 = sphi 0, %s68
      %s70 = sphi 0, %s68
      %s71 = sphi 0, %s70
      %s85 = sphi 0, %s71
      %s89 = sphi 0, %s89
      %s91 = sphi 0, %s89
      %s92 = sphi 0, %s91
      %s106 = sphi 0, %s92
      %s110 = sphi 0, %s110
      %s112 = sphi 0, %s110
      %s113 = sphi 0, %s112
      %s127 = sphi 0, %s113
      %s131 = sphi 0, %s131
      %s133 = sphi 0, %s131
      %s134 = sphi 0, %s133
      %s148 = sphi 0, %s134
      %s152 = sphi 0, %s152
      %s154 = sphi 0, %s152
      %s155 = sphi 0, %s154
      %s169 = sphi 0, %s155
      %s173 = sphi 0, %s173
      %s175 = sphi 0, %s173
      %s176 = sphi 0, %s175
      %s190 = sphi 0, %s176
      %s194 = sphi 0, %s194
      %s196 = sphi 0, %s194
      %s197 = sphi 0, %s196
      %s211 = sphi 0, %s197
      %s215 = sphi 0, %s215
      %s217 = sphi 0, %s215
      %s218 = sphi 0, %s217
      %s232 = sphi 0, %s218
      %s238 = sphi 0, %s240
      %s241 = sphi 0, %s238
      %s242 = sphi 0, %s241
      %s258 = sphi 0, %s242
      %s264 = sphi 0, %s266
      %s267 = sphi 0, %s264
      %s268 = sphi 0, %s267
      %s284 = sphi 0, %s268
      %s290 = sphi 0, %s292
      %s293 = sphi 0, %s290
      %s294 = sphi 0, %s293
      %s310 = sphi 0, %s294
      %s314 = sphi 0, %s314
      %s316 = sphi 0, %s314
      %s317 = sphi 0, %s316
      %s331 = sphi 0, %s317
      %s337 = sphi 0, %s339
      %s340 = sphi 0, %s337
      %s341 = sphi 0, %s340
      %s357 = sphi 0, %s341
    $region4: #{transformer_forward.3} parent=1 // loop_header_branch
      %25 = sbr.rel (%p23) target = $region8
    $region5: #{transformer_forward.3} parent=1 // loop_body
      %s27 = ssub.s32 %s22, 1
      %s28 = ssub.s32 %s22, 2
      %s35 = sadd.s32 1, %s30
      %p36 = scmp.ge.s32.totalorder %s35, 1
      %s37 = scalar_select %p36, 0, %s35
      %s38 = sadd.s32 1, %s29
      %s39 = scalar_select %p36, %s38, %s29
      %p40 = scmp.ge.s32.totalorder %s39, 2
      %s41 = scalar_select %p40, 0, %s39
      %s42 = ssub.s32 %s29, %s41
      %p43 = scmp.eq.s32.totalorder %s42, 0
      %s45 = sadd.s32 %s44, 1
      %s46 = scalar_select %p43, %s44, %s45
      %p49 = pneg %p43
      %p50 = scmp.eq.s32.totalorder %s22, 1
      %p51 = por %p49, %p50
      %p52 = scmp.ne.s32.totalorder %s44, %s47
      %p53 = scmp.eq.s32.totalorder %s22, 0
      %p54 = por %p52, %p53
      %p55 = scmp.ne.s32.totalorder %s44, %s47
      %p56 = scmp.eq.s32.totalorder %s27, 1
      %p57 = por %p55, %p56
      %p58 = scmp.ne.s32.totalorder %s47, %s48
      %p59 = scmp.eq.s32.totalorder %s27, 0
      %p60 = por %p58, %p59
      %p61 = scmp.ne.s32.totalorder %s47, %s48
      %p62 = scmp.eq.s32.totalorder %s28, 1
      %p63 = por %p61, %p62
      %p65 = scmp.ne.s32.totalorder %s48, %s64
      %p66 = scmp.eq.s32.totalorder %s28, 0
      %p67 = por %p65, %p66
      %s69 = sadd.s32 %s68, 1
      %p72 = scmp.eq.s32.totalorder %s22, 1
      %p73 = scmp.ne.s32.totalorder %s68, %s70
      %p74 = scmp.eq.s32.totalorder %s22, 0
      %p75 = por %p73, %p74
      %p76 = scmp.ne.s32.totalorder %s68, %s70
      %p77 = scmp.eq.s32.totalorder %s27, 1
      %p78 = por %p76, %p77
      %p79 = scmp.ne.s32.totalorder %s70, %s71
      %p80 = scmp.eq.s32.totalorder %s27, 0
      %p81 = por %p79, %p80
      %p82 = scmp.ne.s32.totalorder %s70, %s71
      %p83 = scmp.eq.s32.totalorder %s28, 1
      %p84 = por %p82, %p83
      %p86 = scmp.ne.s32.totalorder %s71, %s85
      %p87 = scmp.eq.s32.totalorder %s28, 0
      %p88 = por %p86, %p87
      %s90 = sadd.s32 %s89, 1
      %p93 = scmp.eq.s32.totalorder %s22, 1
      %p94 = scmp.ne.s32.totalorder %s89, %s91
      %p95 = scmp.eq.s32.totalorder %s22, 0
      %p96 = por %p94, %p95
      %p97 = scmp.ne.s32.totalorder %s89, %s91
      %p98 = scmp.eq.s32.totalorder %s27, 1
      %p99 = por %p97, %p98
      %p100 = scmp.ne.s32.totalorder %s91, %s92
      %p101 = scmp.eq.s32.totalorder %s27, 0
      %p102 = por %p100, %p101
      %p103 = scmp.ne.s32.totalorder %s91, %s92
      %p104 = scmp.eq.s32.totalorder %s28, 1
      %p105 = por %p103, %p104
      %p107 = scmp.ne.s32.totalorder %s92, %s106
      %p108 = scmp.eq.s32.totalorder %s28, 0
      %p109 = por %p107, %p108
      %s111 = sadd.s32 %s110, 1
      %p114 = scmp.eq.s32.totalorder %s22, 1
      %p115 = scmp.ne.s32.totalorder %s110, %s112
      %p116 = scmp.eq.s32.totalorder %s22, 0
      %p117 = por %p115, %p116
      %p118 = scmp.ne.s32.totalorder %s110, %s112
      %p119 = scmp.eq.s32.totalorder %s27, 1
      %p120 = por %p118, %p119
      %p121 = scmp.ne.s32.totalorder %s112, %s113
      %p122 = scmp.eq.s32.totalorder %s27, 0
      %p123 = por %p121, %p122
      %p124 = scmp.ne.s32.totalorder %s112, %s113
      %p125 = scmp.eq.s32.totalorder %s28, 1
      %p126 = por %p124, %p125
      %p128 = scmp.ne.s32.totalorder %s113, %s127
      %p129 = scmp.eq.s32.totalorder %s28, 0
      %p130 = por %p128, %p129
      %s132 = sadd.s32 %s131, 1
      %p135 = scmp.eq.s32.totalorder %s22, 1
      %p136 = scmp.ne.s32.totalorder %s131, %s133
      %p137 = scmp.eq.s32.totalorder %s22, 0
      %p138 = por %p136, %p137
      %p139 = scmp.ne.s32.totalorder %s131, %s133
      %p140 = scmp.eq.s32.totalorder %s27, 1
      %p141 = por %p139, %p140
      %p142 = scmp.ne.s32.totalorder %s133, %s134
      %p143 = scmp.eq.s32.totalorder %s27, 0
      %p144 = por %p142, %p143
      %p145 = scmp.ne.s32.totalorder %s133, %s134
      %p146 = scmp.eq.s32.totalorder %s28, 1
      %p147 = por %p145, %p146
      %p149 = scmp.ne.s32.totalorder %s134, %s148
      %p150 = scmp.eq.s32.totalorder %s28, 0
      %p151 = por %p149, %p150
      %s153 = sadd.s32 %s152, 1
      %p156 = scmp.eq.s32.totalorder %s22, 1
      %p157 = scmp.ne.s32.totalorder %s152, %s154
      %p158 = scmp.eq.s32.totalorder %s22, 0
      %p159 = por %p157, %p158
      %p160 = scmp.ne.s32.totalorder %s152, %s154
      %p161 = scmp.eq.s32.totalorder %s27, 1
      %p162 = por %p160, %p161
      %p163 = scmp.ne.s32.totalorder %s154, %s155
      %p164 = scmp.eq.s32.totalorder %s27, 0
      %p165 = por %p163, %p164
      %p166 = scmp.ne.s32.totalorder %s154, %s155
      %p167 = scmp.eq.s32.totalorder %s28, 1
      %p168 = por %p166, %p167
      %p170 = scmp.ne.s32.totalorder %s155, %s169
      %p171 = scmp.eq.s32.totalorder %s28, 0
      %p172 = por %p170, %p171
      %s174 = sadd.s32 %s173, 1
      %p177 = scmp.eq.s32.totalorder %s22, 1
      %p178 = scmp.ne.s32.totalorder %s173, %s175
      %p179 = scmp.eq.s32.totalorder %s22, 0
      %p180 = por %p178, %p179
      %p181 = scmp.ne.s32.totalorder %s173, %s175
      %p182 = scmp.eq.s32.totalorder %s27, 1
      %p183 = por %p181, %p182
      %p184 = scmp.ne.s32.totalorder %s175, %s176
      %p185 = scmp.eq.s32.totalorder %s27, 0
      %p186 = por %p184, %p185
      %p187 = scmp.ne.s32.totalorder %s175, %s176
      %p188 = scmp.eq.s32.totalorder %s28, 1
      %p189 = por %p187, %p188
      %p191 = scmp.ne.s32.totalorder %s176, %s190
      %p192 = scmp.eq.s32.totalorder %s28, 0
      %p193 = por %p191, %p192
      %s195 = sadd.s32 %s194, 1
      %p198 = scmp.eq.s32.totalorder %s22, 1
      %p199 = scmp.ne.s32.totalorder %s194, %s196
      %p200 = scmp.eq.s32.totalorder %s22, 0
      %p201 = por %p199, %p200
      %p202 = scmp.ne.s32.totalorder %s194, %s196
      %p203 = scmp.eq.s32.totalorder %s27, 1
      %p204 = por %p202, %p203
      %p205 = scmp.ne.s32.totalorder %s196, %s197
      %p206 = scmp.eq.s32.totalorder %s27, 0
      %p207 = por %p205, %p206
      %p208 = scmp.ne.s32.totalorder %s196, %s197
      %p209 = scmp.eq.s32.totalorder %s28, 1
      %p210 = por %p208, %p209
      %p212 = scmp.ne.s32.totalorder %s197, %s211
      %p213 = scmp.eq.s32.totalorder %s28, 0
      %p214 = por %p212, %p213
      %s216 = sadd.s32 %s215, 1
      %p219 = scmp.eq.s32.totalorder %s22, 1
      %p220 = scmp.ne.s32.totalorder %s215, %s217
      %p221 = scmp.eq.s32.totalorder %s22, 0
      %p222 = por %p220, %p221
      %p223 = scmp.ne.s32.totalorder %s215, %s217
      %p224 = scmp.eq.s32.totalorder %s27, 1
      %p225 = por %p223, %p224
      %p226 = scmp.ne.s32.totalorder %s217, %s218
      %p227 = scmp.eq.s32.totalorder %s27, 0
      %p228 = por %p226, %p227
      %p229 = scmp.ne.s32.totalorder %s217, %s218
      %p230 = scmp.eq.s32.totalorder %s28, 1
      %p231 = por %p229, %p230
      %p233 = scmp.ne.s32.totalorder %s218, %s232
      %p234 = scmp.eq.s32.totalorder %s28, 0
      %p235 = por %p233, %p234
      %s236 = ssub.s32 %s30, %s37
      %p237 = scmp.eq.s32.totalorder %s236, 0
      %s239 = sadd.s32 %s238, 1
      %s240 = scalar_select %p237, %s238, %s239
      %p243 = pneg %p237
      %p244 = scmp.eq.s32.totalorder %s22, 1
      %p245 = por %p243, %p244
      %p246 = scmp.ne.s32.totalorder %s238, %s241
      %p247 = scmp.eq.s32.totalorder %s22, 0
      %p248 = por %p246, %p247
      %p249 = scmp.ne.s32.totalorder %s238, %s241
      %p250 = scmp.eq.s32.totalorder %s27, 1
      %p251 = por %p249, %p250
      %p252 = scmp.ne.s32.totalorder %s241, %s242
      %p253 = scmp.eq.s32.totalorder %s27, 0
      %p254 = por %p252, %p253
      %p255 = scmp.ne.s32.totalorder %s241, %s242
      %p256 = scmp.eq.s32.totalorder %s28, 1
      %p257 = por %p255, %p256
      %p259 = scmp.ne.s32.totalorder %s242, %s258
      %p260 = scmp.eq.s32.totalorder %s28, 0
      %p261 = por %p259, %p260
      %s262 = ssub.s32 %s30, %s37
      %p263 = scmp.eq.s32.totalorder %s262, 0
      %s265 = sadd.s32 %s264, 1
      %s266 = scalar_select %p263, %s264, %s265
      %p269 = pneg %p263
      %p270 = scmp.eq.s32.totalorder %s22, 1
      %p271 = por %p269, %p270
      %p272 = scmp.ne.s32.totalorder %s264, %s267
      %p273 = scmp.eq.s32.totalorder %s22, 0
      %p274 = por %p272, %p273
      %p275 = scmp.ne.s32.totalorder %s264, %s267
      %p276 = scmp.eq.s32.totalorder %s27, 1
      %p277 = por %p275, %p276
      %p278 = scmp.ne.s32.totalorder %s267, %s268
      %p279 = scmp.eq.s32.totalorder %s27, 0
      %p280 = por %p278, %p279
      %p281 = scmp.ne.s32.totalorder %s267, %s268
      %p282 = scmp.eq.s32.totalorder %s28, 1
      %p283 = por %p281, %p282
      %p285 = scmp.ne.s32.totalorder %s268, %s284
      %p286 = scmp.eq.s32.totalorder %s28, 0
      %p287 = por %p285, %p286
      %s288 = ssub.s32 %s30, %s37
      %p289 = scmp.eq.s32.totalorder %s288, 0
      %s291 = sadd.s32 %s290, 1
      %s292 = scalar_select %p289, %s290, %s291
      %p295 = pneg %p289
      %p296 = scmp.eq.s32.totalorder %s22, 1
      %p297 = por %p295, %p296
      %p298 = scmp.ne.s32.totalorder %s290, %s293
      %p299 = scmp.eq.s32.totalorder %s22, 0
      %p300 = por %p298, %p299
      %p301 = scmp.ne.s32.totalorder %s290, %s293
      %p302 = scmp.eq.s32.totalorder %s27, 1
      %p303 = por %p301, %p302
      %p304 = scmp.ne.s32.totalorder %s293, %s294
      %p305 = scmp.eq.s32.totalorder %s27, 0
      %p306 = por %p304, %p305
      %p307 = scmp.ne.s32.totalorder %s293, %s294
      %p308 = scmp.eq.s32.totalorder %s28, 1
      %p309 = por %p307, %p308
      %p311 = scmp.ne.s32.totalorder %s294, %s310
      %p312 = scmp.eq.s32.totalorder %s28, 0
      %p313 = por %p311, %p312
      %s315 = sadd.s32 %s314, 1
      %p318 = scmp.eq.s32.totalorder %s22, 1
      %p319 = scmp.ne.s32.totalorder %s314, %s316
      %p320 = scmp.eq.s32.totalorder %s22, 0
      %p321 = por %p319, %p320
      %p322 = scmp.ne.s32.totalorder %s314, %s316
      %p323 = scmp.eq.s32.totalorder %s27, 1
      %p324 = por %p322, %p323
      %p325 = scmp.ne.s32.totalorder %s316, %s317
      %p326 = scmp.eq.s32.totalorder %s27, 0
      %p327 = por %p325, %p326
      %p328 = scmp.ne.s32.totalorder %s316, %s317
      %p329 = scmp.eq.s32.totalorder %s28, 1
      %p330 = por %p328, %p329
      %p332 = scmp.ne.s32.totalorder %s317, %s331
      %p333 = scmp.eq.s32.totalorder %s28, 0
      %p334 = por %p332, %p333
      %s335 = ssub.s32 %s29, %s41
      %p336 = scmp.eq.s32.totalorder %s335, 0
      %s338 = sadd.s32 %s337, 1
      %s339 = scalar_select %p336, %s337, %s338
      %p342 = pneg %p336
      %p343 = scmp.eq.s32.totalorder %s22, 1
      %p344 = por %p342, %p343
      %p345 = scmp.ne.s32.totalorder %s337, %s340
      %p346 = scmp.eq.s32.totalorder %s22, 0
      %p347 = por %p345, %p346
      %p348 = scmp.ne.s32.totalorder %s337, %s340
      %p349 = scmp.eq.s32.totalorder %s27, 1
      %p350 = por %p348, %p349
      %p351 = scmp.ne.s32.totalorder %s340, %s341
      %p352 = scmp.eq.s32.totalorder %s27, 0
      %p353 = por %p351, %p352
      %p354 = scmp.ne.s32.totalorder %s340, %s341
      %p355 = scmp.eq.s32.totalorder %s28, 1
      %p356 = por %p354, %p355
      %p358 = scmp.ne.s32.totalorder %s341, %s357
      %p359 = scmp.eq.s32.totalorder %s28, 0
      %p360 = por %p358, %p359
      %p361 = scmp.le.s32.totalorder 1, %s22
      %p362 = scmp.lt.s32.totalorder %s22, 3
      %p363 = pnand %p361, %p362
      %p364 = pneg %p363
      // Predicated region
      $region9: #{transformer_forward.3} parent=5 // pred_check
        _
      $region10: #{transformer_forward.3} parent=5 // pred_check_branch
        %366 = sbr.rel (%p363) target = $region12
      $region11: #{transformer_forward.3} parent=5 // pred_region
        %s367 = ssub.s32 %s22, 1
        // Predicated region
        $region13: #{transformer_forward.3} parent=11 // pred_check
          %p368 = pneg %p81
        $region14: #{transformer_forward.3} parent=11 // pred_check_branch
          %370 = sbr.rel (%p368) target = $region16
        $region15: #{transformer_forward.3} parent=11 // pred_region
          _
        $region16: #{transformer_forward.3} parent=11 // pred_fallthru
          _
        // Predicated region
        $region17: #{transformer_forward.3} parent=11 // pred_check
          %p371 = pneg %p102
        $region18: #{transformer_forward.3} parent=11 // pred_check_branch
          %373 = sbr.rel (%p371) target = $region20
        $region19: #{transformer_forward.3} parent=11 // pred_region
          _
        $region20: #{transformer_forward.3} parent=11 // pred_fallthru
          _
        // Predicated region
        $region21: #{transformer_forward.3} parent=11 // pred_check
          %p374 = pneg %p123
        $region22: #{transformer_forward.3} parent=11 // pred_check_branch
          %376 = sbr.rel (%p374) target = $region24
        $region23: #{transformer_forward.3} parent=11 // pred_region
          _
        $region24: #{transformer_forward.3} parent=11 // pred_fallthru
          _
        // Predicated region
        $region25: #{transformer_forward.3} parent=11 // pred_check
          %p377 = pneg %p144
        $region26: #{transformer_forward.3} parent=11 // pred_check_branch
          %379 = sbr.rel (%p377) target = $region28
        $region27: #{transformer_forward.3} parent=11 // pred_region
          _
        $region28: #{transformer_forward.3} parent=11 // pred_fallthru
          _
        // Predicated region
        $region29: #{transformer_forward.3} parent=11 // pred_check
          %p380 = pneg %p165
        $region30: #{transformer_forward.3} parent=11 // pred_check_branch
          %382 = sbr.rel (%p380) target = $region32
        $region31: #{transformer_forward.3} parent=11 // pred_region
          _
        $region32: #{transformer_forward.3} parent=11 // pred_fallthru
          _
        // Predicated region
        $region33: #{transformer_forward.3} parent=11 // pred_check
          %p383 = pneg %p186
        $region34: #{transformer_forward.3} parent=11 // pred_check_branch
          %385 = sbr.rel (%p383) target = $region36
        $region35: #{transformer_forward.3} parent=11 // pred_region
          _
        $region36: #{transformer_forward.3} parent=11 // pred_fallthru
          _
        // Predicated region
        $region37: #{transformer_forward.3} parent=11 // pred_check
          %p386 = pneg %p207
        $region38: #{transformer_forward.3} parent=11 // pred_check_branch
          %388 = sbr.rel (%p386) target = $region40
        $region39: #{transformer_forward.3} parent=11 // pred_region
          _
        $region40: #{transformer_forward.3} parent=11 // pred_fallthru
          _
        // Predicated region
        $region41: #{transformer_forward.3} parent=11 // pred_check
          %p389 = pneg %p228
        $region42: #{transformer_forward.3} parent=11 // pred_check_branch
          %391 = sbr.rel (%p389) target = $region44
        $region43: #{transformer_forward.3} parent=11 // pred_region
          _
        $region44: #{transformer_forward.3} parent=11 // pred_fallthru
          _
        // Predicated region
        $region45: #{transformer_forward.3} parent=11 // pred_check
          %p392 = pneg %p254
        $region46: #{transformer_forward.3} parent=11 // pred_check_branch
          %394 = sbr.rel (%p392) target = $region48
        $region47: #{transformer_forward.3} parent=11 // pred_region
          %p395 = scmp.lt.s32.totalorder %s32, 0
          %s396 = scalar_select %p395, %s32, 0
          %s397 = smul.addr %s396, 4
          %s398 = scalar_lea.vmem %s9, %s397
        $region48: #{transformer_forward.3} parent=11 // pred_fallthru
          _
        // Predicated region
        $region49: #{transformer_forward.3} parent=11 // pred_check
          %p399 = pneg %p280
        $region50: #{transformer_forward.3} parent=11 // pred_check_branch
          %401 = sbr.rel (%p399) target = $region52
        $region51: #{transformer_forward.3} parent=11 // pred_region
          %p402 = scmp.lt.s32.totalorder %s32, 0
          %s403 = scalar_select %p402, %s32, 0
          %s404 = scalar_lea.vmem %s10, %s403
        $region52: #{transformer_forward.3} parent=11 // pred_fallthru
          _
        // Predicated region
        $region53: #{transformer_forward.3} parent=11 // pred_check
          %p405 = pneg %p306
        $region54: #{transformer_forward.3} parent=11 // pred_check_branch
          %407 = sbr.rel (%p405) target = $region56
        $region55: #{transformer_forward.3} parent=11 // pred_region
          %s408 = smul.u32 16, %s32
          %p409 = scmp.lt.s32.totalorder %s408, 15
          %s410 = scalar_select %p409, %s408, 15
          %s411 = smul.addr %s410, 4
          %s412 = scalar_lea.vmem %s11, %s411
          %s413 = smul.u32 16, %s32
        $region56: #{transformer_forward.3} parent=11 // pred_fallthru
          _
        // Predicated region
        $region57: #{transformer_forward.3} parent=11 // pred_check
          %p414 = pneg %p327
        $region58: #{transformer_forward.3} parent=11 // pred_check_branch
          %416 = sbr.rel (%p414) target = $region60
        $region59: #{transformer_forward.3} parent=11 // pred_region
          _
        $region60: #{transformer_forward.3} parent=11 // pred_fallthru
          _
      $region12: #{transformer_forward.3} parent=5 // pred_fallthru
        _
      %p417 = scmp.lt.s32.totalorder %s22, 2
      // Predicated region
      $region61: #{transformer_forward.3} parent=5 // pred_check
        %p418 = pneg %p417
      $region62: #{transformer_forward.3} parent=5 // pred_check_branch
        %420 = sbr.rel (%p418) target = $region64
      $region63: #{transformer_forward.3} parent=5 // pred_region
        // Predicated region
        $region65: #{transformer_forward.3} parent=63 // pred_check
          %p421 = pneg %p54
        $region66: #{transformer_forward.3} parent=63 // pred_check_branch
          %423 = sbr.rel (%p421) target = $region68
        $region67: #{transformer_forward.3} parent=63 // pred_region
          %p424 = scmp.lt.s32.totalorder %s29, 1
          %s425 = scalar_select %p424, %s29, 1
          %s426 = smul.addr %s425, 8
          %s427 = scalar_lea.vmem %s0, %s426
        $region68: #{transformer_forward.3} parent=63 // pred_fallthru
          _
      $region64: #{transformer_forward.3} parent=5 // pred_fallthru
        _
      %p428 = scmp.le.s32.totalorder 1, %s22
      %p429 = scmp.lt.s32.totalorder %s22, 3
      %p430 = pnand %p428, %p429
      %p431 = pneg %p430
      // Predicated region
      $region69: #{transformer_forward.3} parent=5 // pred_check
        _
      $region70: #{transformer_forward.3} parent=5 // pred_check_branch
        %433 = sbr.rel (%p430) target = $region72
      $region71: #{transformer_forward.3} parent=5 // pred_region
        %s434 = ssub.s32 %s22, 1
        %p435 = scmp.lt.s32.totalorder %s31, 1
        %s436 = scalar_select %p435, %s31, 1
        %s437 = smul.addr %s436, 8
        %s438 = scalar_lea.vmem %s0, %s437
        %p439 = pneg %p60
        %p440 = pneg %p57
        %p441 = pneg %p81
        %p442 = pneg %p78
        %p443 = pneg %p102
        %p444 = pneg %p99
        %p445 = pneg %p123
        %p446 = pneg %p120
        %p447 = pneg %p144
        %p448 = pneg %p141
        %p449 = pneg %p165
        %p450 = pneg %p162
        %p451 = pneg %p186
        %p452 = pneg %p183
        %p453 = pneg %p207
        %p454 = pneg %p204
        %p455 = pneg %p228
        %p456 = pneg %p225
        %p457 = scmp.lt.s32.totalorder %s32, 0
        %s458 = scalar_select %p457, %s32, 0
        %s459 = smul.addr %s458, 4
        %s460 = scalar_lea.vmem %s9, %s459
        %p461 = pneg %p254
        %p462 = pneg %p251
        %p463 = scmp.lt.s32.totalorder %s32, 0
        %s464 = scalar_select %p463, %s32, 0
        %s465 = scalar_lea.vmem %s10, %s464
        %p466 = pneg %p280
        %p467 = pneg %p277
        %s468 = smul.u32 16, %s32
        %p469 = scmp.lt.s32.totalorder %s468, 15
        %s470 = scalar_select %p469, %s468, 15
        %s471 = smul.addr %s470, 4
        %s472 = scalar_lea.vmem %s11, %s471
        %p473 = pneg %p306
        %p474 = pneg %p303
        %p475 = pneg %p327
        %p476 = pneg %p324
        %p477 = pneg %p353
        %p478 = pneg %p350
        %s479 = sand.u32 %s340, 1
        %s480 = scalar_lea.sflag [#allocation5], %s479
        %s481 = sand.u32 %s340, 1
        %s482 = smul.addr %s481, 8
        %s483 = scalar_lea.vmem [#allocation4], %s482
        %p484 = scmp.lt.s32.totalorder %s31, 1
        %s485 = scalar_select %p484, %s31, 1
        %s486 = smul.addr %s485, 8
        %s487 = scalar_lea.vmem %s0, %s486
        %p488 = scmp.lt.s32.totalorder %s32, 0
        %s489 = scalar_select %p488, %s32, 0
        %s490 = smul.addr %s489, 4
        %s491 = scalar_lea.vmem %s9, %s490
        %p492 = scmp.lt.s32.totalorder %s32, 0
        %s493 = scalar_select %p492, %s32, 0
        %s494 = scalar_lea.vmem %s10, %s493
        %s495 = smul.u32 16, %s32
        %p496 = scmp.lt.s32.totalorder %s495, 15
        %s497 = scalar_select %p496, %s495, 15
        %s498 = smul.addr %s497, 4
        %s499 = scalar_lea.vmem %s11, %s498
        %s500 = smul.u32 16, %s32
        %p502 = scmp.eq.s32.totalorder %s32, 0
        // Predicated region
        $region73: #{transformer_forward.3} parent=71 // pred_check
          %p503 = pneg %p502
        $region74: #{transformer_forward.3} parent=71 // pred_check_branch
          %505 = sbr.rel (%p503) target = $region76
        $region75: #{transformer_forward.3} parent=71 // pred_region
          %v506 = vld [vmem:[%s487] sm:$0xff]
          %v507 = vld [vmem:[%s1] sm:$0x1]
          %v508 = vld [vmem:[%s2] sm:$0x1]
          %vm509 = vcmask 261120
          %v510 = vsel %vm509, %v506, 0.0
          %511 = vadd.xlane.f32.xlu0 %v510
          %v512 = vpop.xlane.xlu0 %511
          %v513 = vrcp.pop 32.0
          %v514 = vmul.f32 32.0, %v513
          %v515 = vsub.f32 1.0, %v514
          %v516 = vmul.f32 %v513, %v515
          %v517 = vadd.f32 %v513, %v516
          %vm518 = vweird.f32 %v513
          %v519 = vsel %vm518, %v513, %v517
          %v520 = vmul.f32 %v512, %v519
          %v521 = vsub.f32 %v506, %v520
          %v522 = vmul.f32 %v521, %v521
          %v523 = vsel %vm509, %v522, 0.0
          %524 = vadd.xlane.f32.xlu0 %v523
          %v525 = vpop.xlane.xlu0 %524
          %v526 = vmul.f32 %v525, %v519
          %v527 = vadd.f32 %v526, 1e-05
          %v528 = vrsqrt.pop %v527
          %v529 = vmul.f32 %v528, %v527
          %v530 = vmul.f32 %v529, %v528
          %v531 = vmul.f32 0.5, %v530
          %v532 = vsub.f32 1.5, %v531
          %v533 = vmul.f32 %v528, %v532
          %vm534 = vweird.f32 %v527
          %vm535 = vweird.f32 %v528
          %vm536 = vmor %vm534, %vm535
          %v537 = vsel %vm536, %v528, %v533
          %v538 = vmul.f32 %v521, %v537
          %v540 = vperm.slane %v507, 0
          %v542 = vmul.f32 %v538, %v540
          %v544 = vperm.slane %v508, 0
          %v546 = vadd.f32 %v542, %v544
          %v547 = vpack.c.bf16 %v546, %v546
          %v548 = vld [vmem:[%s3] sm:$0xf]
          %v549 = vld [vmem:[%s3 + $0x4] sm:$0xf]
          %v550 = vld [vmem:[%s3 + $0x8] sm:$0xf]
          %v551 = vld [vmem:[%s3 + $0xc] sm:$0xf]
          %v552 = vld [vmem:[%s4] sm:$0x1]
          %v554 = vperm.slane %v552, 0
          %v560 = vunpack.c.l.b16 %v548
          %v561 = vunpack.c.l.b16 %v549
          %v562 = vunpack.c.l.b16 %v550
          %v563 = vunpack.c.l.b16 %v551
          %v564 = vpack.c.b16 %v561, %v560
          %v565 = vpack.c.b16 %v563, %v562
          %v569 = vsel %vm509, %v547, 0
          %571 = vmatpush.bf16.msra.mxu0 0
          %572 = vmatpush.bf16.msra.mxu0 0
          %573 = vmatpush.bf16.msra.mxu0 0
          %574 = vmatpush.bf16.msra.mxu0 0
          %575 = vmatpush.bf16.msra.mxu0 0
          %576 = vmatpush.bf16.msra.mxu0 0
          %577 = vmatpush.bf16.msra.mxu0 %v565
          %578 = vmatpush.bf16.msra.mxu0 %v564
          %579 = vmatmul.bf16.gmra.mxu0 %v569
          %v580 = vpop.f32.mrf.mxu0
          %v581 = vadd.f32 %v554, %v580
          %v582 = vpop.f32.mrf.mxu0
          %583 = vdwg.mxu0
          %v584 = vpack.c.bf16 %v581, %v581
          %v586 = vunpack.c.l.b16 %v584
          %v587 = vpack.c.b16 %v586, %v586
          %588 = vrot.lane.b32.xlu0 %v587, 96
          %v589 = vpop.permute.xlu0 %588
          %vm590 = vcmask 64512
          %v592 = vsel %vm590, %v584, 0
          %v595 = vsel %vm590, %v589, 0
          %597 = vmatpush.bf16.xpose.msra.mxu0 0
          %598 = vmatpush.bf16.xpose.msra.mxu0 0
          %599 = vmatpush.bf16.xpose.msra.mxu0 0
          %600 = vmatpush.bf16.xpose.msra.mxu0 0
          %601 = vmatpush.bf16.xpose.msra.mxu0 0
          %602 = vmatpush.bf16.xpose.msra.mxu0 0
          %603 = vmatpush.bf16.xpose.msra.mxu0 0
          %604 = vmatpush.bf16.xpose.msra.mxu0 %v595
          %605 = vmatmul.bf16.gmra.mxu0 %v592
          %v606 = vpop.f32.mrf.mxu0
          %v607 = vadd.f32 0.0, %v606
          %v608 = vpop.f32.mrf.mxu0
          %609 = vdwg.mxu0
          %v610 = vsel %vm590, %v607, -inf
          %611 = vmax.xlane.f32.xlu0 %v610
          %v612 = vpop.xlane.xlu0 %611
          %v613 = vsub.f32 %v607, %v612
          %v614 = vmul.f32 %v613, 1.442695
          %v615 = vpow.pop %v614
          %v616 = vsel %vm590, %v615, 0.0
          %617 = vadd.xlane.f32.xlu0 %v616
          %v618 = vpop.xlane.xlu0 %617
          %v619 = vrcp.pop %v618
          %v620 = vmul.f32 %v615, %v619
          %v621 = vpack.c.bf16 %v620, %v620
          %622 = vrot.lane.b32.xlu0 %v587, 64
          %v623 = vpop.permute.xlu0 %622
          %v625 = vsel %vm590, %v621, 0
          %vm627 = vcmask 1043456
          %v629 = vsel %vm627, %v623, 0
          %631 = vmatpush.bf16.msra.mxu0 0
          %632 = vmatpush.bf16.msra.mxu0 0
          %633 = vmatpush.bf16.msra.mxu0 0
          %634 = vmatpush.bf16.msra.mxu0 0
          %635 = vmatpush.bf16.msra.mxu0 0
          %636 = vmatpush.bf16.msra.mxu0 0
          %637 = vmatpush.bf16.msra.mxu0 0
          %638 = vmatpush.bf16.msra.mxu0 %v629
          %639 = vmatmul.bf16.gmra.mxu0 %v625
          %v640 = vpop.f32.mrf.mxu0
          %v641 = vadd.f32 0.0, %v640
          %v642 = vpop.f32.mrf.mxu0
          %643 = vdwg.mxu0
          %v644 = vpack.c.bf16 %v641, %v641
          %vm645 = vcmask 60416
          %646 = vst.msk [vmem:[#allocation2] sm:$0xf] %vm645, %v644
          %647 = vrot.lane.b32.xlu0 %v587, 120
          %v648 = vpop.permute.xlu0 %647
          %649 = vrot.lane.b32.xlu0 %v587, 88
          %v650 = vpop.permute.xlu0 %649
          %v652 = vsel %vm590, %v648, 0
          %v655 = vsel %vm590, %v650, 0
          %657 = vmatpush.bf16.xpose.msra.mxu0 0
          %658 = vmatpush.bf16.xpose.msra.mxu0 0
          %659 = vmatpush.bf16.xpose.msra.mxu0 0
          %660 = vmatpush.bf16.xpose.msra.mxu0 0
          %661 = vmatpush.bf16.xpose.msra.mxu0 0
          %662 = vmatpush.bf16.xpose.msra.mxu0 0
          %663 = vmatpush.bf16.xpose.msra.mxu0 0
          %664 = vmatpush.bf16.xpose.msra.mxu0 %v655
          %665 = vmatmul.bf16.gmra.mxu0 %v652
          %v666 = vpop.f32.mrf.mxu0
          %v667 = vadd.f32 0.0, %v666
          %v668 = vpop.f32.mrf.mxu0
          %669 = vdwg.mxu0
          %v670 = vsel %vm590, %v667, -inf
          %671 = vmax.xlane.f32.xlu0 %v670
          %v672 = vpop.xlane.xlu0 %671
          %v673 = vsub.f32 %v667, %v672
          %v674 = vmul.f32 %v673, 1.442695
          %v675 = vpow.pop %v674
          %v676 = vsel %vm590, %v675, 0.0
          %677 = vadd.xlane.f32.xlu0 %v676
          %v678 = vpop.xlane.xlu0 %677
          %v679 = vrcp.pop %v678
          %v680 = vmul.f32 %v675, %v679
          %v681 = vpack.c.bf16 %v680, %v680
          %682 = vrot.lane.b32.xlu0 %v587, 56
          %v683 = vpop.permute.xlu0 %682
          %v685 = vsel %vm590, %v681, 0
          %v688 = vsel %vm627, %v683, 0
          %690 = vmatpush.bf16.msra.mxu0 0
          %691 = vmatpush.bf16.msra.mxu0 0
          %692 = vmatpush.bf16.msra.mxu0 0
          %693 = vmatpush.bf16.msra.mxu0 0
          %694 = vmatpush.bf16.msra.mxu0 0
          %695 = vmatpush.bf16.msra.mxu0 0
          %696 = vmatpush.bf16.msra.mxu0 0
          %697 = vmatpush.bf16.msra.mxu0 %v688
          %698 = vmatmul.bf16.gmra.mxu0 %v685
          %v699 = vpop.f32.mrf.mxu0
          %v700 = vadd.f32 0.0, %v699
          %v701 = vpop.f32.mrf.mxu0
          %702 = vdwg.mxu0
          %v703 = vpack.c.bf16 %v700, %v700
          %705 = vrot.lane.b32.xlu0 %v703, 8
          %v706 = vpop.permute.xlu0 %705
          %vm708 = vcmask 126016
          %709 = vst.msk [vmem:[#allocation2] sm:$0xf] %vm708, %v706
          %710 = vrot.lane.b32.xlu0 %v587, 112
          %v711 = vpop.permute.xlu0 %710
          %712 = vrot.lane.b32.xlu0 %v587, 80
          %v713 = vpop.permute.xlu0 %712
          %v715 = vsel %vm590, %v711, 0
          %v718 = vsel %vm590, %v713, 0
          %720 = vmatpush.bf16.xpose.msra.mxu0 0
          %721 = vmatpush.bf16.xpose.msra.mxu0 0
          %722 = vmatpush.bf16.xpose.msra.mxu0 0
          %723 = vmatpush.bf16.xpose.msra.mxu0 0
          %724 = vmatpush.bf16.xpose.msra.mxu0 0
          %725 = vmatpush.bf16.xpose.msra.mxu0 0
          %726 = vmatpush.bf16.xpose.msra.mxu0 0
          %727 = vmatpush.bf16.xpose.msra.mxu0 %v718
          %728 = vmatmul.bf16.gmra.mxu0 %v715
          %v729 = vpop.f32.mrf.mxu0
          %v730 = vadd.f32 0.0, %v729
          %v731 = vpop.f32.mrf.mxu0
          %732 = vdwg.mxu0
          %v733 = vsel %vm590, %v730, -inf
          %734 = vmax.xlane.f32.xlu0 %v733
          %v735 = vpop.xlane.xlu0 %734
          %v736 = vsub.f32 %v730, %v735
          %v737 = vmul.f32 %v736, 1.442695
          %v738 = vpow.pop %v737
          %v739 = vsel %vm590, %v738, 0.0
          %740 = vadd.xlane.f32.xlu0 %v739
          %v741 = vpop.xlane.xlu0 %740
          %v742 = vrcp.pop %v741
          %v743 = vmul.f32 %v738, %v742
          %v744 = vpack.c.bf16 %v743, %v743
          %745 = vrot.lane.b32.xlu0 %v587, 48
          %v746 = vpop.permute.xlu0 %745
          %v748 = vsel %vm590, %v744, 0
          %v751 = vsel %vm627, %v746, 0
          %753 = vmatpush.bf16.msra.mxu0 0
          %754 = vmatpush.bf16.msra.mxu0 0
          %755 = vmatpush.bf16.msra.mxu0 0
          %756 = vmatpush.bf16.msra.mxu0 0
          %757 = vmatpush.bf16.msra.mxu0 0
          %758 = vmatpush.bf16.msra.mxu0 0
          %759 = vmatpush.bf16.msra.mxu0 0
          %760 = vmatpush.bf16.msra.mxu0 %v751
          %761 = vmatmul.bf16.gmra.mxu0 %v748
          %v762 = vpop.f32.mrf.mxu0
          %v763 = vadd.f32 0.0, %v762
          %v764 = vpop.f32.mrf.mxu0
          %765 = vdwg.mxu0
          %v766 = vpack.c.bf16 %v763, %v763
          %768 = vrot.lane.b32.xlu0 %v766, 16
          %v769 = vpop.permute.xlu0 %768
          %vm771 = vcmask 191616
          %772 = vst.msk [vmem:[#allocation2] sm:$0xf] %vm771, %v769
          %773 = vrot.lane.b32.xlu0 %v587, 104
          %v774 = vpop.permute.xlu0 %773
          %775 = vrot.lane.b32.xlu0 %v587, 72
          %v776 = vpop.permute.xlu0 %775
          %v778 = vsel %vm590, %v774, 0
          %v781 = vsel %vm590, %v776, 0
          %783 = vmatpush.bf16.xpose.msra.mxu0 0
          %784 = vmatpush.bf16.xpose.msra.mxu0 0
          %785 = vmatpush.bf16.xpose.msra.mxu0 0
          %786 = vmatpush.bf16.xpose.msra.mxu0 0
          %787 = vmatpush.bf16.xpose.msra.mxu0 0
          %788 = vmatpush.bf16.xpose.msra.mxu0 0
          %789 = vmatpush.bf16.xpose.msra.mxu0 0
          %790 = vmatpush.bf16.xpose.msra.mxu0 %v781
          %791 = vmatmul.bf16.gmra.mxu0 %v778
          %v792 = vpop.f32.mrf.mxu0
          %v793 = vadd.f32 0.0, %v792
          %v794 = vpop.f32.mrf.mxu0
          %795 = vdwg.mxu0
          %v796 = vsel %vm590, %v793, -inf
          %797 = vmax.xlane.f32.xlu0 %v796
          %v798 = vpop.xlane.xlu0 %797
          %v799 = vsub.f32 %v793, %v798
          %v800 = vmul.f32 %v799, 1.442695
          %v801 = vpow.pop %v800
          %v802 = vsel %vm590, %v801, 0.0
          %803 = vadd.xlane.f32.xlu0 %v802
          %v804 = vpop.xlane.xlu0 %803
          %v805 = vrcp.pop %v804
          %v806 = vmul.f32 %v801, %v805
          %v807 = vpack.c.bf16 %v806, %v806
          %808 = vrot.lane.b32.xlu0 %v587, 40
          %v809 = vpop.permute.xlu0 %808
          %v811 = vsel %vm590, %v807, 0
          %v814 = vsel %vm627, %v809, 0
          %816 = vmatpush.bf16.msra.mxu0 0
          %817 = vmatpush.bf16.msra.mxu0 0
          %818 = vmatpush.bf16.msra.mxu0 0
          %819 = vmatpush.bf16.msra.mxu0 0
          %820 = vmatpush.bf16.msra.mxu0 0
          %821 = vmatpush.bf16.msra.mxu0 0
          %822 = vmatpush.bf16.msra.mxu0 0
          %823 = vmatpush.bf16.msra.mxu0 %v814
          %824 = vmatmul.bf16.gmra.mxu0 %v811
          %v825 = vpop.f32.mrf.mxu0
          %v826 = vadd.f32 0.0, %v825
          %v827 = vpop.f32.mrf.mxu0
          %828 = vdwg.mxu0
          %v829 = vpack.c.bf16 %v826, %v826
          %831 = vrot.lane.b32.xlu0 %v829, 24
          %v832 = vpop.permute.xlu0 %831
          %vm834 = vcmask 257216
          %835 = vst.msk [vmem:[#allocation2] sm:$0xf] %vm834, %v832
          %v836 = vld [vmem:[#allocation2] sm:$0xf]
          %v837 = vld [vmem:[%s5] sm:$0xf]
          %v838 = vld [vmem:[%s5 + $0x4] sm:$0xf]
          %v839 = vld [vmem:[%s5 + $0x8] sm:$0xf]
          %v840 = vld [vmem:[%s5 + $0xc] sm:$0xf]
          %v841 = vld [vmem:[%s6] sm:$0x1]
          %v843 = vperm.slane %v841, 0
          %v849 = vunpack.c.l.b16 %v837
          %v850 = vunpack.c.l.b16 %v838
          %v851 = vunpack.c.l.b16 %v839
          %v852 = vunpack.c.l.b16 %v840
          %v853 = vpack.c.b16 %v850, %v849
          %v854 = vpack.c.b16 %v852, %v851
          %v858 = vsel %vm509, %v836, 0
          %860 = vmatpush.bf16.msra.mxu0 0
          %861 = vmatpush.bf16.msra.mxu0 0
          %862 = vmatpush.bf16.msra.mxu0 0
          %863 = vmatpush.bf16.msra.mxu0 0
          %864 = vmatpush.bf16.msra.mxu0 0
          %865 = vmatpush.bf16.msra.mxu0 0
          %866 = vmatpush.bf16.msra.mxu0 %v854
          %867 = vmatpush.bf16.msra.mxu0 %v853
          %868 = vmatmul.bf16.gmra.mxu0 %v858
          %v869 = vpop.f32.mrf.mxu0
          %v870 = vadd.f32 %v843, %v869
          %v871 = vpop.f32.mrf.mxu0
          %872 = vdwg.mxu0
          %v873 = vadd.f32 %v506, %v870
          %v874 = vld [vmem:[%s7] sm:$0x1]
          %v875 = vld [vmem:[%s8] sm:$0x1]
          %v876 = vsel %vm509, %v873, 0.0
          %877 = vadd.xlane.f32.xlu0 %v876
          %v878 = vpop.xlane.xlu0 %877
          %v879 = vmul.f32 %v878, %v519
          %v880 = vsub.f32 %v873, %v879
          %v881 = vmul.f32 %v880, %v880
          %v882 = vsel %vm509, %v881, 0.0
          %883 = vadd.xlane.f32.xlu0 %v882
          %v884 = vpop.xlane.xlu0 %883
          %v885 = vmul.f32 %v884, %v519
          %v886 = vadd.f32 %v885, 1e-05
          %v887 = vrsqrt.pop %v886
          %v888 = vmul.f32 %v887, %v886
          %v889 = vmul.f32 %v888, %v887
          %v890 = vmul.f32 0.5, %v889
          %v891 = vsub.f32 1.5, %v890
          %v892 = vmul.f32 %v887, %v891
          %vm893 = vweird.f32 %v886
          %vm894 = vweird.f32 %v887
          %vm895 = vmor %vm893, %vm894
          %v896 = vsel %vm895, %v887, %v892
          %v897 = vmul.f32 %v880, %v896
          %v899 = vperm.slane %v874, 0
          %v901 = vmul.f32 %v897, %v899
          %v903 = vperm.slane %v875, 0
          %v905 = vadd.f32 %v901, %v903
          %v906 = vpack.c.bf16 %v905, %v905
          %vm907 = vcmask 257024
          %908 = vst.msk [vmem:[#allocation3] sm:$0xf] %vm907, %v906
          %v909 = vld [vmem:[%s12] sm:$0x1]
          %v911 = vperm.slane %v909, 0
          %v913 = vadd.f32 %v873, %v911
          %914 = vst.msk [vmem:[%s483] sm:$0xff] %vm509, %v913
        $region76: #{transformer_forward.3} parent=71 // pred_fallthru
          _
        %v915 = vld [vmem:[#allocation3] sm:$0xf]
        %v916 = vld [vmem:[%s491] sm:$0xf]
        %v917 = vld [vmem:[%s491 + $0x4] sm:$0xf]
        %v918 = vld [vmem:[%s491 + $0x8] sm:$0xf]
        %v919 = vld [vmem:[%s491 + $0xc] sm:$0xf]
        %v920 = vld [vmem:[%s494] sm:$0x1]
        %v922 = vperm.slane %v920, 0
        %v928 = vunpack.c.l.b16 %v916
        %v929 = vunpack.c.l.b16 %v917
        %v930 = vunpack.c.l.b16 %v918
        %v931 = vunpack.c.l.b16 %v919
        %v932 = vpack.c.b16 %v929, %v928
        %v933 = vpack.c.b16 %v931, %v930
        %vm936 = vcmask 261120
        %v938 = vsel %vm936, %v915, 0
        %940 = vmatpush.bf16.msra.mxu0 0
        %941 = vmatpush.bf16.msra.mxu0 0
        %942 = vmatpush.bf16.msra.mxu0 0
        %943 = vmatpush.bf16.msra.mxu0 0
        %944 = vmatpush.bf16.msra.mxu0 0
        %945 = vmatpush.bf16.msra.mxu0 0
        %946 = vmatpush.bf16.msra.mxu0 %v933
        %947 = vmatpush.bf16.msra.mxu0 %v932
        %948 = vmatmul.bf16.gmra.mxu0 %v938
        %v949 = vpop.f32.mrf.mxu0
        %v950 = vadd.f32 %v922, %v949
        %v951 = vpop.f32.mrf.mxu0
        %952 = vdwg.mxu0
        %v953 = vmul.f32 %v950, 0.5
        %v954 = vmul.f32 %v950, 0.70710677
        %v955 = vmul.f32 %v954, %v954
        %v956 = vmin.f32 16.0, %v955
        %v957 = vmul.f32 %v956, 2.1237322e-06
        %v958 = vadd.f32 %v957, 0.00028619796
        %v959 = vmul.f32 %v956, %v958
        %v960 = vadd.f32 %v959, 0.0036580483
        %v961 = vmul.f32 %v956, %v960
        %v962 = vadd.f32 %v961, 0.05243302
        %v963 = vmul.f32 %v956, %v962
        %v964 = vadd.f32 %v963, 0.18741608
        %v965 = vmul.f32 %v956, %v964
        %v966 = vadd.f32 %v965, 1.1283791
        %v967 = vmul.f32 %v954, %v966
        %v968 = vmul.f32 %v956, 3.8918573e-05
        %v969 = vadd.f32 %v968, 0.001143296
        %v970 = vmul.f32 %v956, %v969
        %v971 = vadd.f32 %v970, 0.014752088
        %v972 = vmul.f32 %v956, %v971
        %v973 = vadd.f32 %v972, 0.112945676
        %v974 = vmul.f32 %v956, %v973
        %v975 = vadd.f32 %v974, 0.4994258
        %v976 = vmul.f32 %v956, %v975
        %v977 = vadd.f32 %v976, 1.0
        %v978 = vrcp.pop %v977
        %v979 = vmul.f32 %v977, %v978
        %v980 = vsub.f32 1.0, %v979
        %v981 = vmul.f32 %v978, %v980
        %v982 = vadd.f32 %v978, %v981
        %vm983 = vweird.f32 %v977
        %vm984 = vweird.f32 %v978
        %vm985 = vmor %vm983, %vm984
        %v986 = vsel %vm985, %v978, %v982
        %v987 = vand.u32 2147483647, %v977
        %vm988 = vcmp.eq.f32.partialorder %v987, 8.507059e+37
        %v989 = vand.u32 %v977, 2147483648
        %v990 = vor.u32 1.1754944e-38, %v989
        %v991 = vsel %vm988, %v990, %v986
        %v992 = vmul.f32 %v967, %v991
        %v993 = vmin.f32 %v992, 1.0
        %v994 = vmax.f32 %v993, -1.0
        %v995 = vadd.f32 %v994, 1.0
        %v996 = vmul.f32 %v953, %v995
        %v997 = vpack.c.bf16 %v996, %v996
        %v998 = vld [vmem:[%s483] sm:$0xff]
        %v999 = vld [vmem:[%s499] sm:$0xf]
        %v1000 = vld [vmem:[%s499 + $0x4] sm:$0xf]
        %v1001 = vld [vmem:[%s499 + $0x8] sm:$0xf]
        %v1002 = vld [vmem:[%s499 + $0xc] sm:$0xf]
        %v1003 = vld [vmem:[%s499 + $0x10] sm:$0xf]
        %v1004 = vld [vmem:[%s499 + $0x14] sm:$0xf]
        %v1005 = vld [vmem:[%s499 + $0x18] sm:$0xf]
        %v1006 = vld [vmem:[%s499 + $0x1c] sm:$0xf]
        %v1007 = vld [vmem:[%s499 + $0x20] sm:$0xf]
        %v1008 = vld [vmem:[%s499 + $0x24] sm:$0xf]
        %v1009 = vld [vmem:[%s499 + $0x28] sm:$0xf]
        %v1010 = vld [vmem:[%s499 + $0x2c] sm:$0xf]
        %v1011 = vld [vmem:[%s499 + $0x30] sm:$0xf]
        %v1012 = vld [vmem:[%s499 + $0x34] sm:$0xf]
        %v1013 = vld [vmem:[%s499 + $0x38] sm:$0xf]
        %v1014 = vld [vmem:[%s499 + $0x3c] sm:$0xf]
        %v1031 = vunpack.c.l.b16 %v999
        %v1032 = vunpack.c.l.b16 %v1000
        %v1033 = vunpack.c.l.b16 %v1001
        %v1034 = vunpack.c.l.b16 %v1002
        %v1035 = vunpack.c.l.b16 %v1003
        %v1036 = vunpack.c.l.b16 %v1004
        %v1037 = vunpack.c.l.b16 %v1005
        %v1038 = vunpack.c.l.b16 %v1006
        %v1039 = vunpack.c.l.b16 %v1007
        %v1040 = vunpack.c.l.b16 %v1008
        %v1041 = vunpack.c.l.b16 %v1009
        %v1042 = vunpack.c.l.b16 %v1010
        %v1043 = vunpack.c.l.b16 %v1011
        %v1044 = vunpack.c.l.b16 %v1012
        %v1045 = vunpack.c.l.b16 %v1013
        %v1046 = vunpack.c.l.b16 %v1014
        %v1047 = vpack.c.b16 %v1032, %v1031
        %v1048 = vpack.c.b16 %v1034, %v1033
        %v1049 = vpack.c.b16 %v1036, %v1035
        %v1050 = vpack.c.b16 %v1038, %v1037
        %v1051 = vpack.c.b16 %v1040, %v1039
        %v1052 = vpack.c.b16 %v1042, %v1041
        %v1053 = vpack.c.b16 %v1044, %v1043
        %v1054 = vpack.c.b16 %v1046, %v1045
        %1063 = vmatpush.bf16.msra.mxu0 %v1054
        %1064 = vmatpush.bf16.msra.mxu0 %v1053
        %1065 = vmatpush.bf16.msra.mxu0 %v1052
        %1066 = vmatpush.bf16.msra.mxu0 %v1051
        %1067 = vmatpush.bf16.msra.mxu0 %v1050
        %1068 = vmatpush.bf16.msra.mxu0 %v1049
        %1069 = vmatpush.bf16.msra.mxu0 %v1048
        %1070 = vmatpush.bf16.msra.mxu0 %v1047
        %1071 = vmatmul.bf16.gmra.mxu0 %v997
        %v1072 = vpop.f32.mrf.mxu0
        %v1073 = vadd.f32 0.0, %v1072
        %v1074 = vpop.f32.mrf.mxu0
        %1075 = vdwg.mxu0
        %v1076 = vadd.f32 %v998, %v1073
        %1077 = vst.msk [vmem:[%s483] sm:$0xff] %vm936, %v1076
        %s1078 = sand.u32 %s340, 1
        %s1079 = scalar_lea.sflag [#allocation5], %s1078
        %s1080 = sand.u32 %s340, 1
        %s1081 = smul.addr %s1080, 8
        %s1082 = scalar_lea.vmem [#allocation4], %s1081
        // Predicated region
        $region77: #{transformer_forward.3} parent=71 // pred_check
          %p1083 = pneg %p350
        $region78: #{transformer_forward.3} parent=71 // pred_check_branch
          %1085 = sbr.rel (%p1083) target = $region80
        $region79: #{transformer_forward.3} parent=71 // pred_region
          %1087 = vsyncadd %s1079, 0
          %s1088 = smul.addr %s31, 8
          %s1089 = scalar_lea.hbm %s13, %s1088
          %s1091 = sshll.u32 %s1082, 4
          %s1092 = int_to_ptr.vmem [resolvable:$true] %s1091
          %s1093 = sshll.u32 %s1089, 4
          %s1094 = int_to_ptr.hbm [resolvable:$true] %s1093
          %1096 = dma.vmem_to_hbm [thread:$0]  %s1092, 128, %s1094, %s1079
        $region80: #{transformer_forward.3} parent=71 // pred_fallthru
          _
      $region72: #{transformer_forward.3} parent=5 // pred_fallthru
        _
      %p1097 = scmp.le.s32.totalorder 2, %s22
      // Predicated region
      $region81: #{transformer_forward.3} parent=5 // pred_check
        %p1098 = pneg %p1097
      $region82: #{transformer_forward.3} parent=5 // pred_check_branch
        %1100 = sbr.rel (%p1098) target = $region84
      $region83: #{transformer_forward.3} parent=5 // pred_region
        %s1101 = ssub.s32 %s22, 2
        // Predicated region
        $region85: #{transformer_forward.3} parent=83 // pred_check
          %p1102 = pneg %p356
        $region86: #{transformer_forward.3} parent=83 // pred_check_branch
          %1104 = sbr.rel (%p1102) target = $region88
        $region87: #{transformer_forward.3} parent=83 // pred_region
          %s1105 = sand.u32 %s341, 1
          %s1106 = scalar_lea.sflag [#allocation5], %s1105
          %s1107 = sand.u32 %s341, 1
          %s1108 = smul.addr %s1107, 8
          %s1109 = scalar_lea.vmem [#allocation4], %s1108
          %1111 = dma.done %s1106, 128
        $region88: #{transformer_forward.3} parent=83 // pred_fallthru
          _
      $region84: #{transformer_forward.3} parent=5 // pred_fallthru
        _
    $region6: #{transformer_forward.3} parent=1 // loop_footer
      %s26 = sadd.s32 1, %s22
    $region7: #{transformer_forward.3} parent=1 // loop_footer_branch
      %21 = sbr.rel target = $region3
    $region8: #{transformer_forward.3} parent=1 // loop_exit
      _
    %1112 = vsyncpa [#allocation5], 1
    %s1113 = scalar_lea.sflag [#allocation5], 1
    %1114 = vsyncpa %s1113, 1

</llo_original>
